<compile_context>
chip_gen: v5e
topology: v5e:2x2
jax: 0.10.0
libtpu: 0.0.40
codegen_flags: <defaults>
</compile_context>

<pallas_src>
import jax
import jax.numpy as jnp
from jax.experimental import pallas as pl
from jax.experimental.pallas import tpu as pltpu

_VMEM_LIMIT = 32 * 1024 * 1024  # safe on v5e/v6e/v7x; raise for larger tiles on 128MiB parts


def _round_up(v, m):
    return ((v + m - 1) // m) * m


# ----------------------------------------------------------------------------
# Pallas kernel 1: fused im2col-GEMM + BN affine + ReLU
#                  (+ optional residual add + second BN affine + ReLU).
#
# One jnp.dot per grid step with a KH*KW*Cin-deep contraction; grid tiles the
# flattened row axis M = B*Ho*Wo so DMA pipelines across tiles.
# ----------------------------------------------------------------------------
def _make_gemm_kernel(relu1, has_add, has_post):
    def kernel(*refs):
        a_ref, w_ref, s_ref, b_ref = refs[:4]
        rest = refs[4:-1]
        o_ref = refs[-1]
        # single deep MXU contraction (bf16 in, f32 accumulate)
        y = jnp.dot(a_ref[...], w_ref[...], preferred_element_type=jnp.float32)
        y = y * s_ref[...] + b_ref[...]          # folded BN (or conv bias)
        if relu1:
            y = jnp.maximum(y, 0.0)
        idx = 0
        if has_add:                               # fused residual add (x_up)
            y = y + rest[idx][...].astype(jnp.float32)
            idx += 1
        if has_post:                              # fused block-BN + ReLU
            y = y * rest[idx][...] + rest[idx + 1][...]
            y = jnp.maximum(y, 0.0)
        o_ref[...] = y.astype(o_ref.dtype)
    return kernel


def _gemm_bn_act(a, w2d, scale, bias, *, relu=True, add2d=None,
                 post_scale=None, post_bias=None,
                 compute_dtype=jnp.bfloat16, out_dtype=jnp.float32, tm_target=256):
    """a: (M, K) patch matrix.  w2d: (K, N).  scale/bias: per-output-channel (N,)."""
    M, K = a.shape
    N = w2d.shape[1]
    tm = min(tm_target, _round_up(M, 8))
    Mp = _round_up(M, tm)

    a = a.astype(compute_dtype)
    if Mp != M:
        a = jnp.pad(a, ((0, Mp - M), (0, 0)))
    w2d = w2d.astype(compute_dtype)
    scale = scale.reshape(1, N).astype(jnp.float32)
    bias = bias.reshape(1, N).astype(jnp.float32)

    has_add = add2d is not None
    has_post = post_scale is not None

    inputs = [a, w2d, scale, bias]
    in_specs = [
        pl.BlockSpec((tm, K), lambda i: (i, 0)),     # row-tiled patches
        pl.BlockSpec((K, N), lambda i: (0, 0)),      # resident weight
        pl.BlockSpec((1, N), lambda i: (0, 0)),
        pl.BlockSpec((1, N), lambda i: (0, 0)),
    ]
    if has_add:
        addp = add2d.astype(jnp.float32)
        if Mp != M:
            addp = jnp.pad(addp, ((0, Mp - M), (0, 0)))
        inputs.append(addp)
        in_specs.append(pl.BlockSpec((tm, N), lambda i: (i, 0)))
    if has_post:
        inputs += [post_scale.reshape(1, N).astype(jnp.float32),
                   post_bias.reshape(1, N).astype(jnp.float32)]
        in_specs += [pl.BlockSpec((1, N), lambda i: (0, 0)),
                     pl.BlockSpec((1, N), lambda i: (0, 0))]

    out = pl.pallas_call(
        _make_gemm_kernel(relu, has_add, has_post),
        out_shape=jax.ShapeDtypeStruct((Mp, N), out_dtype),
        grid=(Mp // tm,),
        in_specs=in_specs,
        out_specs=pl.BlockSpec((tm, N), lambda i: (i, 0)),
        compiler_params=pltpu.CompilerParams(
            dimension_semantics=("parallel",),
            vmem_limit_bytes=_VMEM_LIMIT),
    )(*inputs)
    return out[:M] if Mp != M else out


# ----------------------------------------------------------------------------
# Pallas kernel 2: fused N-way branch sum + BN affine + ReLU, lane-dense layout.
# Tensors are presented as (B*H, W*C) slabs; per-channel scale/bias are tiled
# along W in glue so the epilogue stays a per-lane affine.
# ----------------------------------------------------------------------------
def _make_sum_bn_act_kernel(n, relu):
    def kernel(*refs):
        xs = refs[:n]
        s_ref, b_ref, o_ref = refs[n], refs[n + 1], refs[n + 2]
        acc = xs[0][...].astype(jnp.float32)
        for r in xs[1:]:
            acc = acc + r[...].astype(jnp.float32)
        y = acc * s_ref[...] + b_ref[...]
        if relu:
            y = jnp.maximum(y, 0.0)
        o_ref[...] = y.astype(o_ref.dtype)
    return kernel


def _sum_bn_act(xs, scale, bias, relu=True, tr_target=256):
    B, H, W, C = xs[0].shape
    R, L = B * H, W * C
    tr = min(tr_target, _round_up(R, 8))
    Rp = _round_up(R, tr)

    flat = []
    for x in xs:
        f = x.reshape(R, L)
        if Rp != R:
            f = jnp.pad(f, ((0, Rp - R), (0, 0)))
        flat.append(f)
    s_row = jnp.tile(scale.reshape(-1), W).reshape(1, L).astype(jnp.float32)
    b_row = jnp.tile(bias.reshape(-1), W).reshape(1, L).astype(jnp.float32)

    n = len(xs)
    in_specs = [pl.BlockSpec((tr, L), lambda i: (i, 0)) for _ in range(n)]
    in_specs += [pl.BlockSpec((1, L), lambda i: (0, 0)),
                 pl.BlockSpec((1, L), lambda i: (0, 0))]

    out = pl.pallas_call(
        _make_sum_bn_act_kernel(n, relu),
        out_shape=jax.ShapeDtypeStruct((Rp, L), xs[0].dtype),
        grid=(Rp // tr,),
        in_specs=in_specs,
        out_specs=pl.BlockSpec((tr, L), lambda i: (i, 0)),
        compiler_params=pltpu.CompilerParams(
            dimension_semantics=("parallel",),
            vmem_limit_bytes=_VMEM_LIMIT),
    )(*flat, s_row, b_row)
    return out[:R].reshape(B, H, W, C)


# ----------------------------------------------------------------------------
# Glue: im2col patch extraction (stride / dilation folded into the gather; the
# (kh, kw) taps are folded into the channel axis so the kernel does ONE matmul).
# ----------------------------------------------------------------------------
def _im2col(x, KH, KW, stride, dilation):
    B, H, W, C = x.shape
    ph = (KH - 1) // 2 * dilation
    pw = (KW - 1) // 2 * dilation
    Ho = (H + 2 * ph - dilation * (KH - 1) - 1) // stride + 1
    Wo = (W + 2 * pw - dilation * (KW - 1) - 1) // stride + 1
    xp = jnp.pad(x, ((0, 0), (ph, ph), (pw, pw), (0, 0)))
    cols = []
    for kh in range(KH):
        for kw in range(KW):
            h0 = kh * dilation
            w0 = kw * dilation
            sl = xp[:, h0:h0 + (Ho - 1) * stride + 1:stride,
                    w0:w0 + (Wo - 1) * stride + 1:stride, :]
            cols.append(sl)
    patches = jnp.concatenate(cols, axis=-1)       # (B, Ho, Wo, KH*KW*C)
    return patches.reshape(B * Ho * Wo, KH * KW * C), (B, Ho, Wo)


# ----------------------------------------------------------------------------
# Module composition (data plumbing in glue, all compute in the two kernels).
# ----------------------------------------------------------------------------
def _convbnact(x, p, stride=1, dilation=1, relu=True, add2d=None, post=None):
    KH, KW, Cin, Cout = p["w"].shape
    a, (B, Ho, Wo) = _im2col(x, KH, KW, stride, dilation)
    w2d = p["w"].reshape(KH * KW * Cin, Cout)
    out2d = _gemm_bn_act(
        a, w2d, p["scale"], p["bias"], relu=relu, add2d=add2d,
        post_scale=None if post is None else post["scale"],
        post_bias=None if post is None else post["bias"])
    return out2d.reshape(B, Ho, Wo, Cout)


def _residual_block(x, p):
    """x_up = conv1x1(x); x_low = CBA(CBA(x)); out = ReLU(BN(x_up + x_low)).
    The c2 conv, residual add, block BN and ReLU run in ONE fused kernel."""
    B, H, W, Cin = x.shape
    Cout = p["up"]["w"].shape[-1]
    # upper branch: 1x1 conv + bias (no BN / act) -> keep as (M, Cout) 2-D slab
    a_up = x.reshape(B * H * W, Cin)
    w_up = p["up"]["w"].reshape(Cin, Cout)
    x_up2d = _gemm_bn_act(a_up, w_up, p["up"]["scale"], p["up"]["bias"], relu=False)
    # lower branch c1, then fused (c2 + add + block-BN + ReLU)
    h = _convbnact(x, p["c1"])
    return _convbnact(h, p["c2"], add2d=x_up2d, post=p["bn"])


def _duck(x, p):
    xb = _sum_bn_act([x], p["in_bn"]["scale"], p["in_bn"]["bias"], relu=True)
    # branch1: widescope (3x3 d=1,2,3)
    b1 = _convbnact(xb, p["b1"][0], dilation=1)
    b1 = _convbnact(b1, p["b1"][1], dilation=2)
    b1 = _convbnact(b1, p["b1"][2], dilation=3)
    # branch2: midscope (3x3 d=1,2)
    b2 = _convbnact(xb, p["b2"][0], dilation=1)
    b2 = _convbnact(b2, p["b2"][1], dilation=2)
    # branch3/4/5: residual x1 / x2 / x3
    b3 = _residual_block(xb, p["b3"])
    b4 = _residual_block(_residual_block(xb, p["b4"][0]), p["b4"][1])
    b5 = _residual_block(
        _residual_block(_residual_block(xb, p["b5"][0]), p["b5"][1]), p["b5"][2])
    # branch6: separated (1,7) then (7,1)
    b6 = _convbnact(xb, p["b6"][0])
    b6 = _convbnact(b6, p["b6"][1])
    # fused 6-way sum + out_bn + ReLU
    return _sum_bn_act([b1, b2, b3, b4, b5, b6],
                       p["out_bn"]["scale"], p["out_bn"]["bias"], relu=True)


def us_downsample_block_forward(x1, params, x2=None):
    """x1 (and optional x2): NCHW. Returns (x1_down, skip, x2_down) in NCHW."""
    to_nhwc = lambda t: jnp.transpose(t, (0, 2, 3, 1))
    to_nchw = lambda t: jnp.transpose(t, (0, 3, 1, 2))
    x1n = to_nhwc(x1)
    x2n = x1n if x2 is None else to_nhwc(x2)
    x2o = _convbnact(x2n, params["conv2"], stride=2)        # k=2, s=2, p=0
    skip = _duck(x1n, params["duck"])
    x1o = _convbnact(skip, params["conv1"], stride=2)        # k=3, s=2, p=1
    return to_nchw(x1o), to_nchw(skip), to_nchw(x2o)


# ----------------------------------------------------------------------------
# Deterministic synthetic parameter initialization
# ----------------------------------------------------------------------------
class KeyGen:
    def __init__(self, seed):
        self._key = jax.random.PRNGKey(seed)

    def __call__(self):
        self._key, sub = jax.random.split(self._key)
        return sub


def _init_bn_folded(kg, c):
    gamma = jax.random.uniform(kg(), (c,), jnp.float32, 0.5, 1.5)
    beta = 0.1 * jax.random.normal(kg(), (c,), jnp.float32)
    mean = 0.1 * jax.random.normal(kg(), (c,), jnp.float32)
    var = jax.random.uniform(kg(), (c,), jnp.float32, 0.5, 1.5)
    scale = gamma / jnp.sqrt(var + 1e-5)
    bias = beta - mean * scale
    return {"scale": scale.reshape(1, c), "bias": bias.reshape(1, c)}


def _init_convbn(kg, cin, cout, ksize, bn=True):
    kh, kw = (ksize, ksize) if isinstance(ksize, int) else ksize
    fan_in = cin * kh * kw
    w = jax.random.normal(kg(), (kh, kw, cin, cout), jnp.float32) / jnp.sqrt(
        jnp.float32(fan_in))
    if bn:
        bnp = _init_bn_folded(kg, cout)
        return {"w": w, "scale": bnp["scale"], "bias": bnp["bias"]}
    bias = 0.1 * jax.random.normal(kg(), (cout,), jnp.float32)
    return {"w": w, "scale": jnp.ones((1, cout), jnp.float32),
            "bias": bias.reshape(1, cout)}


def _init_residual(kg, cin, cout):
    return {
        "up": _init_convbn(kg, cin, cout, 1, bn=False),
        "c1": _init_convbn(kg, cin, cout, 3),
        "c2": _init_convbn(kg, cout, cout, 3),
        "bn": _init_bn_folded(kg, cout),
    }


def _init_duck(kg, cin, cfuse, filter_size=7):
    return {
        "in_bn": _init_bn_folded(kg, cin),
        "b1": [_init_convbn(kg, cin, cfuse, 3),
               _init_convbn(kg, cfuse, cfuse, 3),
               _init_convbn(kg, cfuse, cfuse, 3)],
        "b2": [_init_convbn(kg, cin, cfuse, 3),
               _init_convbn(kg, cfuse, cfuse, 3)],
        "b3": _init_residual(kg, cin, cfuse),
        "b4": [_init_residual(kg, cin, cfuse), _init_residual(kg, cfuse, cfuse)],
        "b5": [_init_residual(kg, cin, cfuse), _init_residual(kg, cfuse, cfuse),
               _init_residual(kg, cfuse, cfuse)],
        "b6": [_init_convbn(kg, cin, cfuse, (1, filter_size)),
               _init_convbn(kg, cfuse, cfuse, (filter_size, 1))],
        "out_bn": _init_bn_folded(kg, cfuse),
    }


def init_us_downsample_block(kg, in_channels, out_channels, fuse_channels=None):
    fuse_channels = in_channels if fuse_channels is None else fuse_channels
    return {
        "duck": _init_duck(kg, in_channels, fuse_channels),
        "conv1": _init_convbn(kg, fuse_channels, out_channels, 3),
        "conv2": _init_convbn(kg, in_channels, out_channels, 2),
    }


# ----------------------------------------------------------------------------
if __name__ == "__main__":
    B, Cin, H, W = 2, 4, 16, 16
    Cout = 8

    params = init_us_downsample_block(KeyGen(42), Cin, Cout)
    x = jax.random.normal(jax.random.PRNGKey(0), (B, Cin, H, W), jnp.float32)

    fwd = jax.jit(us_downsample_block_forward)
    x1_down, skip, x2_down = fwd(x, params)
    jax.block_until_ready((x1_down, skip, x2_down))

    assert x1_down.shape == (B, Cout, H // 2, W // 2)
    assert skip.shape == (B, Cin, H, W)            # fuse_channels == in_channels
    assert x2_down.shape == (B, Cout, H // 2, W // 2)
    assert all(bool(jnp.all(jnp.isfinite(t))) for t in (x1_down, skip, x2_down))

    print("KERNEL_OK")
</pallas_src>

<mosaic_0001>
module attributes {stable_mosaic.version = 11 : i64} {
  func.func @kernel(%arg0: i32, %arg1: memref<32x64xf32, #tpu.memory_space<vmem>>, %arg2: memref<1x64xf32, #tpu.memory_space<vmem>>, %arg3: memref<1x64xf32, #tpu.memory_space<vmem>>, %arg4: memref<32x64xf32, #tpu.memory_space<vmem>>) attributes {dimension_semantics = [#tpu.dimension_semantics<parallel>], iteration_bounds = array<i64: 1>, scalar_prefetch = 0 : i64, scratch_operands = 0 : i64, tpu.core_type = #tpu.core_type<tc>, window_params = [{transform_indices = @transform_0, window_bounds = array<i64: 32, 64>}, {pipeline_mode = #tpu.pipeline_mode<synchronous>, transform_indices = @transform_1, window_bounds = array<i64: 1, 64>}, {pipeline_mode = #tpu.pipeline_mode<synchronous>, transform_indices = @transform_2, window_bounds = array<i64: 1, 64>}, {transform_indices = @transform_3, window_bounds = array<i64: 32, 64>}]} {
    %c0 = arith.constant 0 : index
    %c0_0 = arith.constant 0 : index
    %0 = vector.load %arg1[%c0, %c0_0] : memref<32x64xf32, #tpu.memory_space<vmem>>, vector<32x64xf32>
    %c0_1 = arith.constant 0 : index
    %c0_2 = arith.constant 0 : index
    %1 = vector.load %arg2[%c0_1, %c0_2] : memref<1x64xf32, #tpu.memory_space<vmem>>, vector<1x64xf32>
    %2 = vector.broadcast %1 : vector<1x64xf32> to vector<32x64xf32>
    %3 = arith.mulf %0, %2 : vector<32x64xf32>
    %c0_3 = arith.constant 0 : index
    %c0_4 = arith.constant 0 : index
    %4 = vector.load %arg3[%c0_3, %c0_4] : memref<1x64xf32, #tpu.memory_space<vmem>>, vector<1x64xf32>
    %5 = vector.broadcast %4 : vector<1x64xf32> to vector<32x64xf32>
    %6 = arith.addf %3, %5 : vector<32x64xf32>
    %cst = arith.constant 0.000000e+00 : f32
    %7 = vector.broadcast %cst : f32 to vector<32x64xf32>
    %8 = arith.maximumf %6, %7 : vector<32x64xf32>
    %c0_5 = arith.constant 0 : index
    %c0_6 = arith.constant 0 : index
    %9 = vector.load %arg4[%c0_5, %c0_6] : memref<32x64xf32, #tpu.memory_space<vmem>>, vector<32x64xf32>
    tpu.vector_store %arg4[%c0_5, %c0_6], %8 {strides = array<i32>} : memref<32x64xf32, #tpu.memory_space<vmem>>, vector<32x64xf32>,
    return
  }
  func.func @transform_0(%arg0: i32) -> (i32, i32) {
    %c0_i32 = arith.constant 0 : i32
    %c0_i32_0 = arith.constant 0 : i32
    return %arg0, %c0_i32 : i32, i32
  }
  func.func @transform_1(%arg0: i32) -> (i32, i32) {
    %c0_i32 = arith.constant 0 : i32
    %c0_i32_0 = arith.constant 0 : i32
    %c0_i32_1 = arith.constant 0 : i32
    return %c0_i32, %c0_i32_0 : i32, i32
  }
  func.func @transform_2(%arg0: i32) -> (i32, i32) {
    %c0_i32 = arith.constant 0 : i32
    %c0_i32_0 = arith.constant 0 : i32
    %c0_i32_1 = arith.constant 0 : i32
    return %c0_i32, %c0_i32_0 : i32, i32
  }
  func.func @transform_3(%arg0: i32) -> (i32, i32) {
    %c0_i32 = arith.constant 0 : i32
    %c0_i32_0 = arith.constant 0 : i32
    return %arg0, %c0_i32 : i32, i32
  }
}

module attributes {stable_mosaic.version = 11 : i64} {
  func.func @kernel(%arg0: i32, %arg1: memref<256x36xbf16, #tpu.memory_space<vmem>>, %arg2: memref<36x4xbf16, #tpu.memory_space<vmem>>, %arg3: memref<1x4xf32, #tpu.memory_space<vmem>>, %arg4: memref<1x4xf32, #tpu.memory_space<vmem>>, %arg5: memref<256x4xf32, #tpu.memory_space<vmem>>) attributes {dimension_semantics = [#tpu.dimension_semantics<parallel>], iteration_bounds = array<i64: 2>, scalar_prefetch = 0 : i64, scratch_operands = 0 : i64, tpu.core_type = #tpu.core_type<tc>, window_params = [{transform_indices = @transform_0, window_bounds = array<i64: 256, 36>}, {pipeline_mode = #tpu.pipeline_mode<synchronous>, transform_indices = @transform_1, window_bounds = array<i64: 36, 4>}, {pipeline_mode = #tpu.pipeline_mode<synchronous>, transform_indices = @transform_2, window_bounds = array<i64: 1, 4>}, {pipeline_mode = #tpu.pipeline_mode<synchronous>, transform_indices = @transform_3, window_bounds = array<i64: 1, 4>}, {transform_indices = @transform_4, window_bounds = array<i64: 256, 4>}]} {
    %c0 = arith.constant 0 : index
    %c0_0 = arith.constant 0 : index
    %0 = vector.load %arg1[%c0, %c0_0] : memref<256x36xbf16, #tpu.memory_space<vmem>>, vector<256x36xbf16>
    %c0_1 = arith.constant 0 : index
    %c0_2 = arith.constant 0 : index
    %1 = vector.load %arg2[%c0_1, %c0_2] : memref<36x4xbf16, #tpu.memory_space<vmem>>, vector<36x4xbf16>
    %cst = arith.constant dense<0.000000e+00> : vector<256x4xf32>
    %2 = tpu.matmul %0, %1, %cst {dimension_numbers = #tpu.dot_dimension_numbers<[1], [0], [0], [1], [0, 0, 1, 1], [], []>} : vector<256x36xbf16>, vector<36x4xbf16>, vector<256x4xf32> -> vector<256x4xf32>
    %c0_3 = arith.constant 0 : index
    %c0_4 = arith.constant 0 : index
    %3 = vector.load %arg3[%c0_3, %c0_4] : memref<1x4xf32, #tpu.memory_space<vmem>>, vector<1x4xf32>
    %4 = vector.broadcast %3 : vector<1x4xf32> to vector<256x4xf32>
    %5 = arith.mulf %2, %4 : vector<256x4xf32>
    %c0_5 = arith.constant 0 : index
    %c0_6 = arith.constant 0 : index
    %6 = vector.load %arg4[%c0_5, %c0_6] : memref<1x4xf32, #tpu.memory_space<vmem>>, vector<1x4xf32>
    %7 = vector.broadcast %6 : vector<1x4xf32> to vector<256x4xf32>
    %8 = arith.addf %5, %7 : vector<256x4xf32>
    %cst_7 = arith.constant 0.000000e+00 : f32
    %9 = vector.broadcast %cst_7 : f32 to vector<256x4xf32>
    %10 = arith.maximumf %8, %9 : vector<256x4xf32>
    %c0_8 = arith.constant 0 : index
    %c0_9 = arith.constant 0 : index
    %11 = vector.load %arg5[%c0_8, %c0_9] : memref<256x4xf32, #tpu.memory_space<vmem>>, vector<256x4xf32>
    tpu.vector_store %arg5[%c0_8, %c0_9], %10 {strides = array<i32>} : memref<256x4xf32, #tpu.memory_space<vmem>>, vector<256x4xf32>,
    return
  }
  func.func @transform_0(%arg0: i32) -> (i32, i32) {
    %c0_i32 = arith.constant 0 : i32
    %c0_i32_0 = arith.constant 0 : i32
    return %arg0, %c0_i32 : i32, i32
  }
  func.func @transform_1(%arg0: i32) -> (i32, i32) {
    %c0_i32 = arith.constant 0 : i32
    %c0_i32_0 = arith.constant 0 : i32
    %c0_i32_1 = arith.constant 0 : i32
    return %c0_i32, %c0_i32_0 : i32, i32
  }
  func.func @transform_2(%arg0: i32) -> (i32, i32) {
    %c0_i32 = arith.constant 0 : i32
    %c0_i32_0 = arith.constant 0 : i32
    %c0_i32_1 = arith.constant 0 : i32
    return %c0_i32, %c0_i32_0 : i32, i32
  }
  func.func @transform_3(%arg0: i32) -> (i32, i32) {
    %c0_i32 = arith.constant 0 : i32
    %c0_i32_0 = arith.constant 0 : i32
    %c0_i32_1 = arith.constant 0 : i32
    return %c0_i32, %c0_i32_0 : i32, i32
  }
  func.func @transform_4(%arg0: i32) -> (i32, i32) {
    %c0_i32 = arith.constant 0 : i32
    %c0_i32_0 = arith.constant 0 : i32
    return %arg0, %c0_i32 : i32, i32
  }
}

module attributes {stable_mosaic.version = 11 : i64} {
  func.func @kernel(%arg0: i32, %arg1: memref<256x36xbf16, #tpu.memory_space<vmem>>, %arg2: memref<36x4xbf16, #tpu.memory_space<vmem>>, %arg3: memref<1x4xf32, #tpu.memory_space<vmem>>, %arg4: memref<1x4xf32, #tpu.memory_space<vmem>>, %arg5: memref<256x4xf32, #tpu.memory_space<vmem>>, %arg6: memref<1x4xf32, #tpu.memory_space<vmem>>, %arg7: memref<1x4xf32, #tpu.memory_space<vmem>>, %arg8: memref<256x4xf32, #tpu.memory_space<vmem>>) attributes {dimension_semantics = [#tpu.dimension_semantics<parallel>], iteration_bounds = array<i64: 2>, scalar_prefetch = 0 : i64, scratch_operands = 0 : i64, tpu.core_type = #tpu.core_type<tc>, window_params = [{transform_indices = @transform_0, window_bounds = array<i64: 256, 36>}, {pipeline_mode = #tpu.pipeline_mode<synchronous>, transform_indices = @transform_1, window_bounds = array<i64: 36, 4>}, {pipeline_mode = #tpu.pipeline_mode<synchronous>, transform_indices = @transform_2, window_bounds = array<i64: 1, 4>}, {pipeline_mode = #tpu.pipeline_mode<synchronous>, transform_indices = @transform_3, window_bounds = array<i64: 1, 4>}, {transform_indices = @transform_4, window_bounds = array<i64: 256, 4>}, {pipeline_mode = #tpu.pipeline_mode<synchronous>, transform_indices = @transform_5, window_bounds = array<i64: 1, 4>}, {pipeline_mode = #tpu.pipeline_mode<synchronous>, transform_indices = @transform_6, window_bounds = array<i64: 1, 4>}, {transform_indices = @transform_7, window_bounds = array<i64: 256, 4>}]} {
    %c0 = arith.constant 0 : index
    %c0_0 = arith.constant 0 : index
    %0 = vector.load %arg1[%c0, %c0_0] : memref<256x36xbf16, #tpu.memory_space<vmem>>, vector<256x36xbf16>
    %c0_1 = arith.constant 0 : index
    %c0_2 = arith.constant 0 : index
    %1 = vector.load %arg2[%c0_1, %c0_2] : memref<36x4xbf16, #tpu.memory_space<vmem>>, vector<36x4xbf16>
    %cst = arith.constant dense<0.000000e+00> : vector<256x4xf32>
    %2 = tpu.matmul %0, %1, %cst {dimension_numbers = #tpu.dot_dimension_numbers<[1], [0], [0], [1], [0, 0, 1, 1], [], []>} : vector<256x36xbf16>, vector<36x4xbf16>, vector<256x4xf32> -> vector<256x4xf32>
    %c0_3 = arith.constant 0 : index
    %c0_4 = arith.constant 0 : index
    %3 = vector.load %arg3[%c0_3, %c0_4] : memref<1x4xf32, #tpu.memory_space<vmem>>, vector<1x4xf32>
    %4 = vector.broadcast %3 : vector<1x4xf32> to vector<256x4xf32>
    %5 = arith.mulf %2, %4 : vector<256x4xf32>
    %c0_5 = arith.constant 0 : index
    %c0_6 = arith.constant 0 : index
    %6 = vector.load %arg4[%c0_5, %c0_6] : memref<1x4xf32, #tpu.memory_space<vmem>>, vector<1x4xf32>
    %7 = vector.broadcast %6 : vector<1x4xf32> to vector<256x4xf32>
    %8 = arith.addf %5, %7 : vector<256x4xf32>
    %cst_7 = arith.constant 0.000000e+00 : f32
    %9 = vector.broadcast %cst_7 : f32 to vector<256x4xf32>
    %10 = arith.maximumf %8, %9 : vector<256x4xf32>
    %c0_8 = arith.constant 0 : index
    %c0_9 = arith.constant 0 : index
    %11 = vector.load %arg5[%c0_8, %c0_9] : memref<256x4xf32, #tpu.memory_space<vmem>>, vector<256x4xf32>
    %12 = arith.addf %10, %11 : vector<256x4xf32>
    %c0_10 = arith.constant 0 : index
    %c0_11 = arith.constant 0 : index
    %13 = vector.load %arg6[%c0_10, %c0_11] : memref<1x4xf32, #tpu.memory_space<vmem>>, vector<1x4xf32>
    %14 = vector.broadcast %13 : vector<1x4xf32> to vector<256x4xf32>
    %15 = arith.mulf %12, %14 : vector<256x4xf32>
    %c0_12 = arith.constant 0 : index
    %c0_13 = arith.constant 0 : index
    %16 = vector.load %arg7[%c0_12, %c0_13] : memref<1x4xf32, #tpu.memory_space<vmem>>, vector<1x4xf32>
    %17 = vector.broadcast %16 : vector<1x4xf32> to vector<256x4xf32>
    %18 = arith.addf %15, %17 : vector<256x4xf32>
    %cst_14 = arith.constant 0.000000e+00 : f32
    %19 = vector.broadcast %cst_14 : f32 to vector<256x4xf32>
    %20 = arith.maximumf %18, %19 : vector<256x4xf32>
    %c0_15 = arith.constant 0 : index
    %c0_16 = arith.constant 0 : index
    %21 = vector.load %arg8[%c0_15, %c0_16] : memref<256x4xf32, #tpu.memory_space<vmem>>, vector<256x4xf32>
    tpu.vector_store %arg8[%c0_15, %c0_16], %20 {strides = array<i32>} : memref<256x4xf32, #tpu.memory_space<vmem>>, vector<256x4xf32>,
    return
  }
  func.func @transform_0(%arg0: i32) -> (i32, i32) {
    %c0_i32 = arith.constant 0 : i32
    %c0_i32_0 = arith.constant 0 : i32
    return %arg0, %c0_i32 : i32, i32
  }
  func.func @transform_1(%arg0: i32) -> (i32, i32) {
    %c0_i32 = arith.constant 0 : i32
    %c0_i32_0 = arith.constant 0 : i32
    %c0_i32_1 = arith.constant 0 : i32
    return %c0_i32, %c0_i32_0 : i32, i32
  }
  func.func @transform_2(%arg0: i32) -> (i32, i32) {
    %c0_i32 = arith.constant 0 : i32
    %c0_i32_0 = arith.constant 0 : i32
    %c0_i32_1 = arith.constant 0 : i32
    return %c0_i32, %c0_i32_0 : i32, i32
  }
  func.func @transform_3(%arg0: i32) -> (i32, i32) {
    %c0_i32 = arith.constant 0 : i32
    %c0_i32_0 = arith.constant 0 : i32
    %c0_i32_1 = arith.constant 0 : i32
    return %c0_i32, %c0_i32_0 : i32, i32
  }
  func.func @transform_4(%arg0: i32) -> (i32, i32) {
    %c0_i32 = arith.constant 0 : i32
    %c0_i32_0 = arith.constant 0 : i32
    return %arg0, %c0_i32 : i32, i32
  }
  func.func @transform_5(%arg0: i32) -> (i32, i32) {
    %c0_i32 = arith.constant 0 : i32
    %c0_i32_0 = arith.constant 0 : i32
    %c0_i32_1 = arith.constant 0 : i32
    return %c0_i32, %c0_i32_0 : i32, i32
  }
  func.func @transform_6(%arg0: i32) -> (i32, i32) {
    %c0_i32 = arith.constant 0 : i32
    %c0_i32_0 = arith.constant 0 : i32
    %c0_i32_1 = arith.constant 0 : i32
    return %c0_i32, %c0_i32_0 : i32, i32
  }
  func.func @transform_7(%arg0: i32) -> (i32, i32) {
    %c0_i32 = arith.constant 0 : i32
    %c0_i32_0 = arith.constant 0 : i32
    return %arg0, %c0_i32 : i32, i32
  }
}

module attributes {stable_mosaic.version = 11 : i64} {
  func.func @kernel(%arg0: i32, %arg1: memref<256x4xbf16, #tpu.memory_space<vmem>>, %arg2: memref<4x4xbf16, #tpu.memory_space<vmem>>, %arg3: memref<1x4xf32, #tpu.memory_space<vmem>>, %arg4: memref<1x4xf32, #tpu.memory_space<vmem>>, %arg5: memref<256x4xf32, #tpu.memory_space<vmem>>) attributes {dimension_semantics = [#tpu.dimension_semantics<parallel>], iteration_bounds = array<i64: 2>, scalar_prefetch = 0 : i64, scratch_operands = 0 : i64, tpu.core_type = #tpu.core_type<tc>, window_params = [{transform_indices = @transform_0, window_bounds = array<i64: 256, 4>}, {pipeline_mode = #tpu.pipeline_mode<synchronous>, transform_indices = @transform_1, window_bounds = array<i64: 4, 4>}, {pipeline_mode = #tpu.pipeline_mode<synchronous>, transform_indices = @transform_2, window_bounds = array<i64: 1, 4>}, {pipeline_mode = #tpu.pipeline_mode<synchronous>, transform_indices = @transform_3, window_bounds = array<i64: 1, 4>}, {transform_indices = @transform_4, window_bounds = array<i64: 256, 4>}]} {
    %c0 = arith.constant 0 : index
    %c0_0 = arith.constant 0 : index
    %0 = vector.load %arg1[%c0, %c0_0] : memref<256x4xbf16, #tpu.memory_space<vmem>>, vector<256x4xbf16>
    %c0_1 = arith.constant 0 : index
    %c0_2 = arith.constant 0 : index
    %1 = vector.load %arg2[%c0_1, %c0_2] : memref<4x4xbf16, #tpu.memory_space<vmem>>, vector<4x4xbf16>
    %cst = arith.constant dense<0.000000e+00> : vector<256x4xf32>
    %2 = tpu.matmul %0, %1, %cst {dimension_numbers = #tpu.dot_dimension_numbers<[1], [0], [0], [1], [0, 0, 1, 1], [], []>} : vector<256x4xbf16>, vector<4x4xbf16>, vector<256x4xf32> -> vector<256x4xf32>
    %c0_3 = arith.constant 0 : index
    %c0_4 = arith.constant 0 : index
    %3 = vector.load %arg3[%c0_3, %c0_4] : memref<1x4xf32, #tpu.memory_space<vmem>>, vector<1x4xf32>
    %4 = vector.broadcast %3 : vector<1x4xf32> to vector<256x4xf32>
    %5 = arith.mulf %2, %4 : vector<256x4xf32>
    %c0_5 = arith.constant 0 : index
    %c0_6 = arith.constant 0 : index
    %6 = vector.load %arg4[%c0_5, %c0_6] : memref<1x4xf32, #tpu.memory_space<vmem>>, vector<1x4xf32>
    %7 = vector.broadcast %6 : vector<1x4xf32> to vector<256x4xf32>
    %8 = arith.addf %5, %7 : vector<256x4xf32>
    %c0_7 = arith.constant 0 : index
    %c0_8 = arith.constant 0 : index
    %9 = vector.load %arg5[%c0_7, %c0_8] : memref<256x4xf32, #tpu.memory_space<vmem>>, vector<256x4xf32>
    tpu.vector_store %arg5[%c0_7, %c0_8], %8 {strides = array<i32>} : memref<256x4xf32, #tpu.memory_space<vmem>>, vector<256x4xf32>,
    return
  }
  func.func @transform_0(%arg0: i32) -> (i32, i32) {
    %c0_i32 = arith.constant 0 : i32
    %c0_i32_0 = arith.constant 0 : i32
    return %arg0, %c0_i32 : i32, i32
  }
  func.func @transform_1(%arg0: i32) -> (i32, i32) {
    %c0_i32 = arith.constant 0 : i32
    %c0_i32_0 = arith.constant 0 : i32
    %c0_i32_1 = arith.constant 0 : i32
    return %c0_i32, %c0_i32_0 : i32, i32
  }
  func.func @transform_2(%arg0: i32) -> (i32, i32) {
    %c0_i32 = arith.constant 0 : i32
    %c0_i32_0 = arith.constant 0 : i32
    %c0_i32_1 = arith.constant 0 : i32
    return %c0_i32, %c0_i32_0 : i32, i32
  }
  func.func @transform_3(%arg0: i32) -> (i32, i32) {
    %c0_i32 = arith.constant 0 : i32
    %c0_i32_0 = arith.constant 0 : i32
    %c0_i32_1 = arith.constant 0 : i32
    return %c0_i32, %c0_i32_0 : i32, i32
  }
  func.func @transform_4(%arg0: i32) -> (i32, i32) {
    %c0_i32 = arith.constant 0 : i32
    %c0_i32_0 = arith.constant 0 : i32
    return %arg0, %c0_i32 : i32, i32
  }
}

module attributes {stable_mosaic.version = 11 : i64} {
  func.func @kernel(%arg0: i32, %arg1: memref<256x28xbf16, #tpu.memory_space<vmem>>, %arg2: memref<28x4xbf16, #tpu.memory_space<vmem>>, %arg3: memref<1x4xf32, #tpu.memory_space<vmem>>, %arg4: memref<1x4xf32, #tpu.memory_space<vmem>>, %arg5: memref<256x4xf32, #tpu.memory_space<vmem>>) attributes {dimension_semantics = [#tpu.dimension_semantics<parallel>], iteration_bounds = array<i64: 2>, scalar_prefetch = 0 : i64, scratch_operands = 0 : i64, tpu.core_type = #tpu.core_type<tc>, window_params = [{transform_indices = @transform_0, window_bounds = array<i64: 256, 28>}, {pipeline_mode = #tpu.pipeline_mode<synchronous>, transform_indices = @transform_1, window_bounds = array<i64: 28, 4>}, {pipeline_mode = #tpu.pipeline_mode<synchronous>, transform_indices = @transform_2, window_bounds = array<i64: 1, 4>}, {pipeline_mode = #tpu.pipeline_mode<synchronous>, transform_indices = @transform_3, window_bounds = array<i64: 1, 4>}, {transform_indices = @transform_4, window_bounds = array<i64: 256, 4>}]} {
    %c0 = arith.constant 0 : index
    %c0_0 = arith.constant 0 : index
    %0 = vector.load %arg1[%c0, %c0_0] : memref<256x28xbf16, #tpu.memory_space<vmem>>, vector<256x28xbf16>
    %c0_1 = arith.constant 0 : index
    %c0_2 = arith.constant 0 : index
    %1 = vector.load %arg2[%c0_1, %c0_2] : memref<28x4xbf16, #tpu.memory_space<vmem>>, vector<28x4xbf16>
    %cst = arith.constant dense<0.000000e+00> : vector<256x4xf32>
    %2 = tpu.matmul %0, %1, %cst {dimension_numbers = #tpu.dot_dimension_numbers<[1], [0], [0], [1], [0, 0, 1, 1], [], []>} : vector<256x28xbf16>, vector<28x4xbf16>, vector<256x4xf32> -> vector<256x4xf32>
    %c0_3 = arith.constant 0 : index
    %c0_4 = arith.constant 0 : index
    %3 = vector.load %arg3[%c0_3, %c0_4] : memref<1x4xf32, #tpu.memory_space<vmem>>, vector<1x4xf32>
    %4 = vector.broadcast %3 : vector<1x4xf32> to vector<256x4xf32>
    %5 = arith.mulf %2, %4 : vector<256x4xf32>
    %c0_5 = arith.constant 0 : index
    %c0_6 = arith.constant 0 : index
    %6 = vector.load %arg4[%c0_5, %c0_6] : memref<1x4xf32, #tpu.memory_space<vmem>>, vector<1x4xf32>
    %7 = vector.broadcast %6 : vector<1x4xf32> to vector<256x4xf32>
    %8 = arith.addf %5, %7 : vector<256x4xf32>
    %cst_7 = arith.constant 0.000000e+00 : f32
    %9 = vector.broadcast %cst_7 : f32 to vector<256x4xf32>
    %10 = arith.maximumf %8, %9 : vector<256x4xf32>
    %c0_8 = arith.constant 0 : index
    %c0_9 = arith.constant 0 : index
    %11 = vector.load %arg5[%c0_8, %c0_9] : memref<256x4xf32, #tpu.memory_space<vmem>>, vector<256x4xf32>
    tpu.vector_store %arg5[%c0_8, %c0_9], %10 {strides = array<i32>} : memref<256x4xf32, #tpu.memory_space<vmem>>, vector<256x4xf32>,
    return
  }
  func.func @transform_0(%arg0: i32) -> (i32, i32) {
    %c0_i32 = arith.constant 0 : i32
    %c0_i32_0 = arith.constant 0 : i32
    return %arg0, %c0_i32 : i32, i32
  }
  func.func @transform_1(%arg0: i32) -> (i32, i32) {
    %c0_i32 = arith.constant 0 : i32
    %c0_i32_0 = arith.constant 0 : i32
    %c0_i32_1 = arith.constant 0 : i32
    return %c0_i32, %c0_i32_0 : i32, i32
  }
  func.func @transform_2(%arg0: i32) -> (i32, i32) {
    %c0_i32 = arith.constant 0 : i32
    %c0_i32_0 = arith.constant 0 : i32
    %c0_i32_1 = arith.constant 0 : i32
    return %c0_i32, %c0_i32_0 : i32, i32
  }
  func.func @transform_3(%arg0: i32) -> (i32, i32) {
    %c0_i32 = arith.constant 0 : i32
    %c0_i32_0 = arith.constant 0 : i32
    %c0_i32_1 = arith.constant 0 : i32
    return %c0_i32, %c0_i32_0 : i32, i32
  }
  func.func @transform_4(%arg0: i32) -> (i32, i32) {
    %c0_i32 = arith.constant 0 : i32
    %c0_i32_0 = arith.constant 0 : i32
    return %arg0, %c0_i32 : i32, i32
  }
}

module attributes {stable_mosaic.version = 11 : i64} {
  func.func @kernel(%arg0: i32, %arg1: memref<32x64xf32, #tpu.memory_space<vmem>>, %arg2: memref<32x64xf32, #tpu.memory_space<vmem>>, %arg3: memref<32x64xf32, #tpu.memory_space<vmem>>, %arg4: memref<32x64xf32, #tpu.memory_space<vmem>>, %arg5: memref<32x64xf32, #tpu.memory_space<vmem>>, %arg6: memref<32x64xf32, #tpu.memory_space<vmem>>, %arg7: memref<1x64xf32, #tpu.memory_space<vmem>>, %arg8: memref<1x64xf32, #tpu.memory_space<vmem>>, %arg9: memref<32x64xf32, #tpu.memory_space<vmem>>) attributes {dimension_semantics = [#tpu.dimension_semantics<parallel>], iteration_bounds = array<i64: 1>, scalar_prefetch = 0 : i64, scratch_operands = 0 : i64, tpu.core_type = #tpu.core_type<tc>, window_params = [{transform_indices = @transform_0, window_bounds = array<i64: 32, 64>}, {transform_indices = @transform_1, window_bounds = array<i64: 32, 64>}, {transform_indices = @transform_2, window_bounds = array<i64: 32, 64>}, {transform_indices = @transform_3, window_bounds = array<i64: 32, 64>}, {transform_indices = @transform_4, window_bounds = array<i64: 32, 64>}, {transform_indices = @transform_5, window_bounds = array<i64: 32, 64>}, {pipeline_mode = #tpu.pipeline_mode<synchronous>, transform_indices = @transform_6, window_bounds = array<i64: 1, 64>}, {pipeline_mode = #tpu.pipeline_mode<synchronous>, transform_indices = @transform_7, window_bounds = array<i64: 1, 64>}, {transform_indices = @transform_8, window_bounds = array<i64: 32, 64>}]} {
    %c0 = arith.constant 0 : index
    %c0_0 = arith.constant 0 : index
    %0 = vector.load %arg1[%c0, %c0_0] : memref<32x64xf32, #tpu.memory_space<vmem>>, vector<32x64xf32>
    %c0_1 = arith.constant 0 : index
    %c0_2 = arith.constant 0 : index
    %1 = vector.load %arg2[%c0_1, %c0_2] : memref<32x64xf32, #tpu.memory_space<vmem>>, vector<32x64xf32>
    %2 = arith.addf %0, %1 : vector<32x64xf32>
    %c0_3 = arith.constant 0 : index
    %c0_4 = arith.constant 0 : index
    %3 = vector.load %arg3[%c0_3, %c0_4] : memref<32x64xf32, #tpu.memory_space<vmem>>, vector<32x64xf32>
    %4 = arith.addf %2, %3 : vector<32x64xf32>
    %c0_5 = arith.constant 0 : index
    %c0_6 = arith.constant 0 : index
    %5 = vector.load %arg4[%c0_5, %c0_6] : memref<32x64xf32, #tpu.memory_space<vmem>>, vector<32x64xf32>
    %6 = arith.addf %4, %5 : vector<32x64xf32>
    %c0_7 = arith.constant 0 : index
    %c0_8 = arith.constant 0 : index
    %7 = vector.load %arg5[%c0_7, %c0_8] : memref<32x64xf32, #tpu.memory_space<vmem>>, vector<32x64xf32>
    %8 = arith.addf %6, %7 : vector<32x64xf32>
    %c0_9 = arith.constant 0 : index
    %c0_10 = arith.constant 0 : index
    %9 = vector.load %arg6[%c0_9, %c0_10] : memref<32x64xf32, #tpu.memory_space<vmem>>, vector<32x64xf32>
    %10 = arith.addf %8, %9 : vector<32x64xf32>
    %c0_11 = arith.constant 0 : index
    %c0_12 = arith.constant 0 : index
    %11 = vector.load %arg7[%c0_11, %c0_12] : memref<1x64xf32, #tpu.memory_space<vmem>>, vector<1x64xf32>
    %12 = vector.broadcast %11 : vector<1x64xf32> to vector<32x64xf32>
    %13 = arith.mulf %10, %12 : vector<32x64xf32>
    %c0_13 = arith.constant 0 : index
    %c0_14 = arith.constant 0 : index
    %14 = vector.load %arg8[%c0_13, %c0_14] : memref<1x64xf32, #tpu.memory_space<vmem>>, vector<1x64xf32>
    %15 = vector.broadcast %14 : vector<1x64xf32> to vector<32x64xf32>
    %16 = arith.addf %13, %15 : vector<32x64xf32>
    %cst = arith.constant 0.000000e+00 : f32
    %17 = vector.broadcast %cst : f32 to vector<32x64xf32>
    %18 = arith.maximumf %16, %17 : vector<32x64xf32>
    %c0_15 = arith.constant 0 : index
    %c0_16 = arith.constant 0 : index
    %19 = vector.load %arg9[%c0_15, %c0_16] : memref<32x64xf32, #tpu.memory_space<vmem>>, vector<32x64xf32>
    tpu.vector_store %arg9[%c0_15, %c0_16], %18 {strides = array<i32>} : memref<32x64xf32, #tpu.memory_space<vmem>>, vector<32x64xf32>,
    return
  }
  func.func @transform_0(%arg0: i32) -> (i32, i32) {
    %c0_i32 = arith.constant 0 : i32
    %c0_i32_0 = arith.constant 0 : i32
    return %arg0, %c0_i32 : i32, i32
  }
  func.func @transform_1(%arg0: i32) -> (i32, i32) {
    %c0_i32 = arith.constant 0 : i32
    %c0_i32_0 = arith.constant 0 : i32
    return %arg0, %c0_i32 : i32, i32
  }
  func.func @transform_2(%arg0: i32) -> (i32, i32) {
    %c0_i32 = arith.constant 0 : i32
    %c0_i32_0 = arith.constant 0 : i32
    return %arg0, %c0_i32 : i32, i32
  }
  func.func @transform_3(%arg0: i32) -> (i32, i32) {
    %c0_i32 = arith.constant 0 : i32
    %c0_i32_0 = arith.constant 0 : i32
    return %arg0, %c0_i32 : i32, i32
  }
  func.func @transform_4(%arg0: i32) -> (i32, i32) {
    %c0_i32 = arith.constant 0 : i32
    %c0_i32_0 = arith.constant 0 : i32
    return %arg0, %c0_i32 : i32, i32
  }
  func.func @transform_5(%arg0: i32) -> (i32, i32) {
    %c0_i32 = arith.constant 0 : i32
    %c0_i32_0 = arith.constant 0 : i32
    return %arg0, %c0_i32 : i32, i32
  }
  func.func @transform_6(%arg0: i32) -> (i32, i32) {
    %c0_i32 = arith.constant 0 : i32
    %c0_i32_0 = arith.constant 0 : i32
    %c0_i32_1 = arith.constant 0 : i32
    return %c0_i32, %c0_i32_0 : i32, i32
  }
  func.func @transform_7(%arg0: i32) -> (i32, i32) {
    %c0_i32 = arith.constant 0 : i32
    %c0_i32_0 = arith.constant 0 : i32
    %c0_i32_1 = arith.constant 0 : i32
    return %c0_i32, %c0_i32_0 : i32, i32
  }
  func.func @transform_8(%arg0: i32) -> (i32, i32) {
    %c0_i32 = arith.constant 0 : i32
    %c0_i32_0 = arith.constant 0 : i32
    return %arg0, %c0_i32 : i32, i32
  }
}

module attributes {stable_mosaic.version = 11 : i64} {
  func.func @kernel(%arg0: i32, %arg1: memref<128x36xbf16, #tpu.memory_space<vmem>>, %arg2: memref<36x8xbf16, #tpu.memory_space<vmem>>, %arg3: memref<1x8xf32, #tpu.memory_space<vmem>>, %arg4: memref<1x8xf32, #tpu.memory_space<vmem>>, %arg5: memref<128x8xf32, #tpu.memory_space<vmem>>) attributes {dimension_semantics = [#tpu.dimension_semantics<parallel>], iteration_bounds = array<i64: 1>, scalar_prefetch = 0 : i64, scratch_operands = 0 : i64, tpu.core_type = #tpu.core_type<tc>, window_params = [{transform_indices = @transform_0, window_bounds = array<i64: 128, 36>}, {pipeline_mode = #tpu.pipeline_mode<synchronous>, transform_indices = @transform_1, window_bounds = array<i64: 36, 8>}, {pipeline_mode = #tpu.pipeline_mode<synchronous>, transform_indices = @transform_2, window_bounds = array<i64: 1, 8>}, {pipeline_mode = #tpu.pipeline_mode<synchronous>, transform_indices = @transform_3, window_bounds = array<i64: 1, 8>}, {transform_indices = @transform_4, window_bounds = array<i64: 128, 8>}]} {
    %c0 = arith.constant 0 : index
    %c0_0 = arith.constant 0 : index
    %0 = vector.load %arg1[%c0, %c0_0] : memref<128x36xbf16, #tpu.memory_space<vmem>>, vector<128x36xbf16>
    %c0_1 = arith.constant 0 : index
    %c0_2 = arith.constant 0 : index
    %1 = vector.load %arg2[%c0_1, %c0_2] : memref<36x8xbf16, #tpu.memory_space<vmem>>, vector<36x8xbf16>
    %cst = arith.constant dense<0.000000e+00> : vector<128x8xf32>
    %2 = tpu.matmul %0, %1, %cst {dimension_numbers = #tpu.dot_dimension_numbers<[1], [0], [0], [1], [0, 0, 1, 1], [], []>} : vector<128x36xbf16>, vector<36x8xbf16>, vector<128x8xf32> -> vector<128x8xf32>
    %c0_3 = arith.constant 0 : index
    %c0_4 = arith.constant 0 : index
    %3 = vector.load %arg3[%c0_3, %c0_4] : memref<1x8xf32, #tpu.memory_space<vmem>>, vector<1x8xf32>
    %4 = vector.broadcast %3 : vector<1x8xf32> to vector<128x8xf32>
    %5 = arith.mulf %2, %4 : vector<128x8xf32>
    %c0_5 = arith.constant 0 : index
    %c0_6 = arith.constant 0 : index
    %6 = vector.load %arg4[%c0_5, %c0_6] : memref<1x8xf32, #tpu.memory_space<vmem>>, vector<1x8xf32>
    %7 = vector.broadcast %6 : vector<1x8xf32> to vector<128x8xf32>
    %8 = arith.addf %5, %7 : vector<128x8xf32>
    %cst_7 = arith.constant 0.000000e+00 : f32
    %9 = vector.broadcast %cst_7 : f32 to vector<128x8xf32>
    %10 = arith.maximumf %8, %9 : vector<128x8xf32>
    %c0_8 = arith.constant 0 : index
    %c0_9 = arith.constant 0 : index
    %11 = vector.load %arg5[%c0_8, %c0_9] : memref<128x8xf32, #tpu.memory_space<vmem>>, vector<128x8xf32>
    tpu.vector_store %arg5[%c0_8, %c0_9], %10 {strides = array<i32>} : memref<128x8xf32, #tpu.memory_space<vmem>>, vector<128x8xf32>,
    return
  }
  func.func @transform_0(%arg0: i32) -> (i32, i32) {
    %c0_i32 = arith.constant 0 : i32
    %c0_i32_0 = arith.constant 0 : i32
    return %arg0, %c0_i32 : i32, i32
  }
  func.func @transform_1(%arg0: i32) -> (i32, i32) {
    %c0_i32 = arith.constant 0 : i32
    %c0_i32_0 = arith.constant 0 : i32
    %c0_i32_1 = arith.constant 0 : i32
    return %c0_i32, %c0_i32_0 : i32, i32
  }
  func.func @transform_2(%arg0: i32) -> (i32, i32) {
    %c0_i32 = arith.constant 0 : i32
    %c0_i32_0 = arith.constant 0 : i32
    %c0_i32_1 = arith.constant 0 : i32
    return %c0_i32, %c0_i32_0 : i32, i32
  }
  func.func @transform_3(%arg0: i32) -> (i32, i32) {
    %c0_i32 = arith.constant 0 : i32
    %c0_i32_0 = arith.constant 0 : i32
    %c0_i32_1 = arith.constant 0 : i32
    return %c0_i32, %c0_i32_0 : i32, i32
  }
  func.func @transform_4(%arg0: i32) -> (i32, i32) {
    %c0_i32 = arith.constant 0 : i32
    %c0_i32_0 = arith.constant 0 : i32
    return %arg0, %c0_i32 : i32, i32
  }
}

module attributes {stable_mosaic.version = 11 : i64} {
  func.func @kernel(%arg0: i32, %arg1: memref<128x16xbf16, #tpu.memory_space<vmem>>, %arg2: memref<16x8xbf16, #tpu.memory_space<vmem>>, %arg3: memref<1x8xf32, #tpu.memory_space<vmem>>, %arg4: memref<1x8xf32, #tpu.memory_space<vmem>>, %arg5: memref<128x8xf32, #tpu.memory_space<vmem>>) attributes {dimension_semantics = [#tpu.dimension_semantics<parallel>], iteration_bounds = array<i64: 1>, scalar_prefetch = 0 : i64, scratch_operands = 0 : i64, tpu.core_type = #tpu.core_type<tc>, window_params = [{transform_indices = @transform_0, window_bounds = array<i64: 128, 16>}, {pipeline_mode = #tpu.pipeline_mode<synchronous>, transform_indices = @transform_1, window_bounds = array<i64: 16, 8>}, {pipeline_mode = #tpu.pipeline_mode<synchronous>, transform_indices = @transform_2, window_bounds = array<i64: 1, 8>}, {pipeline_mode = #tpu.pipeline_mode<synchronous>, transform_indices = @transform_3, window_bounds = array<i64: 1, 8>}, {transform_indices = @transform_4, window_bounds = array<i64: 128, 8>}]} {
    %c0 = arith.constant 0 : index
    %c0_0 = arith.constant 0 : index
    %0 = vector.load %arg1[%c0, %c0_0] : memref<128x16xbf16, #tpu.memory_space<vmem>>, vector<128x16xbf16>
    %c0_1 = arith.constant 0 : index
    %c0_2 = arith.constant 0 : index
    %1 = vector.load %arg2[%c0_1, %c0_2] : memref<16x8xbf16, #tpu.memory_space<vmem>>, vector<16x8xbf16>
    %cst = arith.constant dense<0.000000e+00> : vector<128x8xf32>
    %2 = tpu.matmul %0, %1, %cst {dimension_numbers = #tpu.dot_dimension_numbers<[1], [0], [0], [1], [0, 0, 1, 1], [], []>} : vector<128x16xbf16>, vector<16x8xbf16>, vector<128x8xf32> -> vector<128x8xf32>
    %c0_3 = arith.constant 0 : index
    %c0_4 = arith.constant 0 : index
    %3 = vector.load %arg3[%c0_3, %c0_4] : memref<1x8xf32, #tpu.memory_space<vmem>>, vector<1x8xf32>
    %4 = vector.broadcast %3 : vector<1x8xf32> to vector<128x8xf32>
    %5 = arith.mulf %2, %4 : vector<128x8xf32>
    %c0_5 = arith.constant 0 : index
    %c0_6 = arith.constant 0 : index
    %6 = vector.load %arg4[%c0_5, %c0_6] : memref<1x8xf32, #tpu.memory_space<vmem>>, vector<1x8xf32>
    %7 = vector.broadcast %6 : vector<1x8xf32> to vector<128x8xf32>
    %8 = arith.addf %5, %7 : vector<128x8xf32>
    %cst_7 = arith.constant 0.000000e+00 : f32
    %9 = vector.broadcast %cst_7 : f32 to vector<128x8xf32>
    %10 = arith.maximumf %8, %9 : vector<128x8xf32>
    %c0_8 = arith.constant 0 : index
    %c0_9 = arith.constant 0 : index
    %11 = vector.load %arg5[%c0_8, %c0_9] : memref<128x8xf32, #tpu.memory_space<vmem>>, vector<128x8xf32>
    tpu.vector_store %arg5[%c0_8, %c0_9], %10 {strides = array<i32>} : memref<128x8xf32, #tpu.memory_space<vmem>>, vector<128x8xf32>,
    return
  }
  func.func @transform_0(%arg0: i32) -> (i32, i32) {
    %c0_i32 = arith.constant 0 : i32
    %c0_i32_0 = arith.constant 0 : i32
    return %arg0, %c0_i32 : i32, i32
  }
  func.func @transform_1(%arg0: i32) -> (i32, i32) {
    %c0_i32 = arith.constant 0 : i32
    %c0_i32_0 = arith.constant 0 : i32
    %c0_i32_1 = arith.constant 0 : i32
    return %c0_i32, %c0_i32_0 : i32, i32
  }
  func.func @transform_2(%arg0: i32) -> (i32, i32) {
    %c0_i32 = arith.constant 0 : i32
    %c0_i32_0 = arith.constant 0 : i32
    %c0_i32_1 = arith.constant 0 : i32
    return %c0_i32, %c0_i32_0 : i32, i32
  }
  func.func @transform_3(%arg0: i32) -> (i32, i32) {
    %c0_i32 = arith.constant 0 : i32
    %c0_i32_0 = arith.constant 0 : i32
    %c0_i32_1 = arith.constant 0 : i32
    return %c0_i32, %c0_i32_0 : i32, i32
  }
  func.func @transform_4(%arg0: i32) -> (i32, i32) {
    %c0_i32 = arith.constant 0 : i32
    %c0_i32_0 = arith.constant 0 : i32
    return %arg0, %c0_i32 : i32, i32
  }
}

</mosaic_0001>

<llo_original>
// kernel: tile.18
$region0: #{tile.18}
  #allocation0 [shape = 's32[1]{0}', space=sflag, size = 0x4, scoped, tag = 'scoped memory for tile.18']
  %s0 = inlined_call_operand.vmem [shape: f32[4], index: 0, kind: input, shape index: {}]
  %s1 = inlined_call_operand.vmem [shape: f32[16,4], index: 1, kind: output, shape index: {}]
  // Predicated region
  $region2: #{tile.18} parent=0 // pred_check
    _
  $region3: #{tile.18} parent=0 // pred_check_branch
    %3 = sbr.rel (0) target = $region5
  $region4: #{tile.18} parent=0 // pred_region
    _
  $region5: #{tile.18} parent=0 // pred_fallthru
    _
  %v4 = vld [vmem:[%s0] ss:$0 sm:$0xff]
  %5 = vst [vmem:[%s1] sm:$0xff] %v4
  %s6 = scalar_lea.vmem %s1, 8
  %7 = vst [vmem:[%s6] sm:$0xff] %v4

// kernel: tile.19
$region0: #{tile.19}
  %s0 = inlined_call_operand.vmem [shape: f32[16,4], index: 0, kind: input, shape index: {}]
  %s1 = inlined_call_operand.vmem [shape: f32[1,64], index: 1, kind: output, shape index: {}]
  $region1: #{tile.19} parent=0
    #allocation0 [shape = 'u8[4096]{0}', space=vmem, size = 0x1000, scoped, tag = 'scoped mem for output reshape']
    %v2 = vld [vmem:[%s0] sm:$0x1]
    %vm3 = vcmask 31744
    %4 = vst.msk [vmem:[#allocation0] sm:$0x1] %vm3, %v2
    %s5 = scalar_lea.vmem %s0, 15
    %v6 = vld [vmem:[%s5] sm:$0x1]
    %7 = vrot.lane.b32.xlu0 %v6, 60
    %v8 = vpop.permute.xlu0 %7
    %vm9 = vcmask 523744
    %10 = vst.msk [vmem:[#allocation0] sm:$0x1] %vm9, %v8
    %s11 = scalar_lea.vmem %s0, 14
    %v12 = vld [vmem:[%s11] sm:$0x1]
    %13 = vrot.lane.b32.xlu0 %v12, 56
    %v14 = vpop.permute.xlu0 %13
    %vm15 = vcmask 490944
    %16 = vst.msk [vmem:[#allocation0] sm:$0x1] %vm15, %v14
    %s17 = scalar_lea.vmem %s0, 13
    %v18 = vld [vmem:[%s17] sm:$0x1]
    %19 = vrot.lane.b32.xlu0 %v18, 52
    %v20 = vpop.permute.xlu0 %19
    %vm21 = vcmask 458144
    %22 = vst.msk [vmem:[#allocation0] sm:$0x1] %vm21, %v20
    %s23 = scalar_lea.vmem %s0, 12
    %v24 = vld [vmem:[%s23] sm:$0x1]
    %25 = vrot.lane.b32.xlu0 %v24, 48
    %v26 = vpop.permute.xlu0 %25
    %vm27 = vcmask 425344
    %28 = vst.msk [vmem:[#allocation0] sm:$0x1] %vm27, %v26
    %s29 = scalar_lea.vmem %s0, 11
    %v30 = vld [vmem:[%s29] sm:$0x1]
    %31 = vrot.lane.b32.xlu0 %v30, 44
    %v32 = vpop.permute.xlu0 %31
    %vm33 = vcmask 392544
    %34 = vst.msk [vmem:[#allocation0] sm:$0x1] %vm33, %v32
    %s35 = scalar_lea.vmem %s0, 10
    %v36 = vld [vmem:[%s35] sm:$0x1]
    %37 = vrot.lane.b32.xlu0 %v36, 40
    %v38 = vpop.permute.xlu0 %37
    %vm39 = vcmask 359744
    %40 = vst.msk [vmem:[#allocation0] sm:$0x1] %vm39, %v38
    %s41 = scalar_lea.vmem %s0, 9
    %v42 = vld [vmem:[%s41] sm:$0x1]
    %43 = vrot.lane.b32.xlu0 %v42, 36
    %v44 = vpop.permute.xlu0 %43
    %vm45 = vcmask 326944
    %46 = vst.msk [vmem:[#allocation0] sm:$0x1] %vm45, %v44
    %s47 = scalar_lea.vmem %s0, 8
    %v48 = vld [vmem:[%s47] sm:$0x1]
    %49 = vrot.lane.b32.xlu0 %v48, 32
    %v50 = vpop.permute.xlu0 %49
    %vm51 = vcmask 294144
    %52 = vst.msk [vmem:[#allocation0] sm:$0x1] %vm51, %v50
    %s53 = scalar_lea.vmem %s0, 7
    %v54 = vld [vmem:[%s53] sm:$0x1]
    %55 = vrot.lane.b32.xlu0 %v54, 28
    %v56 = vpop.permute.xlu0 %55
    %vm57 = vcmask 261344
    %58 = vst.msk [vmem:[#allocation0] sm:$0x1] %vm57, %v56
    %s59 = scalar_lea.vmem %s0, 6
    %v60 = vld [vmem:[%s59] sm:$0x1]
    %61 = vrot.lane.b32.xlu0 %v60, 24
    %v62 = vpop.permute.xlu0 %61
    %vm63 = vcmask 228544
    %64 = vst.msk [vmem:[#allocation0] sm:$0x1] %vm63, %v62
    %s65 = scalar_lea.vmem %s0, 5
    %v66 = vld [vmem:[%s65] sm:$0x1]
    %67 = vrot.lane.b32.xlu0 %v66, 20
    %v68 = vpop.permute.xlu0 %67
    %vm69 = vcmask 195744
    %70 = vst.msk [vmem:[#allocation0] sm:$0x1] %vm69, %v68
    %s71 = scalar_lea.vmem %s0, 4
    %v72 = vld [vmem:[%s71] sm:$0x1]
    %73 = vrot.lane.b32.xlu0 %v72, 16
    %v74 = vpop.permute.xlu0 %73
    %vm75 = vcmask 162944
    %76 = vst.msk [vmem:[#allocation0] sm:$0x1] %vm75, %v74
    %s77 = scalar_lea.vmem %s0, 3
    %v78 = vld [vmem:[%s77] sm:$0x1]
    %79 = vrot.lane.b32.xlu0 %v78, 12
    %v80 = vpop.permute.xlu0 %79
    %vm81 = vcmask 130144
    %82 = vst.msk [vmem:[#allocation0] sm:$0x1] %vm81, %v80
    %s83 = scalar_lea.vmem %s0, 2
    %v84 = vld [vmem:[%s83] sm:$0x1]
    %85 = vrot.lane.b32.xlu0 %v84, 8
    %v86 = vpop.permute.xlu0 %85
    %vm87 = vcmask 97344
    %88 = vst.msk [vmem:[#allocation0] sm:$0x1] %vm87, %v86
    %s89 = scalar_lea.vmem %s0, 1
    %v90 = vld [vmem:[%s89] sm:$0x1]
    %91 = vrot.lane.b32.xlu0 %v90, 4
    %v92 = vpop.permute.xlu0 %91
    %vm93 = vcmask 64544
    %94 = vst.msk [vmem:[#allocation0] sm:$0x1] %vm93, %v92
    %s96 = ssub.s32 2, 1
    %v97 = vld [vmem:[#allocation0] sm:%s96]
    %s99 = ssub.s32 2, 1
    %100 = vst [vmem:[%s1] sm:%s99] %v97

// kernel: us_downsample_block_forward.30
$region0: #{us_downsample_block_forward.30}
  #allocation0 [shape = 'u32[]', space=smem, size = 0x4, offset = 0x4, fixed_abs, tag = 'smem constant byte address 0x4 - core index']
  #allocation1 [shape = 'u32[72,128]{1,0:T(1,128)}', space=vmem, size = 0x9000, scoped, tag = 'internal scratch']
  %s0 = inlined_call_operand.vmem [shape: f32[32,64], index: 0, kind: input, shape index: {}]
  %s1 = inlined_call_operand.vmem [shape: f32[1,64], index: 1, kind: input, shape index: {}]
  %s2 = inlined_call_operand.vmem [shape: f32[1,64], index: 2, kind: input, shape index: {}]
  %s3 = inlined_call_operand.vmem [shape: f32[32,64], index: 3, kind: output, shape index: {}]
  %s4 = sld [smem:[#allocation0]]
  $region22: #{us_downsample_block_forward.30} parent=0
    _
  %s6 = ssub.s32 1, %s4
  %s7 = scalar_select 0, %s6, %s4
  // Predicated region
  $region2: #{us_downsample_block_forward.30} parent=0 // pred_check
    _
  $region3: #{us_downsample_block_forward.30} parent=0 // pred_check_branch
    %9 = sbr.rel (0) target = $region5
  $region4: #{us_downsample_block_forward.30} parent=0 // pred_region
    _
  $region5: #{us_downsample_block_forward.30} parent=0 // pred_fallthru
    _
  // Predicated region
  $region6: #{us_downsample_block_forward.30} parent=0 // pred_check
    _
  $region7: #{us_downsample_block_forward.30} parent=0 // pred_check_branch
    %11 = sbr.rel (0) target = $region9
  $region8: #{us_downsample_block_forward.30} parent=0 // pred_region
    _
  $region9: #{us_downsample_block_forward.30} parent=0 // pred_fallthru
    _
  // Predicated region
  $region10: #{us_downsample_block_forward.30} parent=0 // pred_check
    _
  $region11: #{us_downsample_block_forward.30} parent=0 // pred_check_branch
    %13 = sbr.rel (0) target = $region13
  $region12: #{us_downsample_block_forward.30} parent=0 // pred_region
    _
  $region13: #{us_downsample_block_forward.30} parent=0 // pred_fallthru
    _
  %v14 = vld [vmem:[%s0] sm:$0xff]
  %v15 = vld [vmem:[%s0 + $0x8] sm:$0xff]
  %v16 = vld [vmem:[%s0 + $0x10] sm:$0xff]
  %v17 = vld [vmem:[%s0 + $0x18] sm:$0xff]
  %v18 = vld [vmem:[%s1] sm:$0x1]
  %v20 = vperm.slane %v18, 0
  %v22 = vmul.f32 %v14, %v20
  %v23 = vmul.f32 %v15, %v20
  %v24 = vmul.f32 %v16, %v20
  %v25 = vmul.f32 %v17, %v20
  %v26 = vld [vmem:[%s2] sm:$0x1]
  %v28 = vperm.slane %v26, 0
  %v30 = vadd.f32 %v22, %v28
  %v31 = vadd.f32 %v23, %v28
  %v32 = vadd.f32 %v24, %v28
  %v33 = vadd.f32 %v25, %v28
  %v34 = vmax.f32 %v30, 0.0
  %v35 = vmax.f32 %v31, 0.0
  %v36 = vmax.f32 %v32, 0.0
  %v37 = vmax.f32 %v33, 0.0
  %vm38 = vcmask 523264
  %39 = vst.msk [vmem:[%s3] sm:$0xff] %vm38, %v34
  %40 = vst.msk [vmem:[%s3 + $0x8] sm:$0xff] %vm38, %v35
  %41 = vst.msk [vmem:[%s3 + $0x10] sm:$0xff] %vm38, %v36
  %42 = vst.msk [vmem:[%s3 + $0x18] sm:$0xff] %vm38, %v37
  // Predicated region
  $region14: #{us_downsample_block_forward.30} parent=0 // pred_check
    _
  $region15: #{us_downsample_block_forward.30} parent=0 // pred_check_branch
    %44 = sbr.rel (0) target = $region17
  $region16: #{us_downsample_block_forward.30} parent=0 // pred_region
    _
  $region17: #{us_downsample_block_forward.30} parent=0 // pred_fallthru
    _
  // Predicated region
  $region18: #{us_downsample_block_forward.30} parent=0 // pred_check
    _
  $region19: #{us_downsample_block_forward.30} parent=0 // pred_check_branch
    %46 = sbr.rel (0) target = $region21
  $region20: #{us_downsample_block_forward.30} parent=0 // pred_region
    _
  $region21: #{us_downsample_block_forward.30} parent=0 // pred_fallthru
    _

// kernel: us_downsample_block_forward.46
$region0: #{us_downsample_block_forward.46}
  #allocation0 [shape = 'u32[]', space=smem, size = 0x4, offset = 0x4, fixed_abs, tag = 'smem constant byte address 0x4 - core index']
  #allocation1 [shape = 'u32[72,128]{1,0:T(1,128)}', space=vmem, size = 0x9000, scoped, tag = 'internal scratch']
  %s0 = inlined_call_operand.vmem [shape: bf16[512,36], index: 0, kind: input, shape index: {}]
  %s1 = inlined_call_operand.vmem [shape: bf16[36,4], index: 1, kind: input, shape index: {}]
  %s2 = inlined_call_operand.vmem [shape: f32[1,4], index: 2, kind: input, shape index: {}]
  %s3 = inlined_call_operand.vmem [shape: f32[1,4], index: 3, kind: input, shape index: {}]
  %s4 = inlined_call_operand.vmem [shape: f32[512,4], index: 4, kind: output, shape index: {}]
  %s5 = sld [smem:[#allocation0]]
  $region49: #{us_downsample_block_forward.46} parent=0
    _
  %s7 = ssub.s32 1, %s5
  %s8 = scalar_select 0, %s7, %s5
  loop: start=0, step=1, limit=4
  $region2: #{us_downsample_block_forward.46} parent=0 // loop_pre_header
    _
  $region3: #{us_downsample_block_forward.46} parent=0 // loop_header
    %s10 = sphi 0, %s14
    %p11 = scmp.ge.s32.totalorder %s10, 4
    %s20 = sphi 0, %s22
    %s23 = sphi 0, %s20
    %s24 = sphi 0, %s23
    %s40 = sphi 0, %s24
    %s44 = sphi 0, %s44
    %s46 = sphi 0, %s44
    %s47 = sphi 0, %s46
    %s61 = sphi 0, %s47
    %s65 = sphi 0, %s65
    %s67 = sphi 0, %s65
    %s68 = sphi 0, %s67
    %s82 = sphi 0, %s68
    %s86 = sphi 0, %s86
    %s88 = sphi 0, %s86
    %s89 = sphi 0, %s88
    %s103 = sphi 0, %s89
    %s109 = sphi 0, %s111
    %s112 = sphi 0, %s109
    %s113 = sphi 0, %s112
    %s129 = sphi 0, %s113
  $region4: #{us_downsample_block_forward.46} parent=0 // loop_header_branch
    %13 = sbr.rel (%p11) target = $region8
  $region5: #{us_downsample_block_forward.46} parent=0 // loop_body
    %s15 = ssub.s32 %s10, 1
    %s16 = ssub.s32 %s10, 2
    %s17 = sadd.s32 %s10, 1
    %s18 = ssub.s32 %s10, %s17
    %p19 = scmp.eq.s32.totalorder %s18, 0
    %s21 = sadd.s32 %s20, 1
    %s22 = scalar_select %p19, %s20, %s21
    %p25 = pneg %p19
    %p26 = scmp.eq.s32.totalorder %s10, 1
    %p27 = por %p25, %p26
    %p28 = scmp.ne.s32.totalorder %s20, %s23
    %p29 = scmp.eq.s32.totalorder %s10, 0
    %p30 = por %p28, %p29
    %p31 = scmp.ne.s32.totalorder %s20, %s23
    %p32 = scmp.eq.s32.totalorder %s15, 1
    %p33 = por %p31, %p32
    %p34 = scmp.ne.s32.totalorder %s23, %s24
    %p35 = scmp.eq.s32.totalorder %s15, 0
    %p36 = por %p34, %p35
    %p37 = scmp.ne.s32.totalorder %s23, %s24
    %p38 = scmp.eq.s32.totalorder %s16, 1
    %p39 = por %p37, %p38
    %p41 = scmp.ne.s32.totalorder %s24, %s40
    %p42 = scmp.eq.s32.totalorder %s16, 0
    %p43 = por %p41, %p42
    %s45 = sadd.s32 %s44, 1
    %p48 = scmp.eq.s32.totalorder %s10, 1
    %p49 = scmp.ne.s32.totalorder %s44, %s46
    %p50 = scmp.eq.s32.totalorder %s10, 0
    %p51 = por %p49, %p50
    %p52 = scmp.ne.s32.totalorder %s44, %s46
    %p53 = scmp.eq.s32.totalorder %s15, 1
    %p54 = por %p52, %p53
    %p55 = scmp.ne.s32.totalorder %s46, %s47
    %p56 = scmp.eq.s32.totalorder %s15, 0
    %p57 = por %p55, %p56
    %p58 = scmp.ne.s32.totalorder %s46, %s47
    %p59 = scmp.eq.s32.totalorder %s16, 1
    %p60 = por %p58, %p59
    %p62 = scmp.ne.s32.totalorder %s47, %s61
    %p63 = scmp.eq.s32.totalorder %s16, 0
    %p64 = por %p62, %p63
    %s66 = sadd.s32 %s65, 1
    %p69 = scmp.eq.s32.totalorder %s10, 1
    %p70 = scmp.ne.s32.totalorder %s65, %s67
    %p71 = scmp.eq.s32.totalorder %s10, 0
    %p72 = por %p70, %p71
    %p73 = scmp.ne.s32.totalorder %s65, %s67
    %p74 = scmp.eq.s32.totalorder %s15, 1
    %p75 = por %p73, %p74
    %p76 = scmp.ne.s32.totalorder %s67, %s68
    %p77 = scmp.eq.s32.totalorder %s15, 0
    %p78 = por %p76, %p77
    %p79 = scmp.ne.s32.totalorder %s67, %s68
    %p80 = scmp.eq.s32.totalorder %s16, 1
    %p81 = por %p79, %p80
    %p83 = scmp.ne.s32.totalorder %s68, %s82
    %p84 = scmp.eq.s32.totalorder %s16, 0
    %p85 = por %p83, %p84
    %s87 = sadd.s32 %s86, 1
    %p90 = scmp.eq.s32.totalorder %s10, 1
    %p91 = scmp.ne.s32.totalorder %s86, %s88
    %p92 = scmp.eq.s32.totalorder %s10, 0
    %p93 = por %p91, %p92
    %p94 = scmp.ne.s32.totalorder %s86, %s88
    %p95 = scmp.eq.s32.totalorder %s15, 1
    %p96 = por %p94, %p95
    %p97 = scmp.ne.s32.totalorder %s88, %s89
    %p98 = scmp.eq.s32.totalorder %s15, 0
    %p99 = por %p97, %p98
    %p100 = scmp.ne.s32.totalorder %s88, %s89
    %p101 = scmp.eq.s32.totalorder %s16, 1
    %p102 = por %p100, %p101
    %p104 = scmp.ne.s32.totalorder %s89, %s103
    %p105 = scmp.eq.s32.totalorder %s16, 0
    %p106 = por %p104, %p105
    %s107 = ssub.s32 %s10, %s17
    %p108 = scmp.eq.s32.totalorder %s107, 0
    %s110 = sadd.s32 %s109, 1
    %s111 = scalar_select %p108, %s109, %s110
    %p114 = pneg %p108
    %p115 = scmp.eq.s32.totalorder %s10, 1
    %p116 = por %p114, %p115
    %p117 = scmp.ne.s32.totalorder %s109, %s112
    %p118 = scmp.eq.s32.totalorder %s10, 0
    %p119 = por %p117, %p118
    %p120 = scmp.ne.s32.totalorder %s109, %s112
    %p121 = scmp.eq.s32.totalorder %s15, 1
    %p122 = por %p120, %p121
    %p123 = scmp.ne.s32.totalorder %s112, %s113
    %p124 = scmp.eq.s32.totalorder %s15, 0
    %p125 = por %p123, %p124
    %p126 = scmp.ne.s32.totalorder %s112, %s113
    %p127 = scmp.eq.s32.totalorder %s16, 1
    %p128 = por %p126, %p127
    %p130 = scmp.ne.s32.totalorder %s113, %s129
    %p131 = scmp.eq.s32.totalorder %s16, 0
    %p132 = por %p130, %p131
    %p133 = scmp.le.s32.totalorder 1, %s10
    %p134 = scmp.lt.s32.totalorder %s10, 3
    %p135 = pnand %p133, %p134
    %p136 = pneg %p135
    // Predicated region
    $region9: #{us_downsample_block_forward.46} parent=5 // pred_check
      _
    $region10: #{us_downsample_block_forward.46} parent=5 // pred_check_branch
      %138 = sbr.rel (%p135) target = $region12
    $region11: #{us_downsample_block_forward.46} parent=5 // pred_region
      %s139 = ssub.s32 %s10, 1
      // Predicated region
      $region13: #{us_downsample_block_forward.46} parent=11 // pred_check
        %p140 = pneg %p57
      $region14: #{us_downsample_block_forward.46} parent=11 // pred_check_branch
        %142 = sbr.rel (%p140) target = $region16
      $region15: #{us_downsample_block_forward.46} parent=11 // pred_region
        _
      $region16: #{us_downsample_block_forward.46} parent=11 // pred_fallthru
        _
      // Predicated region
      $region17: #{us_downsample_block_forward.46} parent=11 // pred_check
        %p143 = pneg %p78
      $region18: #{us_downsample_block_forward.46} parent=11 // pred_check_branch
        %145 = sbr.rel (%p143) target = $region20
      $region19: #{us_downsample_block_forward.46} parent=11 // pred_region
        _
      $region20: #{us_downsample_block_forward.46} parent=11 // pred_fallthru
        _
      // Predicated region
      $region21: #{us_downsample_block_forward.46} parent=11 // pred_check
        %p146 = pneg %p99
      $region22: #{us_downsample_block_forward.46} parent=11 // pred_check_branch
        %148 = sbr.rel (%p146) target = $region24
      $region23: #{us_downsample_block_forward.46} parent=11 // pred_region
        _
      $region24: #{us_downsample_block_forward.46} parent=11 // pred_fallthru
        _
    $region12: #{us_downsample_block_forward.46} parent=5 // pred_fallthru
      _
    %p149 = scmp.lt.s32.totalorder %s10, 2
    // Predicated region
    $region25: #{us_downsample_block_forward.46} parent=5 // pred_check
      %p150 = pneg %p149
    $region26: #{us_downsample_block_forward.46} parent=5 // pred_check_branch
      %152 = sbr.rel (%p150) target = $region28
    $region27: #{us_downsample_block_forward.46} parent=5 // pred_region
      // Predicated region
      $region29: #{us_downsample_block_forward.46} parent=27 // pred_check
        %p153 = pneg %p30
      $region30: #{us_downsample_block_forward.46} parent=27 // pred_check_branch
        %155 = sbr.rel (%p153) target = $region32
      $region31: #{us_downsample_block_forward.46} parent=27 // pred_region
        %s156 = smul.u32 32, %s10
        %p157 = scmp.lt.s32.totalorder %s156, 63
        %s158 = scalar_select %p157, %s156, 63
        %s159 = smul.addr %s158, 4
        %s160 = scalar_lea.vmem %s0, %s159
        %s161 = smul.u32 32, %s10
      $region32: #{us_downsample_block_forward.46} parent=27 // pred_fallthru
        _
    $region28: #{us_downsample_block_forward.46} parent=5 // pred_fallthru
      _
    %p162 = scmp.le.s32.totalorder 1, %s10
    %p163 = scmp.lt.s32.totalorder %s10, 3
    %p164 = pnand %p162, %p163
    %p165 = pneg %p164
    // Predicated region
    $region33: #{us_downsample_block_forward.46} parent=5 // pred_check
      _
    $region34: #{us_downsample_block_forward.46} parent=5 // pred_check_branch
      %167 = sbr.rel (%p164) target = $region36
    $region35: #{us_downsample_block_forward.46} parent=5 // pred_region
      %s168 = ssub.s32 %s10, 1
      %s169 = smul.u32 32, %s15
      %p170 = scmp.lt.s32.totalorder %s169, 63
      %s171 = scalar_select %p170, %s169, 63
      %s172 = smul.addr %s171, 4
      %s173 = scalar_lea.vmem %s0, %s172
      %p174 = pneg %p36
      %p175 = pneg %p33
      %p176 = pneg %p57
      %p177 = pneg %p54
      %p178 = pneg %p78
      %p179 = pneg %p75
      %p180 = pneg %p99
      %p181 = pneg %p96
      %p182 = pneg %p125
      %p183 = pneg %p122
      %s184 = smul.u32 32, %s15
      %p185 = scmp.lt.s32.totalorder %s184, 63
      %s186 = scalar_select %p185, %s184, 63
      %s187 = smul.addr %s186, 8
      %s188 = scalar_lea.vmem %s4, %s187
      %s189 = smul.u32 32, %s15
      %p190 = scmp.lt.s32.totalorder %s189, 63
      %s191 = scalar_select %p190, %s189, 63
      %s192 = smul.addr %s191, 4
      %s193 = scalar_lea.vmem %s0, %s192
      %s194 = smul.u32 32, %s15
      %s195 = smul.u32 32, %s15
      %p196 = scmp.lt.s32.totalorder %s195, 63
      %s197 = scalar_select %p196, %s195, 63
      %s198 = smul.addr %s197, 8
      %s199 = scalar_lea.vmem %s4, %s198
      %s200 = smul.u32 32, %s15
      %v202 = vld [vmem:[%s193] sm:$0xf]
      %v203 = vld [vmem:[%s193 + $0x4] sm:$0xf]
      %v204 = vld [vmem:[%s193 + $0x8] sm:$0xf]
      %v205 = vld [vmem:[%s193 + $0xc] sm:$0xf]
      %v206 = vld [vmem:[%s193 + $0x10] sm:$0xf]
      %v207 = vld [vmem:[%s193 + $0x14] sm:$0xf]
      %v208 = vld [vmem:[%s193 + $0x18] sm:$0xf]
      %v209 = vld [vmem:[%s193 + $0x1c] sm:$0xf]
      %v210 = vld [vmem:[%s193 + $0x20] sm:$0xf]
      %v211 = vld [vmem:[%s193 + $0x24] sm:$0xf]
      %v212 = vld [vmem:[%s193 + $0x28] sm:$0xf]
      %v213 = vld [vmem:[%s193 + $0x2c] sm:$0xf]
      %v214 = vld [vmem:[%s193 + $0x30] sm:$0xf]
      %v215 = vld [vmem:[%s193 + $0x34] sm:$0xf]
      %v216 = vld [vmem:[%s193 + $0x38] sm:$0xf]
      %v217 = vld [vmem:[%s193 + $0x3c] sm:$0xf]
      %v218 = vld [vmem:[%s193 + $0x40] sm:$0xf]
      %v219 = vld [vmem:[%s193 + $0x44] sm:$0xf]
      %v220 = vld [vmem:[%s193 + $0x48] sm:$0xf]
      %v221 = vld [vmem:[%s193 + $0x4c] sm:$0xf]
      %v222 = vld [vmem:[%s193 + $0x50] sm:$0xf]
      %v223 = vld [vmem:[%s193 + $0x54] sm:$0xf]
      %v224 = vld [vmem:[%s193 + $0x58] sm:$0xf]
      %v225 = vld [vmem:[%s193 + $0x5c] sm:$0xf]
      %v226 = vld [vmem:[%s193 + $0x60] sm:$0xf]
      %v227 = vld [vmem:[%s193 + $0x64] sm:$0xf]
      %v228 = vld [vmem:[%s193 + $0x68] sm:$0xf]
      %v229 = vld [vmem:[%s193 + $0x6c] sm:$0xf]
      %v230 = vld [vmem:[%s193 + $0x70] sm:$0xf]
      %v231 = vld [vmem:[%s193 + $0x74] sm:$0xf]
      %v232 = vld [vmem:[%s193 + $0x78] sm:$0xf]
      %v233 = vld [vmem:[%s193 + $0x7c] sm:$0xf]
      %v234 = vld [vmem:[%s1] sm:$0xf]
      %v235 = vld [vmem:[%s1 + $0x4] sm:$0xf]
      %v236 = vld [vmem:[%s1 + $0x8] sm:$0xf]
      %v237 = vld [vmem:[%s1 + $0xc] sm:$0xf]
      %v238 = vld [vmem:[%s1 + $0x10] sm:$0x3]
      %v271 = vunpack.c.l.b16 %v202
      %v272 = vunpack.c.l.b16 %v203
      %v273 = vunpack.c.l.b16 %v204
      %v274 = vunpack.c.l.b16 %v205
      %v275 = vunpack.c.l.b16 %v206
      %v276 = vunpack.c.l.b16 %v207
      %v277 = vunpack.c.l.b16 %v208
      %v278 = vunpack.c.l.b16 %v209
      %v279 = vunpack.c.l.b16 %v210
      %v280 = vunpack.c.l.b16 %v211
      %v281 = vunpack.c.l.b16 %v212
      %v282 = vunpack.c.l.b16 %v213
      %v283 = vunpack.c.l.b16 %v214
      %v284 = vunpack.c.l.b16 %v215
      %v285 = vunpack.c.l.b16 %v216
      %v286 = vunpack.c.l.b16 %v217
      %v287 = vunpack.c.l.b16 %v218
      %v288 = vunpack.c.l.b16 %v219
      %v289 = vunpack.c.l.b16 %v220
      %v290 = vunpack.c.l.b16 %v221
      %v291 = vunpack.c.l.b16 %v222
      %v292 = vunpack.c.l.b16 %v223
      %v293 = vunpack.c.l.b16 %v224
      %v294 = vunpack.c.l.b16 %v225
      %v295 = vunpack.c.l.b16 %v226
      %v296 = vunpack.c.l.b16 %v227
      %v297 = vunpack.c.l.b16 %v228
      %v298 = vunpack.c.l.b16 %v229
      %v299 = vunpack.c.l.b16 %v230
      %v300 = vunpack.c.l.b16 %v231
      %v301 = vunpack.c.l.b16 %v232
      %v302 = vunpack.c.l.b16 %v233
      %v303 = vpack.c.b16 %v272, %v271
      %v304 = vpack.c.b16 %v274, %v273
      %v305 = vpack.c.b16 %v276, %v275
      %v306 = vpack.c.b16 %v278, %v277
      %v307 = vpack.c.b16 %v280, %v279
      %v308 = vpack.c.b16 %v282, %v281
      %v309 = vpack.c.b16 %v284, %v283
      %v310 = vpack.c.b16 %v286, %v285
      %v311 = vpack.c.b16 %v288, %v287
      %v312 = vpack.c.b16 %v290, %v289
      %v313 = vpack.c.b16 %v292, %v291
      %v314 = vpack.c.b16 %v294, %v293
      %v315 = vpack.c.b16 %v296, %v295
      %v316 = vpack.c.b16 %v298, %v297
      %v317 = vpack.c.b16 %v300, %v299
      %v318 = vpack.c.b16 %v302, %v301
      %v324 = vunpack.c.l.b16 %v234
      %v325 = vunpack.c.l.b16 %v235
      %v326 = vunpack.c.l.b16 %v236
      %v327 = vunpack.c.l.b16 %v237
      %v328 = vunpack.c.l.b16 %v238
      %v329 = vpack.c.b16 %v325, %v324
      %v330 = vpack.c.b16 %v327, %v326
      %v331 = vpack.c.b16 %v328, %v328
      %vm334 = vcmask 293888
      %v336 = vsel %vm334, %v303, 0
      %v339 = vsel %vm334, %v304, 0
      %v342 = vsel %vm334, %v305, 0
      %v345 = vsel %vm334, %v306, 0
      %v348 = vsel %vm334, %v307, 0
      %v351 = vsel %vm334, %v308, 0
      %v354 = vsel %vm334, %v309, 0
      %v357 = vsel %vm334, %v310, 0
      %v360 = vsel %vm334, %v311, 0
      %v363 = vsel %vm334, %v312, 0
      %v366 = vsel %vm334, %v313, 0
      %v369 = vsel %vm334, %v314, 0
      %v372 = vsel %vm334, %v315, 0
      %v375 = vsel %vm334, %v316, 0
      %v378 = vsel %vm334, %v317, 0
      %v381 = vsel %vm334, %v318, 0
      %vm383 = vcmask 1041408
      %v385 = vsel %vm383, %v331, 0
      %387 = vmatpush.bf16.msra.mxu0 0
      %388 = vmatpush.bf16.msra.mxu0 0
      %389 = vmatpush.bf16.msra.mxu0 0
      %390 = vmatpush.bf16.msra.mxu0 0
      %391 = vmatpush.bf16.msra.mxu0 0
      %392 = vmatpush.bf16.msra.mxu0 %v385
      %393 = vmatpush.bf16.msra.mxu0 %v330
      %394 = vmatpush.bf16.msra.mxu0 %v329
      %395 = vmatmul.bf16.gmra.mxu0 %v336
      %v396 = vpop.f32.mrf.mxu0
      %v397 = vadd.f32 0.0, %v396
      %v398 = vpop.f32.mrf.mxu0
      %v399 = vadd.f32 0.0, %v398
      %400 = vmatmul.bf16.gmra.mxu0 %v339
      %v401 = vpop.f32.mrf.mxu0
      %v402 = vadd.f32 0.0, %v401
      %v403 = vpop.f32.mrf.mxu0
      %v404 = vadd.f32 0.0, %v403
      %405 = vmatmul.bf16.gmra.mxu0 %v342
      %v406 = vpop.f32.mrf.mxu0
      %v407 = vadd.f32 0.0, %v406
      %v408 = vpop.f32.mrf.mxu0
      %v409 = vadd.f32 0.0, %v408
      %410 = vmatmul.bf16.gmra.mxu0 %v345
      %v411 = vpop.f32.mrf.mxu0
      %v412 = vadd.f32 0.0, %v411
      %v413 = vpop.f32.mrf.mxu0
      %v414 = vadd.f32 0.0, %v413
      %415 = vmatmul.bf16.gmra.mxu0 %v348
      %v416 = vpop.f32.mrf.mxu0
      %v417 = vadd.f32 0.0, %v416
      %v418 = vpop.f32.mrf.mxu0
      %v419 = vadd.f32 0.0, %v418
      %420 = vmatmul.bf16.gmra.mxu0 %v351
      %v421 = vpop.f32.mrf.mxu0
      %v422 = vadd.f32 0.0, %v421
      %v423 = vpop.f32.mrf.mxu0
      %v424 = vadd.f32 0.0, %v423
      %425 = vmatmul.bf16.gmra.mxu0 %v354
      %v426 = vpop.f32.mrf.mxu0
      %v427 = vadd.f32 0.0, %v426
      %v428 = vpop.f32.mrf.mxu0
      %v429 = vadd.f32 0.0, %v428
      %430 = vmatmul.bf16.gmra.mxu0 %v357
      %v431 = vpop.f32.mrf.mxu0
      %v432 = vadd.f32 0.0, %v431
      %v433 = vpop.f32.mrf.mxu0
      %v434 = vadd.f32 0.0, %v433
      %435 = vmatmul.bf16.gmra.mxu0 %v360
      %v436 = vpop.f32.mrf.mxu0
      %v437 = vadd.f32 0.0, %v436
      %v438 = vpop.f32.mrf.mxu0
      %v439 = vadd.f32 0.0, %v438
      %440 = vmatmul.bf16.gmra.mxu0 %v363
      %v441 = vpop.f32.mrf.mxu0
      %v442 = vadd.f32 0.0, %v441
      %v443 = vpop.f32.mrf.mxu0
      %v444 = vadd.f32 0.0, %v443
      %445 = vmatmul.bf16.gmra.mxu0 %v366
      %v446 = vpop.f32.mrf.mxu0
      %v447 = vadd.f32 0.0, %v446
      %v448 = vpop.f32.mrf.mxu0
      %v449 = vadd.f32 0.0, %v448
      %450 = vmatmul.bf16.gmra.mxu0 %v369
      %v451 = vpop.f32.mrf.mxu0
      %v452 = vadd.f32 0.0, %v451
      %v453 = vpop.f32.mrf.mxu0
      %v454 = vadd.f32 0.0, %v453
      %455 = vmatmul.bf16.gmra.mxu0 %v372
      %v456 = vpop.f32.mrf.mxu0
      %v457 = vadd.f32 0.0, %v456
      %v458 = vpop.f32.mrf.mxu0
      %v459 = vadd.f32 0.0, %v458
      %460 = vmatmul.bf16.gmra.mxu0 %v375
      %v461 = vpop.f32.mrf.mxu0
      %v462 = vadd.f32 0.0, %v461
      %v463 = vpop.f32.mrf.mxu0
      %v464 = vadd.f32 0.0, %v463
      %465 = vmatmul.bf16.gmra.mxu0 %v378
      %v466 = vpop.f32.mrf.mxu0
      %v467 = vadd.f32 0.0, %v466
      %v468 = vpop.f32.mrf.mxu0
      %v469 = vadd.f32 0.0, %v468
      %470 = vmatmul.bf16.gmra.mxu0 %v381
      %v471 = vpop.f32.mrf.mxu0
      %v472 = vadd.f32 0.0, %v471
      %v473 = vpop.f32.mrf.mxu0
      %v474 = vadd.f32 0.0, %v473
      %475 = vdwg.mxu0
      %v476 = vld [vmem:[%s2] sm:$0x1]
      %v478 = vperm.slane %v476, 0
      %v480 = vmul.f32 %v397, %v478
      %v481 = vmul.f32 %v399, %v478
      %v482 = vmul.f32 %v402, %v478
      %v483 = vmul.f32 %v404, %v478
      %v484 = vmul.f32 %v407, %v478
      %v485 = vmul.f32 %v409, %v478
      %v486 = vmul.f32 %v412, %v478
      %v487 = vmul.f32 %v414, %v478
      %v488 = vmul.f32 %v417, %v478
      %v489 = vmul.f32 %v419, %v478
      %v490 = vmul.f32 %v422, %v478
      %v491 = vmul.f32 %v424, %v478
      %v492 = vmul.f32 %v427, %v478
      %v493 = vmul.f32 %v429, %v478
      %v494 = vmul.f32 %v432, %v478
      %v495 = vmul.f32 %v434, %v478
      %v496 = vmul.f32 %v437, %v478
      %v497 = vmul.f32 %v439, %v478
      %v498 = vmul.f32 %v442, %v478
      %v499 = vmul.f32 %v444, %v478
      %v500 = vmul.f32 %v447, %v478
      %v501 = vmul.f32 %v449, %v478
      %v502 = vmul.f32 %v452, %v478
      %v503 = vmul.f32 %v454, %v478
      %v504 = vmul.f32 %v457, %v478
      %v505 = vmul.f32 %v459, %v478
      %v506 = vmul.f32 %v462, %v478
      %v507 = vmul.f32 %v464, %v478
      %v508 = vmul.f32 %v467, %v478
      %v509 = vmul.f32 %v469, %v478
      %v510 = vmul.f32 %v472, %v478
      %v511 = vmul.f32 %v474, %v478
      %v512 = vld [vmem:[%s3] sm:$0x1]
      %v514 = vperm.slane %v512, 0
      %v516 = vadd.f32 %v480, %v514
      %v517 = vadd.f32 %v481, %v514
      %v518 = vadd.f32 %v482, %v514
      %v519 = vadd.f32 %v483, %v514
      %v520 = vadd.f32 %v484, %v514
      %v521 = vadd.f32 %v485, %v514
      %v522 = vadd.f32 %v486, %v514
      %v523 = vadd.f32 %v487, %v514
      %v524 = vadd.f32 %v488, %v514
      %v525 = vadd.f32 %v489, %v514
      %v526 = vadd.f32 %v490, %v514
      %v527 = vadd.f32 %v491, %v514
      %v528 = vadd.f32 %v492, %v514
      %v529 = vadd.f32 %v493, %v514
      %v530 = vadd.f32 %v494, %v514
      %v531 = vadd.f32 %v495, %v514
      %v532 = vadd.f32 %v496, %v514
      %v533 = vadd.f32 %v497, %v514
      %v534 = vadd.f32 %v498, %v514
      %v535 = vadd.f32 %v499, %v514
      %v536 = vadd.f32 %v500, %v514
      %v537 = vadd.f32 %v501, %v514
      %v538 = vadd.f32 %v502, %v514
      %v539 = vadd.f32 %v503, %v514
      %v540 = vadd.f32 %v504, %v514
      %v541 = vadd.f32 %v505, %v514
      %v542 = vadd.f32 %v506, %v514
      %v543 = vadd.f32 %v507, %v514
      %v544 = vadd.f32 %v508, %v514
      %v545 = vadd.f32 %v509, %v514
      %v546 = vadd.f32 %v510, %v514
      %v547 = vadd.f32 %v511, %v514
      %v548 = vmax.f32 %v516, 0.0
      %v549 = vmax.f32 %v517, 0.0
      %v550 = vmax.f32 %v518, 0.0
      %v551 = vmax.f32 %v519, 0.0
      %v552 = vmax.f32 %v520, 0.0
      %v553 = vmax.f32 %v521, 0.0
      %v554 = vmax.f32 %v522, 0.0
      %v555 = vmax.f32 %v523, 0.0
      %v556 = vmax.f32 %v524, 0.0
      %v557 = vmax.f32 %v525, 0.0
      %v558 = vmax.f32 %v526, 0.0
      %v559 = vmax.f32 %v527, 0.0
      %v560 = vmax.f32 %v528, 0.0
      %v561 = vmax.f32 %v529, 0.0
      %v562 = vmax.f32 %v530, 0.0
      %v563 = vmax.f32 %v531, 0.0
      %v564 = vmax.f32 %v532, 0.0
      %v565 = vmax.f32 %v533, 0.0
      %v566 = vmax.f32 %v534, 0.0
      %v567 = vmax.f32 %v535, 0.0
      %v568 = vmax.f32 %v536, 0.0
      %v569 = vmax.f32 %v537, 0.0
      %v570 = vmax.f32 %v538, 0.0
      %v571 = vmax.f32 %v539, 0.0
      %v572 = vmax.f32 %v540, 0.0
      %v573 = vmax.f32 %v541, 0.0
      %v574 = vmax.f32 %v542, 0.0
      %v575 = vmax.f32 %v543, 0.0
      %v576 = vmax.f32 %v544, 0.0
      %v577 = vmax.f32 %v545, 0.0
      %v578 = vmax.f32 %v546, 0.0
      %v579 = vmax.f32 %v547, 0.0
      %vm580 = vcmask 31744
      %581 = vst.msk [vmem:[%s199] sm:$0xff] %vm580, %v548
      %582 = vst.msk [vmem:[%s199 + $0x8] sm:$0xff] %vm580, %v549
      %583 = vst.msk [vmem:[%s199 + $0x10] sm:$0xff] %vm580, %v550
      %584 = vst.msk [vmem:[%s199 + $0x18] sm:$0xff] %vm580, %v551
      %585 = vst.msk [vmem:[%s199 + $0x20] sm:$0xff] %vm580, %v552
      %586 = vst.msk [vmem:[%s199 + $0x28] sm:$0xff] %vm580, %v553
      %587 = vst.msk [vmem:[%s199 + $0x30] sm:$0xff] %vm580, %v554
      %588 = vst.msk [vmem:[%s199 + $0x38] sm:$0xff] %vm580, %v555
      %589 = vst.msk [vmem:[%s199 + $0x40] sm:$0xff] %vm580, %v556
      %590 = vst.msk [vmem:[%s199 + $0x48] sm:$0xff] %vm580, %v557
      %591 = vst.msk [vmem:[%s199 + $0x50] sm:$0xff] %vm580, %v558
      %592 = vst.msk [vmem:[%s199 + $0x58] sm:$0xff] %vm580, %v559
      %593 = vst.msk [vmem:[%s199 + $0x60] sm:$0xff] %vm580, %v560
      %594 = vst.msk [vmem:[%s199 + $0x68] sm:$0xff] %vm580, %v561
      %595 = vst.msk [vmem:[%s199 + $0x70] sm:$0xff] %vm580, %v562
      %596 = vst.msk [vmem:[%s199 + $0x78] sm:$0xff] %vm580, %v563
      %597 = vst.msk [vmem:[%s199 + $0x80] sm:$0xff] %vm580, %v564
      %598 = vst.msk [vmem:[%s199 + $0x88] sm:$0xff] %vm580, %v565
      %599 = vst.msk [vmem:[%s199 + $0x90] sm:$0xff] %vm580, %v566
      %600 = vst.msk [vmem:[%s199 + $0x98] sm:$0xff] %vm580, %v567
      %601 = vst.msk [vmem:[%s199 + $0xa0] sm:$0xff] %vm580, %v568
      %602 = vst.msk [vmem:[%s199 + $0xa8] sm:$0xff] %vm580, %v569
      %603 = vst.msk [vmem:[%s199 + $0xb0] sm:$0xff] %vm580, %v570
      %604 = vst.msk [vmem:[%s199 + $0xb8] sm:$0xff] %vm580, %v571
      %605 = vst.msk [vmem:[%s199 + $0xc0] sm:$0xff] %vm580, %v572
      %606 = vst.msk [vmem:[%s199 + $0xc8] sm:$0xff] %vm580, %v573
      %607 = vst.msk [vmem:[%s199 + $0xd0] sm:$0xff] %vm580, %v574
      %608 = vst.msk [vmem:[%s199 + $0xd8] sm:$0xff] %vm580, %v575
      %609 = vst.msk [vmem:[%s199 + $0xe0] sm:$0xff] %vm580, %v576
      %610 = vst.msk [vmem:[%s199 + $0xe8] sm:$0xff] %vm580, %v577
      %611 = vst.msk [vmem:[%s199 + $0xf0] sm:$0xff] %vm580, %v578
      %612 = vst.msk [vmem:[%s199 + $0xf8] sm:$0xff] %vm580, %v579
      %s613 = smul.u32 32, %s15
      %p614 = scmp.lt.s32.totalorder %s613, 63
      %s615 = scalar_select %p614, %s613, 63
      %s616 = smul.addr %s615, 8
      %s617 = scalar_lea.vmem %s4, %s616
      // Predicated region
      $region37: #{us_downsample_block_forward.46} parent=35 // pred_check
        %p618 = pneg %p122
      $region38: #{us_downsample_block_forward.46} parent=35 // pred_check_branch
        %620 = sbr.rel (%p618) target = $region40
      $region39: #{us_downsample_block_forward.46} parent=35 // pred_region
        %s621 = smul.u32 32, %s15
      $region40: #{us_downsample_block_forward.46} parent=35 // pred_fallthru
        _
    $region36: #{us_downsample_block_forward.46} parent=5 // pred_fallthru
      _
    %p622 = scmp.le.s32.totalorder 2, %s10
    // Predicated region
    $region41: #{us_downsample_block_forward.46} parent=5 // pred_check
      %p623 = pneg %p622
    $region42: #{us_downsample_block_forward.46} parent=5 // pred_check_branch
      %625 = sbr.rel (%p623) target = $region44
    $region43: #{us_downsample_block_forward.46} parent=5 // pred_region
      %s626 = ssub.s32 %s10, 2
      // Predicated region
      $region45: #{us_downsample_block_forward.46} parent=43 // pred_check
        %p627 = pneg %p128
      $region46: #{us_downsample_block_forward.46} parent=43 // pred_check_branch
        %629 = sbr.rel (%p627) target = $region48
      $region47: #{us_downsample_block_forward.46} parent=43 // pred_region
        %s630 = smul.u32 32, %s16
        %p631 = scmp.lt.s32.totalorder %s630, 63
        %s632 = scalar_select %p631, %s630, 63
        %s633 = smul.addr %s632, 8
        %s634 = scalar_lea.vmem %s4, %s633
      $region48: #{us_downsample_block_forward.46} parent=43 // pred_fallthru
        _
    $region44: #{us_downsample_block_forward.46} parent=5 // pred_fallthru
      _
  $region6: #{us_downsample_block_forward.46} parent=0 // loop_footer
    %s14 = sadd.s32 1, %s10
  $region7: #{us_downsample_block_forward.46} parent=0 // loop_footer_branch
    %9 = sbr.rel target = $region3
  $region8: #{us_downsample_block_forward.46} parent=0 // loop_exit
    _

// kernel: us_downsample_block_forward.45
$region0: #{us_downsample_block_forward.45}
  #allocation0 [shape = 'u32[]', space=smem, size = 0x4, offset = 0x4, fixed_abs, tag = 'smem constant byte address 0x4 - core index']
  #allocation1 [shape = 'u32[72,128]{1,0:T(1,128)}', space=vmem, size = 0x9000, scoped, tag = 'internal scratch']
  %s0 = inlined_call_operand.vmem [shape: bf16[512,4], index: 0, kind: input, shape index: {}]
  %s1 = inlined_call_operand.vmem [shape: bf16[4,4], index: 1, kind: input, shape index: {}]
  %s2 = inlined_call_operand.vmem [shape: f32[1,4], index: 2, kind: input, shape index: {}]
  %s3 = inlined_call_operand.vmem [shape: f32[1,4], index: 3, kind: input, shape index: {}]
  %s4 = inlined_call_operand.vmem [shape: f32[512,4], index: 4, kind: output, shape index: {}]
  %s5 = sld [smem:[#allocation0]]
  $region49: #{us_downsample_block_forward.45} parent=0
    _
  %s7 = ssub.s32 1, %s5
  %s8 = scalar_select 0, %s7, %s5
  loop: start=0, step=1, limit=4
  $region2: #{us_downsample_block_forward.45} parent=0 // loop_pre_header
    _
  $region3: #{us_downsample_block_forward.45} parent=0 // loop_header
    %s10 = sphi 0, %s14
    %p11 = scmp.ge.s32.totalorder %s10, 4
    %s20 = sphi 0, %s22
    %s23 = sphi 0, %s20
    %s24 = sphi 0, %s23
    %s40 = sphi 0, %s24
    %s44 = sphi 0, %s44
    %s46 = sphi 0, %s44
    %s47 = sphi 0, %s46
    %s61 = sphi 0, %s47
    %s65 = sphi 0, %s65
    %s67 = sphi 0, %s65
    %s68 = sphi 0, %s67
    %s82 = sphi 0, %s68
    %s86 = sphi 0, %s86
    %s88 = sphi 0, %s86
    %s89 = sphi 0, %s88
    %s103 = sphi 0, %s89
    %s109 = sphi 0, %s111
    %s112 = sphi 0, %s109
    %s113 = sphi 0, %s112
    %s129 = sphi 0, %s113
  $region4: #{us_downsample_block_forward.45} parent=0 // loop_header_branch
    %13 = sbr.rel (%p11) target = $region8
  $region5: #{us_downsample_block_forward.45} parent=0 // loop_body
    %s15 = ssub.s32 %s10, 1
    %s16 = ssub.s32 %s10, 2
    %s17 = sadd.s32 %s10, 1
    %s18 = ssub.s32 %s10, %s17
    %p19 = scmp.eq.s32.totalorder %s18, 0
    %s21 = sadd.s32 %s20, 1
    %s22 = scalar_select %p19, %s20, %s21
    %p25 = pneg %p19
    %p26 = scmp.eq.s32.totalorder %s10, 1
    %p27 = por %p25, %p26
    %p28 = scmp.ne.s32.totalorder %s20, %s23
    %p29 = scmp.eq.s32.totalorder %s10, 0
    %p30 = por %p28, %p29
    %p31 = scmp.ne.s32.totalorder %s20, %s23
    %p32 = scmp.eq.s32.totalorder %s15, 1
    %p33 = por %p31, %p32
    %p34 = scmp.ne.s32.totalorder %s23, %s24
    %p35 = scmp.eq.s32.totalorder %s15, 0
    %p36 = por %p34, %p35
    %p37 = scmp.ne.s32.totalorder %s23, %s24
    %p38 = scmp.eq.s32.totalorder %s16, 1
    %p39 = por %p37, %p38
    %p41 = scmp.ne.s32.totalorder %s24, %s40
    %p42 = scmp.eq.s32.totalorder %s16, 0
    %p43 = por %p41, %p42
    %s45 = sadd.s32 %s44, 1
    %p48 = scmp.eq.s32.totalorder %s10, 1
    %p49 = scmp.ne.s32.totalorder %s44, %s46
    %p50 = scmp.eq.s32.totalorder %s10, 0
    %p51 = por %p49, %p50
    %p52 = scmp.ne.s32.totalorder %s44, %s46
    %p53 = scmp.eq.s32.totalorder %s15, 1
    %p54 = por %p52, %p53
    %p55 = scmp.ne.s32.totalorder %s46, %s47
    %p56 = scmp.eq.s32.totalorder %s15, 0
    %p57 = por %p55, %p56
    %p58 = scmp.ne.s32.totalorder %s46, %s47
    %p59 = scmp.eq.s32.totalorder %s16, 1
    %p60 = por %p58, %p59
    %p62 = scmp.ne.s32.totalorder %s47, %s61
    %p63 = scmp.eq.s32.totalorder %s16, 0
    %p64 = por %p62, %p63
    %s66 = sadd.s32 %s65, 1
    %p69 = scmp.eq.s32.totalorder %s10, 1
    %p70 = scmp.ne.s32.totalorder %s65, %s67
    %p71 = scmp.eq.s32.totalorder %s10, 0
    %p72 = por %p70, %p71
    %p73 = scmp.ne.s32.totalorder %s65, %s67
    %p74 = scmp.eq.s32.totalorder %s15, 1
    %p75 = por %p73, %p74
    %p76 = scmp.ne.s32.totalorder %s67, %s68
    %p77 = scmp.eq.s32.totalorder %s15, 0
    %p78 = por %p76, %p77
    %p79 = scmp.ne.s32.totalorder %s67, %s68
    %p80 = scmp.eq.s32.totalorder %s16, 1
    %p81 = por %p79, %p80
    %p83 = scmp.ne.s32.totalorder %s68, %s82
    %p84 = scmp.eq.s32.totalorder %s16, 0
    %p85 = por %p83, %p84
    %s87 = sadd.s32 %s86, 1
    %p90 = scmp.eq.s32.totalorder %s10, 1
    %p91 = scmp.ne.s32.totalorder %s86, %s88
    %p92 = scmp.eq.s32.totalorder %s10, 0
    %p93 = por %p91, %p92
    %p94 = scmp.ne.s32.totalorder %s86, %s88
    %p95 = scmp.eq.s32.totalorder %s15, 1
    %p96 = por %p94, %p95
    %p97 = scmp.ne.s32.totalorder %s88, %s89
    %p98 = scmp.eq.s32.totalorder %s15, 0
    %p99 = por %p97, %p98
    %p100 = scmp.ne.s32.totalorder %s88, %s89
    %p101 = scmp.eq.s32.totalorder %s16, 1
    %p102 = por %p100, %p101
    %p104 = scmp.ne.s32.totalorder %s89, %s103
    %p105 = scmp.eq.s32.totalorder %s16, 0
    %p106 = por %p104, %p105
    %s107 = ssub.s32 %s10, %s17
    %p108 = scmp.eq.s32.totalorder %s107, 0
    %s110 = sadd.s32 %s109, 1
    %s111 = scalar_select %p108, %s109, %s110
    %p114 = pneg %p108
    %p115 = scmp.eq.s32.totalorder %s10, 1
    %p116 = por %p114, %p115
    %p117 = scmp.ne.s32.totalorder %s109, %s112
    %p118 = scmp.eq.s32.totalorder %s10, 0
    %p119 = por %p117, %p118
    %p120 = scmp.ne.s32.totalorder %s109, %s112
    %p121 = scmp.eq.s32.totalorder %s15, 1
    %p122 = por %p120, %p121
    %p123 = scmp.ne.s32.totalorder %s112, %s113
    %p124 = scmp.eq.s32.totalorder %s15, 0
    %p125 = por %p123, %p124
    %p126 = scmp.ne.s32.totalorder %s112, %s113
    %p127 = scmp.eq.s32.totalorder %s16, 1
    %p128 = por %p126, %p127
    %p130 = scmp.ne.s32.totalorder %s113, %s129
    %p131 = scmp.eq.s32.totalorder %s16, 0
    %p132 = por %p130, %p131
    %p133 = scmp.le.s32.totalorder 1, %s10
    %p134 = scmp.lt.s32.totalorder %s10, 3
    %p135 = pnand %p133, %p134
    %p136 = pneg %p135
    // Predicated region
    $region9: #{us_downsample_block_forward.45} parent=5 // pred_check
      _
    $region10: #{us_downsample_block_forward.45} parent=5 // pred_check_branch
      %138 = sbr.rel (%p135) target = $region12
    $region11: #{us_downsample_block_forward.45} parent=5 // pred_region
      %s139 = ssub.s32 %s10, 1
      // Predicated region
      $region13: #{us_downsample_block_forward.45} parent=11 // pred_check
        %p140 = pneg %p57
      $region14: #{us_downsample_block_forward.45} parent=11 // pred_check_branch
        %142 = sbr.rel (%p140) target = $region16
      $region15: #{us_downsample_block_forward.45} parent=11 // pred_region
        _
      $region16: #{us_downsample_block_forward.45} parent=11 // pred_fallthru
        _
      // Predicated region
      $region17: #{us_downsample_block_forward.45} parent=11 // pred_check
        %p143 = pneg %p78
      $region18: #{us_downsample_block_forward.45} parent=11 // pred_check_branch
        %145 = sbr.rel (%p143) target = $region20
      $region19: #{us_downsample_block_forward.45} parent=11 // pred_region
        _
      $region20: #{us_downsample_block_forward.45} parent=11 // pred_fallthru
        _
      // Predicated region
      $region21: #{us_downsample_block_forward.45} parent=11 // pred_check
        %p146 = pneg %p99
      $region22: #{us_downsample_block_forward.45} parent=11 // pred_check_branch
        %148 = sbr.rel (%p146) target = $region24
      $region23: #{us_downsample_block_forward.45} parent=11 // pred_region
        _
      $region24: #{us_downsample_block_forward.45} parent=11 // pred_fallthru
        _
    $region12: #{us_downsample_block_forward.45} parent=5 // pred_fallthru
      _
    %p149 = scmp.lt.s32.totalorder %s10, 2
    // Predicated region
    $region25: #{us_downsample_block_forward.45} parent=5 // pred_check
      %p150 = pneg %p149
    $region26: #{us_downsample_block_forward.45} parent=5 // pred_check_branch
      %152 = sbr.rel (%p150) target = $region28
    $region27: #{us_downsample_block_forward.45} parent=5 // pred_region
      // Predicated region
      $region29: #{us_downsample_block_forward.45} parent=27 // pred_check
        %p153 = pneg %p30
      $region30: #{us_downsample_block_forward.45} parent=27 // pred_check_branch
        %155 = sbr.rel (%p153) target = $region32
      $region31: #{us_downsample_block_forward.45} parent=27 // pred_region
        %s156 = smul.u32 32, %s10
        %p157 = scmp.lt.s32.totalorder %s156, 63
        %s158 = scalar_select %p157, %s156, 63
        %s159 = smul.addr %s158, 4
        %s160 = scalar_lea.vmem %s0, %s159
        %s161 = smul.u32 32, %s10
      $region32: #{us_downsample_block_forward.45} parent=27 // pred_fallthru
        _
    $region28: #{us_downsample_block_forward.45} parent=5 // pred_fallthru
      _
    %p162 = scmp.le.s32.totalorder 1, %s10
    %p163 = scmp.lt.s32.totalorder %s10, 3
    %p164 = pnand %p162, %p163
    %p165 = pneg %p164
    // Predicated region
    $region33: #{us_downsample_block_forward.45} parent=5 // pred_check
      _
    $region34: #{us_downsample_block_forward.45} parent=5 // pred_check_branch
      %167 = sbr.rel (%p164) target = $region36
    $region35: #{us_downsample_block_forward.45} parent=5 // pred_region
      %s168 = ssub.s32 %s10, 1
      %s169 = smul.u32 32, %s15
      %p170 = scmp.lt.s32.totalorder %s169, 63
      %s171 = scalar_select %p170, %s169, 63
      %s172 = smul.addr %s171, 4
      %s173 = scalar_lea.vmem %s0, %s172
      %p174 = pneg %p36
      %p175 = pneg %p33
      %p176 = pneg %p57
      %p177 = pneg %p54
      %p178 = pneg %p78
      %p179 = pneg %p75
      %p180 = pneg %p99
      %p181 = pneg %p96
      %p182 = pneg %p125
      %p183 = pneg %p122
      %s184 = smul.u32 32, %s15
      %p185 = scmp.lt.s32.totalorder %s184, 63
      %s186 = scalar_select %p185, %s184, 63
      %s187 = smul.addr %s186, 8
      %s188 = scalar_lea.vmem %s4, %s187
      %s189 = smul.u32 32, %s15
      %p190 = scmp.lt.s32.totalorder %s189, 63
      %s191 = scalar_select %p190, %s189, 63
      %s192 = smul.addr %s191, 4
      %s193 = scalar_lea.vmem %s0, %s192
      %s194 = smul.u32 32, %s15
      %s195 = smul.u32 32, %s15
      %p196 = scmp.lt.s32.totalorder %s195, 63
      %s197 = scalar_select %p196, %s195, 63
      %s198 = smul.addr %s197, 8
      %s199 = scalar_lea.vmem %s4, %s198
      %s200 = smul.u32 32, %s15
      %v202 = vld [vmem:[%s193] sm:$0xf]
      %v203 = vld [vmem:[%s193 + $0x4] sm:$0xf]
      %v204 = vld [vmem:[%s193 + $0x8] sm:$0xf]
      %v205 = vld [vmem:[%s193 + $0xc] sm:$0xf]
      %v206 = vld [vmem:[%s193 + $0x10] sm:$0xf]
      %v207 = vld [vmem:[%s193 + $0x14] sm:$0xf]
      %v208 = vld [vmem:[%s193 + $0x18] sm:$0xf]
      %v209 = vld [vmem:[%s193 + $0x1c] sm:$0xf]
      %v210 = vld [vmem:[%s193 + $0x20] sm:$0xf]
      %v211 = vld [vmem:[%s193 + $0x24] sm:$0xf]
      %v212 = vld [vmem:[%s193 + $0x28] sm:$0xf]
      %v213 = vld [vmem:[%s193 + $0x2c] sm:$0xf]
      %v214 = vld [vmem:[%s193 + $0x30] sm:$0xf]
      %v215 = vld [vmem:[%s193 + $0x34] sm:$0xf]
      %v216 = vld [vmem:[%s193 + $0x38] sm:$0xf]
      %v217 = vld [vmem:[%s193 + $0x3c] sm:$0xf]
      %v218 = vld [vmem:[%s193 + $0x40] sm:$0xf]
      %v219 = vld [vmem:[%s193 + $0x44] sm:$0xf]
      %v220 = vld [vmem:[%s193 + $0x48] sm:$0xf]
      %v221 = vld [vmem:[%s193 + $0x4c] sm:$0xf]
      %v222 = vld [vmem:[%s193 + $0x50] sm:$0xf]
      %v223 = vld [vmem:[%s193 + $0x54] sm:$0xf]
      %v224 = vld [vmem:[%s193 + $0x58] sm:$0xf]
      %v225 = vld [vmem:[%s193 + $0x5c] sm:$0xf]
      %v226 = vld [vmem:[%s193 + $0x60] sm:$0xf]
      %v227 = vld [vmem:[%s193 + $0x64] sm:$0xf]
      %v228 = vld [vmem:[%s193 + $0x68] sm:$0xf]
      %v229 = vld [vmem:[%s193 + $0x6c] sm:$0xf]
      %v230 = vld [vmem:[%s193 + $0x70] sm:$0xf]
      %v231 = vld [vmem:[%s193 + $0x74] sm:$0xf]
      %v232 = vld [vmem:[%s193 + $0x78] sm:$0xf]
      %v233 = vld [vmem:[%s193 + $0x7c] sm:$0xf]
      %v234 = vld [vmem:[%s1] sm:$0x3]
      %v267 = vunpack.c.l.b16 %v202
      %v268 = vunpack.c.l.b16 %v203
      %v269 = vunpack.c.l.b16 %v204
      %v270 = vunpack.c.l.b16 %v205
      %v271 = vunpack.c.l.b16 %v206
      %v272 = vunpack.c.l.b16 %v207
      %v273 = vunpack.c.l.b16 %v208
      %v274 = vunpack.c.l.b16 %v209
      %v275 = vunpack.c.l.b16 %v210
      %v276 = vunpack.c.l.b16 %v211
      %v277 = vunpack.c.l.b16 %v212
      %v278 = vunpack.c.l.b16 %v213
      %v279 = vunpack.c.l.b16 %v214
      %v280 = vunpack.c.l.b16 %v215
      %v281 = vunpack.c.l.b16 %v216
      %v282 = vunpack.c.l.b16 %v217
      %v283 = vunpack.c.l.b16 %v218
      %v284 = vunpack.c.l.b16 %v219
      %v285 = vunpack.c.l.b16 %v220
      %v286 = vunpack.c.l.b16 %v221
      %v287 = vunpack.c.l.b16 %v222
      %v288 = vunpack.c.l.b16 %v223
      %v289 = vunpack.c.l.b16 %v224
      %v290 = vunpack.c.l.b16 %v225
      %v291 = vunpack.c.l.b16 %v226
      %v292 = vunpack.c.l.b16 %v227
      %v293 = vunpack.c.l.b16 %v228
      %v294 = vunpack.c.l.b16 %v229
      %v295 = vunpack.c.l.b16 %v230
      %v296 = vunpack.c.l.b16 %v231
      %v297 = vunpack.c.l.b16 %v232
      %v298 = vunpack.c.l.b16 %v233
      %v299 = vpack.c.b16 %v268, %v267
      %v300 = vpack.c.b16 %v270, %v269
      %v301 = vpack.c.b16 %v272, %v271
      %v302 = vpack.c.b16 %v274, %v273
      %v303 = vpack.c.b16 %v276, %v275
      %v304 = vpack.c.b16 %v278, %v277
      %v305 = vpack.c.b16 %v280, %v279
      %v306 = vpack.c.b16 %v282, %v281
      %v307 = vpack.c.b16 %v284, %v283
      %v308 = vpack.c.b16 %v286, %v285
      %v309 = vpack.c.b16 %v288, %v287
      %v310 = vpack.c.b16 %v290, %v289
      %v311 = vpack.c.b16 %v292, %v291
      %v312 = vpack.c.b16 %v294, %v293
      %v313 = vpack.c.b16 %v296, %v295
      %v314 = vpack.c.b16 %v298, %v297
      %vm315 = vcmask 31744
      %v317 = vsel %vm315, %v299, 0
      %v320 = vsel %vm315, %v300, 0
      %v323 = vsel %vm315, %v301, 0
      %v326 = vsel %vm315, %v302, 0
      %v329 = vsel %vm315, %v303, 0
      %v332 = vsel %vm315, %v304, 0
      %v335 = vsel %vm315, %v305, 0
      %v338 = vsel %vm315, %v306, 0
      %v341 = vsel %vm315, %v307, 0
      %v344 = vsel %vm315, %v308, 0
      %v347 = vsel %vm315, %v309, 0
      %v350 = vsel %vm315, %v310, 0
      %v353 = vsel %vm315, %v311, 0
      %v356 = vsel %vm315, %v312, 0
      %v359 = vsel %vm315, %v313, 0
      %v362 = vsel %vm315, %v314, 0
      %vm364 = vcmask 1041408
      %v366 = vsel %vm364, %v234, 0
      %368 = vmatpush.bf16.msra.mxu0 0
      %369 = vmatpush.bf16.msra.mxu0 0
      %370 = vmatpush.bf16.msra.mxu0 0
      %371 = vmatpush.bf16.msra.mxu0 0
      %372 = vmatpush.bf16.msra.mxu0 0
      %373 = vmatpush.bf16.msra.mxu0 0
      %374 = vmatpush.bf16.msra.mxu0 0
      %375 = vmatpush.bf16.msra.mxu0 %v366
      %376 = vmatmul.bf16.gmra.mxu0 %v317
      %v377 = vpop.f32.mrf.mxu0
      %v378 = vadd.f32 0.0, %v377
      %v379 = vpop.f32.mrf.mxu0
      %v380 = vadd.f32 0.0, %v379
      %381 = vmatmul.bf16.gmra.mxu0 %v320
      %v382 = vpop.f32.mrf.mxu0
      %v383 = vadd.f32 0.0, %v382
      %v384 = vpop.f32.mrf.mxu0
      %v385 = vadd.f32 0.0, %v384
      %386 = vmatmul.bf16.gmra.mxu0 %v323
      %v387 = vpop.f32.mrf.mxu0
      %v388 = vadd.f32 0.0, %v387
      %v389 = vpop.f32.mrf.mxu0
      %v390 = vadd.f32 0.0, %v389
      %391 = vmatmul.bf16.gmra.mxu0 %v326
      %v392 = vpop.f32.mrf.mxu0
      %v393 = vadd.f32 0.0, %v392
      %v394 = vpop.f32.mrf.mxu0
      %v395 = vadd.f32 0.0, %v394
      %396 = vmatmul.bf16.gmra.mxu0 %v329
      %v397 = vpop.f32.mrf.mxu0
      %v398 = vadd.f32 0.0, %v397
      %v399 = vpop.f32.mrf.mxu0
      %v400 = vadd.f32 0.0, %v399
      %401 = vmatmul.bf16.gmra.mxu0 %v332
      %v402 = vpop.f32.mrf.mxu0
      %v403 = vadd.f32 0.0, %v402
      %v404 = vpop.f32.mrf.mxu0
      %v405 = vadd.f32 0.0, %v404
      %406 = vmatmul.bf16.gmra.mxu0 %v335
      %v407 = vpop.f32.mrf.mxu0
      %v408 = vadd.f32 0.0, %v407
      %v409 = vpop.f32.mrf.mxu0
      %v410 = vadd.f32 0.0, %v409
      %411 = vmatmul.bf16.gmra.mxu0 %v338
      %v412 = vpop.f32.mrf.mxu0
      %v413 = vadd.f32 0.0, %v412
      %v414 = vpop.f32.mrf.mxu0
      %v415 = vadd.f32 0.0, %v414
      %416 = vmatmul.bf16.gmra.mxu0 %v341
      %v417 = vpop.f32.mrf.mxu0
      %v418 = vadd.f32 0.0, %v417
      %v419 = vpop.f32.mrf.mxu0
      %v420 = vadd.f32 0.0, %v419
      %421 = vmatmul.bf16.gmra.mxu0 %v344
      %v422 = vpop.f32.mrf.mxu0
      %v423 = vadd.f32 0.0, %v422
      %v424 = vpop.f32.mrf.mxu0
      %v425 = vadd.f32 0.0, %v424
      %426 = vmatmul.bf16.gmra.mxu0 %v347
      %v427 = vpop.f32.mrf.mxu0
      %v428 = vadd.f32 0.0, %v427
      %v429 = vpop.f32.mrf.mxu0
      %v430 = vadd.f32 0.0, %v429
      %431 = vmatmul.bf16.gmra.mxu0 %v350
      %v432 = vpop.f32.mrf.mxu0
      %v433 = vadd.f32 0.0, %v432
      %v434 = vpop.f32.mrf.mxu0
      %v435 = vadd.f32 0.0, %v434
      %436 = vmatmul.bf16.gmra.mxu0 %v353
      %v437 = vpop.f32.mrf.mxu0
      %v438 = vadd.f32 0.0, %v437
      %v439 = vpop.f32.mrf.mxu0
      %v440 = vadd.f32 0.0, %v439
      %441 = vmatmul.bf16.gmra.mxu0 %v356
      %v442 = vpop.f32.mrf.mxu0
      %v443 = vadd.f32 0.0, %v442
      %v444 = vpop.f32.mrf.mxu0
      %v445 = vadd.f32 0.0, %v444
      %446 = vmatmul.bf16.gmra.mxu0 %v359
      %v447 = vpop.f32.mrf.mxu0
      %v448 = vadd.f32 0.0, %v447
      %v449 = vpop.f32.mrf.mxu0
      %v450 = vadd.f32 0.0, %v449
      %451 = vmatmul.bf16.gmra.mxu0 %v362
      %v452 = vpop.f32.mrf.mxu0
      %v453 = vadd.f32 0.0, %v452
      %v454 = vpop.f32.mrf.mxu0
      %v455 = vadd.f32 0.0, %v454
      %456 = vdwg.mxu0
      %v457 = vld [vmem:[%s2] sm:$0x1]
      %v459 = vperm.slane %v457, 0
      %v461 = vmul.f32 %v378, %v459
      %v462 = vmul.f32 %v380, %v459
      %v463 = vmul.f32 %v383, %v459
      %v464 = vmul.f32 %v385, %v459
      %v465 = vmul.f32 %v388, %v459
      %v466 = vmul.f32 %v390, %v459
      %v467 = vmul.f32 %v393, %v459
      %v468 = vmul.f32 %v395, %v459
      %v469 = vmul.f32 %v398, %v459
      %v470 = vmul.f32 %v400, %v459
      %v471 = vmul.f32 %v403, %v459
      %v472 = vmul.f32 %v405, %v459
      %v473 = vmul.f32 %v408, %v459
      %v474 = vmul.f32 %v410, %v459
      %v475 = vmul.f32 %v413, %v459
      %v476 = vmul.f32 %v415, %v459
      %v477 = vmul.f32 %v418, %v459
      %v478 = vmul.f32 %v420, %v459
      %v479 = vmul.f32 %v423, %v459
      %v480 = vmul.f32 %v425, %v459
      %v481 = vmul.f32 %v428, %v459
      %v482 = vmul.f32 %v430, %v459
      %v483 = vmul.f32 %v433, %v459
      %v484 = vmul.f32 %v435, %v459
      %v485 = vmul.f32 %v438, %v459
      %v486 = vmul.f32 %v440, %v459
      %v487 = vmul.f32 %v443, %v459
      %v488 = vmul.f32 %v445, %v459
      %v489 = vmul.f32 %v448, %v459
      %v490 = vmul.f32 %v450, %v459
      %v491 = vmul.f32 %v453, %v459
      %v492 = vmul.f32 %v455, %v459
      %v493 = vld [vmem:[%s3] sm:$0x1]
      %v495 = vperm.slane %v493, 0
      %v497 = vadd.f32 %v461, %v495
      %v498 = vadd.f32 %v462, %v495
      %v499 = vadd.f32 %v463, %v495
      %v500 = vadd.f32 %v464, %v495
      %v501 = vadd.f32 %v465, %v495
      %v502 = vadd.f32 %v466, %v495
      %v503 = vadd.f32 %v467, %v495
      %v504 = vadd.f32 %v468, %v495
      %v505 = vadd.f32 %v469, %v495
      %v506 = vadd.f32 %v470, %v495
      %v507 = vadd.f32 %v471, %v495
      %v508 = vadd.f32 %v472, %v495
      %v509 = vadd.f32 %v473, %v495
      %v510 = vadd.f32 %v474, %v495
      %v511 = vadd.f32 %v475, %v495
      %v512 = vadd.f32 %v476, %v495
      %v513 = vadd.f32 %v477, %v495
      %v514 = vadd.f32 %v478, %v495
      %v515 = vadd.f32 %v479, %v495
      %v516 = vadd.f32 %v480, %v495
      %v517 = vadd.f32 %v481, %v495
      %v518 = vadd.f32 %v482, %v495
      %v519 = vadd.f32 %v483, %v495
      %v520 = vadd.f32 %v484, %v495
      %v521 = vadd.f32 %v485, %v495
      %v522 = vadd.f32 %v486, %v495
      %v523 = vadd.f32 %v487, %v495
      %v524 = vadd.f32 %v488, %v495
      %v525 = vadd.f32 %v489, %v495
      %v526 = vadd.f32 %v490, %v495
      %v527 = vadd.f32 %v491, %v495
      %v528 = vadd.f32 %v492, %v495
      %529 = vst.msk [vmem:[%s199] sm:$0xff] %vm315, %v497
      %530 = vst.msk [vmem:[%s199 + $0x8] sm:$0xff] %vm315, %v498
      %531 = vst.msk [vmem:[%s199 + $0x10] sm:$0xff] %vm315, %v499
      %532 = vst.msk [vmem:[%s199 + $0x18] sm:$0xff] %vm315, %v500
      %533 = vst.msk [vmem:[%s199 + $0x20] sm:$0xff] %vm315, %v501
      %534 = vst.msk [vmem:[%s199 + $0x28] sm:$0xff] %vm315, %v502
      %535 = vst.msk [vmem:[%s199 + $0x30] sm:$0xff] %vm315, %v503
      %536 = vst.msk [vmem:[%s199 + $0x38] sm:$0xff] %vm315, %v504
      %537 = vst.msk [vmem:[%s199 + $0x40] sm:$0xff] %vm315, %v505
      %538 = vst.msk [vmem:[%s199 + $0x48] sm:$0xff] %vm315, %v506
      %539 = vst.msk [vmem:[%s199 + $0x50] sm:$0xff] %vm315, %v507
      %540 = vst.msk [vmem:[%s199 + $0x58] sm:$0xff] %vm315, %v508
      %541 = vst.msk [vmem:[%s199 + $0x60] sm:$0xff] %vm315, %v509
      %542 = vst.msk [vmem:[%s199 + $0x68] sm:$0xff] %vm315, %v510
      %543 = vst.msk [vmem:[%s199 + $0x70] sm:$0xff] %vm315, %v511
      %544 = vst.msk [vmem:[%s199 + $0x78] sm:$0xff] %vm315, %v512
      %545 = vst.msk [vmem:[%s199 + $0x80] sm:$0xff] %vm315, %v513
      %546 = vst.msk [vmem:[%s199 + $0x88] sm:$0xff] %vm315, %v514
      %547 = vst.msk [vmem:[%s199 + $0x90] sm:$0xff] %vm315, %v515
      %548 = vst.msk [vmem:[%s199 + $0x98] sm:$0xff] %vm315, %v516
      %549 = vst.msk [vmem:[%s199 + $0xa0] sm:$0xff] %vm315, %v517
      %550 = vst.msk [vmem:[%s199 + $0xa8] sm:$0xff] %vm315, %v518
      %551 = vst.msk [vmem:[%s199 + $0xb0] sm:$0xff] %vm315, %v519
      %552 = vst.msk [vmem:[%s199 + $0xb8] sm:$0xff] %vm315, %v520
      %553 = vst.msk [vmem:[%s199 + $0xc0] sm:$0xff] %vm315, %v521
      %554 = vst.msk [vmem:[%s199 + $0xc8] sm:$0xff] %vm315, %v522
      %555 = vst.msk [vmem:[%s199 + $0xd0] sm:$0xff] %vm315, %v523
      %556 = vst.msk [vmem:[%s199 + $0xd8] sm:$0xff] %vm315, %v524
      %557 = vst.msk [vmem:[%s199 + $0xe0] sm:$0xff] %vm315, %v525
      %558 = vst.msk [vmem:[%s199 + $0xe8] sm:$0xff] %vm315, %v526
      %559 = vst.msk [vmem:[%s199 + $0xf0] sm:$0xff] %vm315, %v527
      %560 = vst.msk [vmem:[%s199 + $0xf8] sm:$0xff] %vm315, %v528
      %s561 = smul.u32 32, %s15
      %p562 = scmp.lt.s32.totalorder %s561, 63
      %s563 = scalar_select %p562, %s561, 63
      %s564 = smul.addr %s563, 8
      %s565 = scalar_lea.vmem %s4, %s564
      // Predicated region
      $region37: #{us_downsample_block_forward.45} parent=35 // pred_check
        %p566 = pneg %p122
      $region38: #{us_downsample_block_forward.45} parent=35 // pred_check_branch
        %568 = sbr.rel (%p566) target = $region40
      $region39: #{us_downsample_block_forward.45} parent=35 // pred_region
        %s569 = smul.u32 32, %s15
      $region40: #{us_downsample_block_forward.45} parent=35 // pred_fallthru
        _
    $region36: #{us_downsample_block_forward.45} parent=5 // pred_fallthru
      _
    %p570 = scmp.le.s32.totalorder 2, %s10
    // Predicated region
    $region41: #{us_downsample_block_forward.45} parent=5 // pred_check
      %p571 = pneg %p570
    $region42: #{us_downsample_block_forward.45} parent=5 // pred_check_branch
      %573 = sbr.rel (%p571) target = $region44
    $region43: #{us_downsample_block_forward.45} parent=5 // pred_region
      %s574 = ssub.s32 %s10, 2
      // Predicated region
      $region45: #{us_downsample_block_forward.45} parent=43 // pred_check
        %p575 = pneg %p128
      $region46: #{us_downsample_block_forward.45} parent=43 // pred_check_branch
        %577 = sbr.rel (%p575) target = $region48
      $region47: #{us_downsample_block_forward.45} parent=43 // pred_region
        %s578 = smul.u32 32, %s16
        %p579 = scmp.lt.s32.totalorder %s578, 63
        %s580 = scalar_select %p579, %s578, 63
        %s581 = smul.addr %s580, 8
        %s582 = scalar_lea.vmem %s4, %s581
      $region48: #{us_downsample_block_forward.45} parent=43 // pred_fallthru
        _
    $region44: #{us_downsample_block_forward.45} parent=5 // pred_fallthru
      _
  $region6: #{us_downsample_block_forward.45} parent=0 // loop_footer
    %s14 = sadd.s32 1, %s10
  $region7: #{us_downsample_block_forward.45} parent=0 // loop_footer_branch
    %9 = sbr.rel target = $region3
  $region8: #{us_downsample_block_forward.45} parent=0 // loop_exit
    _

// kernel: us_downsample_block_forward.47
$region0: #{us_downsample_block_forward.47}
  #allocation0 [shape = 'u32[]', space=smem, size = 0x4, offset = 0x4, fixed_abs, tag = 'smem constant byte address 0x4 - core index']
  #allocation1 [shape = 'u32[72,128]{1,0:T(1,128)}', space=vmem, size = 0x9000, scoped, tag = 'internal scratch']
  %s0 = inlined_call_operand.vmem [shape: bf16[512,36], index: 0, kind: input, shape index: {}]
  %s1 = inlined_call_operand.vmem [shape: bf16[36,4], index: 1, kind: input, shape index: {}]
  %s2 = inlined_call_operand.vmem [shape: f32[1,4], index: 2, kind: input, shape index: {}]
  %s3 = inlined_call_operand.vmem [shape: f32[1,4], index: 3, kind: input, shape index: {}]
  %s4 = inlined_call_operand.vmem [shape: f32[512,4], index: 4, kind: input, shape index: {}]
  %s5 = inlined_call_operand.vmem [shape: f32[1,4], index: 5, kind: input, shape index: {}]
  %s6 = inlined_call_operand.vmem [shape: f32[1,4], index: 6, kind: input, shape index: {}]
  %s7 = inlined_call_operand.vmem [shape: f32[512,4], index: 7, kind: output, shape index: {}]
  %s8 = sld [smem:[#allocation0]]
  $region61: #{us_downsample_block_forward.47} parent=0
    _
  %s10 = ssub.s32 1, %s8
  %s11 = scalar_select 0, %s10, %s8
  loop: start=0, step=1, limit=4
  $region2: #{us_downsample_block_forward.47} parent=0 // loop_pre_header
    _
  $region3: #{us_downsample_block_forward.47} parent=0 // loop_header
    %s13 = sphi 0, %s17
    %p14 = scmp.ge.s32.totalorder %s13, 4
    %s23 = sphi 0, %s25
    %s26 = sphi 0, %s23
    %s27 = sphi 0, %s26
    %s43 = sphi 0, %s27
    %s47 = sphi 0, %s47
    %s49 = sphi 0, %s47
    %s50 = sphi 0, %s49
    %s64 = sphi 0, %s50
    %s68 = sphi 0, %s68
    %s70 = sphi 0, %s68
    %s71 = sphi 0, %s70
    %s85 = sphi 0, %s71
    %s89 = sphi 0, %s89
    %s91 = sphi 0, %s89
    %s92 = sphi 0, %s91
    %s106 = sphi 0, %s92
    %s112 = sphi 0, %s114
    %s115 = sphi 0, %s112
    %s116 = sphi 0, %s115
    %s132 = sphi 0, %s116
    %s136 = sphi 0, %s136
    %s138 = sphi 0, %s136
    %s139 = sphi 0, %s138
    %s153 = sphi 0, %s139
    %s157 = sphi 0, %s157
    %s159 = sphi 0, %s157
    %s160 = sphi 0, %s159
    %s174 = sphi 0, %s160
    %s180 = sphi 0, %s182
    %s183 = sphi 0, %s180
    %s184 = sphi 0, %s183
    %s200 = sphi 0, %s184
  $region4: #{us_downsample_block_forward.47} parent=0 // loop_header_branch
    %16 = sbr.rel (%p14) target = $region8
  $region5: #{us_downsample_block_forward.47} parent=0 // loop_body
    %s18 = ssub.s32 %s13, 1
    %s19 = ssub.s32 %s13, 2
    %s20 = sadd.s32 %s13, 1
    %s21 = ssub.s32 %s13, %s20
    %p22 = scmp.eq.s32.totalorder %s21, 0
    %s24 = sadd.s32 %s23, 1
    %s25 = scalar_select %p22, %s23, %s24
    %p28 = pneg %p22
    %p29 = scmp.eq.s32.totalorder %s13, 1
    %p30 = por %p28, %p29
    %p31 = scmp.ne.s32.totalorder %s23, %s26
    %p32 = scmp.eq.s32.totalorder %s13, 0
    %p33 = por %p31, %p32
    %p34 = scmp.ne.s32.totalorder %s23, %s26
    %p35 = scmp.eq.s32.totalorder %s18, 1
    %p36 = por %p34, %p35
    %p37 = scmp.ne.s32.totalorder %s26, %s27
    %p38 = scmp.eq.s32.totalorder %s18, 0
    %p39 = por %p37, %p38
    %p40 = scmp.ne.s32.totalorder %s26, %s27
    %p41 = scmp.eq.s32.totalorder %s19, 1
    %p42 = por %p40, %p41
    %p44 = scmp.ne.s32.totalorder %s27, %s43
    %p45 = scmp.eq.s32.totalorder %s19, 0
    %p46 = por %p44, %p45
    %s48 = sadd.s32 %s47, 1
    %p51 = scmp.eq.s32.totalorder %s13, 1
    %p52 = scmp.ne.s32.totalorder %s47, %s49
    %p53 = scmp.eq.s32.totalorder %s13, 0
    %p54 = por %p52, %p53
    %p55 = scmp.ne.s32.totalorder %s47, %s49
    %p56 = scmp.eq.s32.totalorder %s18, 1
    %p57 = por %p55, %p56
    %p58 = scmp.ne.s32.totalorder %s49, %s50
    %p59 = scmp.eq.s32.totalorder %s18, 0
    %p60 = por %p58, %p59
    %p61 = scmp.ne.s32.totalorder %s49, %s50
    %p62 = scmp.eq.s32.totalorder %s19, 1
    %p63 = por %p61, %p62
    %p65 = scmp.ne.s32.totalorder %s50, %s64
    %p66 = scmp.eq.s32.totalorder %s19, 0
    %p67 = por %p65, %p66
    %s69 = sadd.s32 %s68, 1
    %p72 = scmp.eq.s32.totalorder %s13, 1
    %p73 = scmp.ne.s32.totalorder %s68, %s70
    %p74 = scmp.eq.s32.totalorder %s13, 0
    %p75 = por %p73, %p74
    %p76 = scmp.ne.s32.totalorder %s68, %s70
    %p77 = scmp.eq.s32.totalorder %s18, 1
    %p78 = por %p76, %p77
    %p79 = scmp.ne.s32.totalorder %s70, %s71
    %p80 = scmp.eq.s32.totalorder %s18, 0
    %p81 = por %p79, %p80
    %p82 = scmp.ne.s32.totalorder %s70, %s71
    %p83 = scmp.eq.s32.totalorder %s19, 1
    %p84 = por %p82, %p83
    %p86 = scmp.ne.s32.totalorder %s71, %s85
    %p87 = scmp.eq.s32.totalorder %s19, 0
    %p88 = por %p86, %p87
    %s90 = sadd.s32 %s89, 1
    %p93 = scmp.eq.s32.totalorder %s13, 1
    %p94 = scmp.ne.s32.totalorder %s89, %s91
    %p95 = scmp.eq.s32.totalorder %s13, 0
    %p96 = por %p94, %p95
    %p97 = scmp.ne.s32.totalorder %s89, %s91
    %p98 = scmp.eq.s32.totalorder %s18, 1
    %p99 = por %p97, %p98
    %p100 = scmp.ne.s32.totalorder %s91, %s92
    %p101 = scmp.eq.s32.totalorder %s18, 0
    %p102 = por %p100, %p101
    %p103 = scmp.ne.s32.totalorder %s91, %s92
    %p104 = scmp.eq.s32.totalorder %s19, 1
    %p105 = por %p103, %p104
    %p107 = scmp.ne.s32.totalorder %s92, %s106
    %p108 = scmp.eq.s32.totalorder %s19, 0
    %p109 = por %p107, %p108
    %s110 = ssub.s32 %s13, %s20
    %p111 = scmp.eq.s32.totalorder %s110, 0
    %s113 = sadd.s32 %s112, 1
    %s114 = scalar_select %p111, %s112, %s113
    %p117 = pneg %p111
    %p118 = scmp.eq.s32.totalorder %s13, 1
    %p119 = por %p117, %p118
    %p120 = scmp.ne.s32.totalorder %s112, %s115
    %p121 = scmp.eq.s32.totalorder %s13, 0
    %p122 = por %p120, %p121
    %p123 = scmp.ne.s32.totalorder %s112, %s115
    %p124 = scmp.eq.s32.totalorder %s18, 1
    %p125 = por %p123, %p124
    %p126 = scmp.ne.s32.totalorder %s115, %s116
    %p127 = scmp.eq.s32.totalorder %s18, 0
    %p128 = por %p126, %p127
    %p129 = scmp.ne.s32.totalorder %s115, %s116
    %p130 = scmp.eq.s32.totalorder %s19, 1
    %p131 = por %p129, %p130
    %p133 = scmp.ne.s32.totalorder %s116, %s132
    %p134 = scmp.eq.s32.totalorder %s19, 0
    %p135 = por %p133, %p134
    %s137 = sadd.s32 %s136, 1
    %p140 = scmp.eq.s32.totalorder %s13, 1
    %p141 = scmp.ne.s32.totalorder %s136, %s138
    %p142 = scmp.eq.s32.totalorder %s13, 0
    %p143 = por %p141, %p142
    %p144 = scmp.ne.s32.totalorder %s136, %s138
    %p145 = scmp.eq.s32.totalorder %s18, 1
    %p146 = por %p144, %p145
    %p147 = scmp.ne.s32.totalorder %s138, %s139
    %p148 = scmp.eq.s32.totalorder %s18, 0
    %p149 = por %p147, %p148
    %p150 = scmp.ne.s32.totalorder %s138, %s139
    %p151 = scmp.eq.s32.totalorder %s19, 1
    %p152 = por %p150, %p151
    %p154 = scmp.ne.s32.totalorder %s139, %s153
    %p155 = scmp.eq.s32.totalorder %s19, 0
    %p156 = por %p154, %p155
    %s158 = sadd.s32 %s157, 1
    %p161 = scmp.eq.s32.totalorder %s13, 1
    %p162 = scmp.ne.s32.totalorder %s157, %s159
    %p163 = scmp.eq.s32.totalorder %s13, 0
    %p164 = por %p162, %p163
    %p165 = scmp.ne.s32.totalorder %s157, %s159
    %p166 = scmp.eq.s32.totalorder %s18, 1
    %p167 = por %p165, %p166
    %p168 = scmp.ne.s32.totalorder %s159, %s160
    %p169 = scmp.eq.s32.totalorder %s18, 0
    %p170 = por %p168, %p169
    %p171 = scmp.ne.s32.totalorder %s159, %s160
    %p172 = scmp.eq.s32.totalorder %s19, 1
    %p173 = por %p171, %p172
    %p175 = scmp.ne.s32.totalorder %s160, %s174
    %p176 = scmp.eq.s32.totalorder %s19, 0
    %p177 = por %p175, %p176
    %s178 = ssub.s32 %s13, %s20
    %p179 = scmp.eq.s32.totalorder %s178, 0
    %s181 = sadd.s32 %s180, 1
    %s182 = scalar_select %p179, %s180, %s181
    %p185 = pneg %p179
    %p186 = scmp.eq.s32.totalorder %s13, 1
    %p187 = por %p185, %p186
    %p188 = scmp.ne.s32.totalorder %s180, %s183
    %p189 = scmp.eq.s32.totalorder %s13, 0
    %p190 = por %p188, %p189
    %p191 = scmp.ne.s32.totalorder %s180, %s183
    %p192 = scmp.eq.s32.totalorder %s18, 1
    %p193 = por %p191, %p192
    %p194 = scmp.ne.s32.totalorder %s183, %s184
    %p195 = scmp.eq.s32.totalorder %s18, 0
    %p196 = por %p194, %p195
    %p197 = scmp.ne.s32.totalorder %s183, %s184
    %p198 = scmp.eq.s32.totalorder %s19, 1
    %p199 = por %p197, %p198
    %p201 = scmp.ne.s32.totalorder %s184, %s200
    %p202 = scmp.eq.s32.totalorder %s19, 0
    %p203 = por %p201, %p202
    %p204 = scmp.le.s32.totalorder 1, %s13
    %p205 = scmp.lt.s32.totalorder %s13, 3
    %p206 = pnand %p204, %p205
    %p207 = pneg %p206
    // Predicated region
    $region9: #{us_downsample_block_forward.47} parent=5 // pred_check
      _
    $region10: #{us_downsample_block_forward.47} parent=5 // pred_check_branch
      %209 = sbr.rel (%p206) target = $region12
    $region11: #{us_downsample_block_forward.47} parent=5 // pred_region
      %s210 = ssub.s32 %s13, 1
      // Predicated region
      $region13: #{us_downsample_block_forward.47} parent=11 // pred_check
        %p211 = pneg %p60
      $region14: #{us_downsample_block_forward.47} parent=11 // pred_check_branch
        %213 = sbr.rel (%p211) target = $region16
      $region15: #{us_downsample_block_forward.47} parent=11 // pred_region
        _
      $region16: #{us_downsample_block_forward.47} parent=11 // pred_fallthru
        _
      // Predicated region
      $region17: #{us_downsample_block_forward.47} parent=11 // pred_check
        %p214 = pneg %p81
      $region18: #{us_downsample_block_forward.47} parent=11 // pred_check_branch
        %216 = sbr.rel (%p214) target = $region20
      $region19: #{us_downsample_block_forward.47} parent=11 // pred_region
        _
      $region20: #{us_downsample_block_forward.47} parent=11 // pred_fallthru
        _
      // Predicated region
      $region21: #{us_downsample_block_forward.47} parent=11 // pred_check
        %p217 = pneg %p102
      $region22: #{us_downsample_block_forward.47} parent=11 // pred_check_branch
        %219 = sbr.rel (%p217) target = $region24
      $region23: #{us_downsample_block_forward.47} parent=11 // pred_region
        _
      $region24: #{us_downsample_block_forward.47} parent=11 // pred_fallthru
        _
      // Predicated region
      $region25: #{us_downsample_block_forward.47} parent=11 // pred_check
        %p220 = pneg %p149
      $region26: #{us_downsample_block_forward.47} parent=11 // pred_check_branch
        %222 = sbr.rel (%p220) target = $region28
      $region27: #{us_downsample_block_forward.47} parent=11 // pred_region
        _
      $region28: #{us_downsample_block_forward.47} parent=11 // pred_fallthru
        _
      // Predicated region
      $region29: #{us_downsample_block_forward.47} parent=11 // pred_check
        %p223 = pneg %p170
      $region30: #{us_downsample_block_forward.47} parent=11 // pred_check_branch
        %225 = sbr.rel (%p223) target = $region32
      $region31: #{us_downsample_block_forward.47} parent=11 // pred_region
        _
      $region32: #{us_downsample_block_forward.47} parent=11 // pred_fallthru
        _
    $region12: #{us_downsample_block_forward.47} parent=5 // pred_fallthru
      _
    %p226 = scmp.lt.s32.totalorder %s13, 2
    // Predicated region
    $region33: #{us_downsample_block_forward.47} parent=5 // pred_check
      %p227 = pneg %p226
    $region34: #{us_downsample_block_forward.47} parent=5 // pred_check_branch
      %229 = sbr.rel (%p227) target = $region36
    $region35: #{us_downsample_block_forward.47} parent=5 // pred_region
      // Predicated region
      $region37: #{us_downsample_block_forward.47} parent=35 // pred_check
        %p230 = pneg %p33
      $region38: #{us_downsample_block_forward.47} parent=35 // pred_check_branch
        %232 = sbr.rel (%p230) target = $region40
      $region39: #{us_downsample_block_forward.47} parent=35 // pred_region
        %s233 = smul.u32 32, %s13
        %p234 = scmp.lt.s32.totalorder %s233, 63
        %s235 = scalar_select %p234, %s233, 63
        %s236 = smul.addr %s235, 4
        %s237 = scalar_lea.vmem %s0, %s236
        %s238 = smul.u32 32, %s13
      $region40: #{us_downsample_block_forward.47} parent=35 // pred_fallthru
        _
      // Predicated region
      $region41: #{us_downsample_block_forward.47} parent=35 // pred_check
        %p239 = pneg %p122
      $region42: #{us_downsample_block_forward.47} parent=35 // pred_check_branch
        %241 = sbr.rel (%p239) target = $region44
      $region43: #{us_downsample_block_forward.47} parent=35 // pred_region
        %s242 = smul.u32 32, %s13
        %p243 = scmp.lt.s32.totalorder %s242, 63
        %s244 = scalar_select %p243, %s242, 63
        %s245 = smul.addr %s244, 8
        %s246 = scalar_lea.vmem %s4, %s245
        %s247 = smul.u32 32, %s13
      $region44: #{us_downsample_block_forward.47} parent=35 // pred_fallthru
        _
    $region36: #{us_downsample_block_forward.47} parent=5 // pred_fallthru
      _
    %p248 = scmp.le.s32.totalorder 1, %s13
    %p249 = scmp.lt.s32.totalorder %s13, 3
    %p250 = pnand %p248, %p249
    %p251 = pneg %p250
    // Predicated region
    $region45: #{us_downsample_block_forward.47} parent=5 // pred_check
      _
    $region46: #{us_downsample_block_forward.47} parent=5 // pred_check_branch
      %253 = sbr.rel (%p250) target = $region48
    $region47: #{us_downsample_block_forward.47} parent=5 // pred_region
      %s254 = ssub.s32 %s13, 1
      %s255 = smul.u32 32, %s18
      %p256 = scmp.lt.s32.totalorder %s255, 63
      %s257 = scalar_select %p256, %s255, 63
      %s258 = smul.addr %s257, 4
      %s259 = scalar_lea.vmem %s0, %s258
      %p260 = pneg %p39
      %p261 = pneg %p36
      %p262 = pneg %p60
      %p263 = pneg %p57
      %p264 = pneg %p81
      %p265 = pneg %p78
      %p266 = pneg %p102
      %p267 = pneg %p99
      %s268 = smul.u32 32, %s18
      %p269 = scmp.lt.s32.totalorder %s268, 63
      %s270 = scalar_select %p269, %s268, 63
      %s271 = smul.addr %s270, 8
      %s272 = scalar_lea.vmem %s4, %s271
      %p273 = pneg %p128
      %p274 = pneg %p125
      %p275 = pneg %p149
      %p276 = pneg %p146
      %p277 = pneg %p170
      %p278 = pneg %p167
      %p279 = pneg %p196
      %p280 = pneg %p193
      %s281 = smul.u32 32, %s18
      %p282 = scmp.lt.s32.totalorder %s281, 63
      %s283 = scalar_select %p282, %s281, 63
      %s284 = smul.addr %s283, 8
      %s285 = scalar_lea.vmem %s7, %s284
      %s286 = smul.u32 32, %s18
      %p287 = scmp.lt.s32.totalorder %s286, 63
      %s288 = scalar_select %p287, %s286, 63
      %s289 = smul.addr %s288, 4
      %s290 = scalar_lea.vmem %s0, %s289
      %s291 = smul.u32 32, %s18
      %s292 = smul.u32 32, %s18
      %p293 = scmp.lt.s32.totalorder %s292, 63
      %s294 = scalar_select %p293, %s292, 63
      %s295 = smul.addr %s294, 8
      %s296 = scalar_lea.vmem %s4, %s295
      %s297 = smul.u32 32, %s18
      %s298 = smul.u32 32, %s18
      %p299 = scmp.lt.s32.totalorder %s298, 63
      %s300 = scalar_select %p299, %s298, 63
      %s301 = smul.addr %s300, 8
      %s302 = scalar_lea.vmem %s7, %s301
      %s303 = smul.u32 32, %s18
      %v305 = vld [vmem:[%s290] sm:$0xf]
      %v306 = vld [vmem:[%s290 + $0x4] sm:$0xf]
      %v307 = vld [vmem:[%s290 + $0x8] sm:$0xf]
      %v308 = vld [vmem:[%s290 + $0xc] sm:$0xf]
      %v309 = vld [vmem:[%s290 + $0x10] sm:$0xf]
      %v310 = vld [vmem:[%s290 + $0x14] sm:$0xf]
      %v311 = vld [vmem:[%s290 + $0x18] sm:$0xf]
      %v312 = vld [vmem:[%s290 + $0x1c] sm:$0xf]
      %v313 = vld [vmem:[%s290 + $0x20] sm:$0xf]
      %v314 = vld [vmem:[%s290 + $0x24] sm:$0xf]
      %v315 = vld [vmem:[%s290 + $0x28] sm:$0xf]
      %v316 = vld [vmem:[%s290 + $0x2c] sm:$0xf]
      %v317 = vld [vmem:[%s290 + $0x30] sm:$0xf]
      %v318 = vld [vmem:[%s290 + $0x34] sm:$0xf]
      %v319 = vld [vmem:[%s290 + $0x38] sm:$0xf]
      %v320 = vld [vmem:[%s290 + $0x3c] sm:$0xf]
      %v321 = vld [vmem:[%s290 + $0x40] sm:$0xf]
      %v322 = vld [vmem:[%s290 + $0x44] sm:$0xf]
      %v323 = vld [vmem:[%s290 + $0x48] sm:$0xf]
      %v324 = vld [vmem:[%s290 + $0x4c] sm:$0xf]
      %v325 = vld [vmem:[%s290 + $0x50] sm:$0xf]
      %v326 = vld [vmem:[%s290 + $0x54] sm:$0xf]
      %v327 = vld [vmem:[%s290 + $0x58] sm:$0xf]
      %v328 = vld [vmem:[%s290 + $0x5c] sm:$0xf]
      %v329 = vld [vmem:[%s290 + $0x60] sm:$0xf]
      %v330 = vld [vmem:[%s290 + $0x64] sm:$0xf]
      %v331 = vld [vmem:[%s290 + $0x68] sm:$0xf]
      %v332 = vld [vmem:[%s290 + $0x6c] sm:$0xf]
      %v333 = vld [vmem:[%s290 + $0x70] sm:$0xf]
      %v334 = vld [vmem:[%s290 + $0x74] sm:$0xf]
      %v335 = vld [vmem:[%s290 + $0x78] sm:$0xf]
      %v336 = vld [vmem:[%s290 + $0x7c] sm:$0xf]
      %v337 = vld [vmem:[%s1] sm:$0xf]
      %v338 = vld [vmem:[%s1 + $0x4] sm:$0xf]
      %v339 = vld [vmem:[%s1 + $0x8] sm:$0xf]
      %v340 = vld [vmem:[%s1 + $0xc] sm:$0xf]
      %v341 = vld [vmem:[%s1 + $0x10] sm:$0x3]
      %v374 = vunpack.c.l.b16 %v305
      %v375 = vunpack.c.l.b16 %v306
      %v376 = vunpack.c.l.b16 %v307
      %v377 = vunpack.c.l.b16 %v308
      %v378 = vunpack.c.l.b16 %v309
      %v379 = vunpack.c.l.b16 %v310
      %v380 = vunpack.c.l.b16 %v311
      %v381 = vunpack.c.l.b16 %v312
      %v382 = vunpack.c.l.b16 %v313
      %v383 = vunpack.c.l.b16 %v314
      %v384 = vunpack.c.l.b16 %v315
      %v385 = vunpack.c.l.b16 %v316
      %v386 = vunpack.c.l.b16 %v317
      %v387 = vunpack.c.l.b16 %v318
      %v388 = vunpack.c.l.b16 %v319
      %v389 = vunpack.c.l.b16 %v320
      %v390 = vunpack.c.l.b16 %v321
      %v391 = vunpack.c.l.b16 %v322
      %v392 = vunpack.c.l.b16 %v323
      %v393 = vunpack.c.l.b16 %v324
      %v394 = vunpack.c.l.b16 %v325
      %v395 = vunpack.c.l.b16 %v326
      %v396 = vunpack.c.l.b16 %v327
      %v397 = vunpack.c.l.b16 %v328
      %v398 = vunpack.c.l.b16 %v329
      %v399 = vunpack.c.l.b16 %v330
      %v400 = vunpack.c.l.b16 %v331
      %v401 = vunpack.c.l.b16 %v332
      %v402 = vunpack.c.l.b16 %v333
      %v403 = vunpack.c.l.b16 %v334
      %v404 = vunpack.c.l.b16 %v335
      %v405 = vunpack.c.l.b16 %v336
      %v406 = vpack.c.b16 %v375, %v374
      %v407 = vpack.c.b16 %v377, %v376
      %v408 = vpack.c.b16 %v379, %v378
      %v409 = vpack.c.b16 %v381, %v380
      %v410 = vpack.c.b16 %v383, %v382
      %v411 = vpack.c.b16 %v385, %v384
      %v412 = vpack.c.b16 %v387, %v386
      %v413 = vpack.c.b16 %v389, %v388
      %v414 = vpack.c.b16 %v391, %v390
      %v415 = vpack.c.b16 %v393, %v392
      %v416 = vpack.c.b16 %v395, %v394
      %v417 = vpack.c.b16 %v397, %v396
      %v418 = vpack.c.b16 %v399, %v398
      %v419 = vpack.c.b16 %v401, %v400
      %v420 = vpack.c.b16 %v403, %v402
      %v421 = vpack.c.b16 %v405, %v404
      %v427 = vunpack.c.l.b16 %v337
      %v428 = vunpack.c.l.b16 %v338
      %v429 = vunpack.c.l.b16 %v339
      %v430 = vunpack.c.l.b16 %v340
      %v431 = vunpack.c.l.b16 %v341
      %v432 = vpack.c.b16 %v428, %v427
      %v433 = vpack.c.b16 %v430, %v429
      %v434 = vpack.c.b16 %v431, %v431
      %vm437 = vcmask 293888
      %v439 = vsel %vm437, %v406, 0
      %v442 = vsel %vm437, %v407, 0
      %v445 = vsel %vm437, %v408, 0
      %v448 = vsel %vm437, %v409, 0
      %v451 = vsel %vm437, %v410, 0
      %v454 = vsel %vm437, %v411, 0
      %v457 = vsel %vm437, %v412, 0
      %v460 = vsel %vm437, %v413, 0
      %v463 = vsel %vm437, %v414, 0
      %v466 = vsel %vm437, %v415, 0
      %v469 = vsel %vm437, %v416, 0
      %v472 = vsel %vm437, %v417, 0
      %v475 = vsel %vm437, %v418, 0
      %v478 = vsel %vm437, %v419, 0
      %v481 = vsel %vm437, %v420, 0
      %v484 = vsel %vm437, %v421, 0
      %vm486 = vcmask 1041408
      %v488 = vsel %vm486, %v434, 0
      %490 = vmatpush.bf16.msra.mxu0 0
      %491 = vmatpush.bf16.msra.mxu0 0
      %492 = vmatpush.bf16.msra.mxu0 0
      %493 = vmatpush.bf16.msra.mxu0 0
      %494 = vmatpush.bf16.msra.mxu0 0
      %495 = vmatpush.bf16.msra.mxu0 %v488
      %496 = vmatpush.bf16.msra.mxu0 %v433
      %497 = vmatpush.bf16.msra.mxu0 %v432
      %498 = vmatmul.bf16.gmra.mxu0 %v439
      %v499 = vpop.f32.mrf.mxu0
      %v500 = vadd.f32 0.0, %v499
      %v501 = vpop.f32.mrf.mxu0
      %v502 = vadd.f32 0.0, %v501
      %503 = vmatmul.bf16.gmra.mxu0 %v442
      %v504 = vpop.f32.mrf.mxu0
      %v505 = vadd.f32 0.0, %v504
      %v506 = vpop.f32.mrf.mxu0
      %v507 = vadd.f32 0.0, %v506
      %508 = vmatmul.bf16.gmra.mxu0 %v445
      %v509 = vpop.f32.mrf.mxu0
      %v510 = vadd.f32 0.0, %v509
      %v511 = vpop.f32.mrf.mxu0
      %v512 = vadd.f32 0.0, %v511
      %513 = vmatmul.bf16.gmra.mxu0 %v448
      %v514 = vpop.f32.mrf.mxu0
      %v515 = vadd.f32 0.0, %v514
      %v516 = vpop.f32.mrf.mxu0
      %v517 = vadd.f32 0.0, %v516
      %518 = vmatmul.bf16.gmra.mxu0 %v451
      %v519 = vpop.f32.mrf.mxu0
      %v520 = vadd.f32 0.0, %v519
      %v521 = vpop.f32.mrf.mxu0
      %v522 = vadd.f32 0.0, %v521
      %523 = vmatmul.bf16.gmra.mxu0 %v454
      %v524 = vpop.f32.mrf.mxu0
      %v525 = vadd.f32 0.0, %v524
      %v526 = vpop.f32.mrf.mxu0
      %v527 = vadd.f32 0.0, %v526
      %528 = vmatmul.bf16.gmra.mxu0 %v457
      %v529 = vpop.f32.mrf.mxu0
      %v530 = vadd.f32 0.0, %v529
      %v531 = vpop.f32.mrf.mxu0
      %v532 = vadd.f32 0.0, %v531
      %533 = vmatmul.bf16.gmra.mxu0 %v460
      %v534 = vpop.f32.mrf.mxu0
      %v535 = vadd.f32 0.0, %v534
      %v536 = vpop.f32.mrf.mxu0
      %v537 = vadd.f32 0.0, %v536
      %538 = vmatmul.bf16.gmra.mxu0 %v463
      %v539 = vpop.f32.mrf.mxu0
      %v540 = vadd.f32 0.0, %v539
      %v541 = vpop.f32.mrf.mxu0
      %v542 = vadd.f32 0.0, %v541
      %543 = vmatmul.bf16.gmra.mxu0 %v466
      %v544 = vpop.f32.mrf.mxu0
      %v545 = vadd.f32 0.0, %v544
      %v546 = vpop.f32.mrf.mxu0
      %v547 = vadd.f32 0.0, %v546
      %548 = vmatmul.bf16.gmra.mxu0 %v469
      %v549 = vpop.f32.mrf.mxu0
      %v550 = vadd.f32 0.0, %v549
      %v551 = vpop.f32.mrf.mxu0
      %v552 = vadd.f32 0.0, %v551
      %553 = vmatmul.bf16.gmra.mxu0 %v472
      %v554 = vpop.f32.mrf.mxu0
      %v555 = vadd.f32 0.0, %v554
      %v556 = vpop.f32.mrf.mxu0
      %v557 = vadd.f32 0.0, %v556
      %558 = vmatmul.bf16.gmra.mxu0 %v475
      %v559 = vpop.f32.mrf.mxu0
      %v560 = vadd.f32 0.0, %v559
      %v561 = vpop.f32.mrf.mxu0
      %v562 = vadd.f32 0.0, %v561
      %563 = vmatmul.bf16.gmra.mxu0 %v478
      %v564 = vpop.f32.mrf.mxu0
      %v565 = vadd.f32 0.0, %v564
      %v566 = vpop.f32.mrf.mxu0
      %v567 = vadd.f32 0.0, %v566
      %568 = vmatmul.bf16.gmra.mxu0 %v481
      %v569 = vpop.f32.mrf.mxu0
      %v570 = vadd.f32 0.0, %v569
      %v571 = vpop.f32.mrf.mxu0
      %v572 = vadd.f32 0.0, %v571
      %573 = vmatmul.bf16.gmra.mxu0 %v484
      %v574 = vpop.f32.mrf.mxu0
      %v575 = vadd.f32 0.0, %v574
      %v576 = vpop.f32.mrf.mxu0
      %v577 = vadd.f32 0.0, %v576
      %578 = vdwg.mxu0
      %v579 = vld [vmem:[%s2] sm:$0x1]
      %v581 = vperm.slane %v579, 0
      %v583 = vmul.f32 %v500, %v581
      %v584 = vmul.f32 %v502, %v581
      %v585 = vmul.f32 %v505, %v581
      %v586 = vmul.f32 %v507, %v581
      %v587 = vmul.f32 %v510, %v581
      %v588 = vmul.f32 %v512, %v581
      %v589 = vmul.f32 %v515, %v581
      %v590 = vmul.f32 %v517, %v581
      %v591 = vmul.f32 %v520, %v581
      %v592 = vmul.f32 %v522, %v581
      %v593 = vmul.f32 %v525, %v581
      %v594 = vmul.f32 %v527, %v581
      %v595 = vmul.f32 %v530, %v581
      %v596 = vmul.f32 %v532, %v581
      %v597 = vmul.f32 %v535, %v581
      %v598 = vmul.f32 %v537, %v581
      %v599 = vmul.f32 %v540, %v581
      %v600 = vmul.f32 %v542, %v581
      %v601 = vmul.f32 %v545, %v581
      %v602 = vmul.f32 %v547, %v581
      %v603 = vmul.f32 %v550, %v581
      %v604 = vmul.f32 %v552, %v581
      %v605 = vmul.f32 %v555, %v581
      %v606 = vmul.f32 %v557, %v581
      %v607 = vmul.f32 %v560, %v581
      %v608 = vmul.f32 %v562, %v581
      %v609 = vmul.f32 %v565, %v581
      %v610 = vmul.f32 %v567, %v581
      %v611 = vmul.f32 %v570, %v581
      %v612 = vmul.f32 %v572, %v581
      %v613 = vmul.f32 %v575, %v581
      %v614 = vmul.f32 %v577, %v581
      %v615 = vld [vmem:[%s3] sm:$0x1]
      %v617 = vperm.slane %v615, 0
      %v619 = vadd.f32 %v583, %v617
      %v620 = vadd.f32 %v584, %v617
      %v621 = vadd.f32 %v585, %v617
      %v622 = vadd.f32 %v586, %v617
      %v623 = vadd.f32 %v587, %v617
      %v624 = vadd.f32 %v588, %v617
      %v625 = vadd.f32 %v589, %v617
      %v626 = vadd.f32 %v590, %v617
      %v627 = vadd.f32 %v591, %v617
      %v628 = vadd.f32 %v592, %v617
      %v629 = vadd.f32 %v593, %v617
      %v630 = vadd.f32 %v594, %v617
      %v631 = vadd.f32 %v595, %v617
      %v632 = vadd.f32 %v596, %v617
      %v633 = vadd.f32 %v597, %v617
      %v634 = vadd.f32 %v598, %v617
      %v635 = vadd.f32 %v599, %v617
      %v636 = vadd.f32 %v600, %v617
      %v637 = vadd.f32 %v601, %v617
      %v638 = vadd.f32 %v602, %v617
      %v639 = vadd.f32 %v603, %v617
      %v640 = vadd.f32 %v604, %v617
      %v641 = vadd.f32 %v605, %v617
      %v642 = vadd.f32 %v606, %v617
      %v643 = vadd.f32 %v607, %v617
      %v644 = vadd.f32 %v608, %v617
      %v645 = vadd.f32 %v609, %v617
      %v646 = vadd.f32 %v610, %v617
      %v647 = vadd.f32 %v611, %v617
      %v648 = vadd.f32 %v612, %v617
      %v649 = vadd.f32 %v613, %v617
      %v650 = vadd.f32 %v614, %v617
      %v651 = vmax.f32 %v619, 0.0
      %v652 = vmax.f32 %v620, 0.0
      %v653 = vmax.f32 %v621, 0.0
      %v654 = vmax.f32 %v622, 0.0
      %v655 = vmax.f32 %v623, 0.0
      %v656 = vmax.f32 %v624, 0.0
      %v657 = vmax.f32 %v625, 0.0
      %v658 = vmax.f32 %v626, 0.0
      %v659 = vmax.f32 %v627, 0.0
      %v660 = vmax.f32 %v628, 0.0
      %v661 = vmax.f32 %v629, 0.0
      %v662 = vmax.f32 %v630, 0.0
      %v663 = vmax.f32 %v631, 0.0
      %v664 = vmax.f32 %v632, 0.0
      %v665 = vmax.f32 %v633, 0.0
      %v666 = vmax.f32 %v634, 0.0
      %v667 = vmax.f32 %v635, 0.0
      %v668 = vmax.f32 %v636, 0.0
      %v669 = vmax.f32 %v637, 0.0
      %v670 = vmax.f32 %v638, 0.0
      %v671 = vmax.f32 %v639, 0.0
      %v672 = vmax.f32 %v640, 0.0
      %v673 = vmax.f32 %v641, 0.0
      %v674 = vmax.f32 %v642, 0.0
      %v675 = vmax.f32 %v643, 0.0
      %v676 = vmax.f32 %v644, 0.0
      %v677 = vmax.f32 %v645, 0.0
      %v678 = vmax.f32 %v646, 0.0
      %v679 = vmax.f32 %v647, 0.0
      %v680 = vmax.f32 %v648, 0.0
      %v681 = vmax.f32 %v649, 0.0
      %v682 = vmax.f32 %v650, 0.0
      %v683 = vld [vmem:[%s296] sm:$0xff]
      %v684 = vld [vmem:[%s296 + $0x8] sm:$0xff]
      %v685 = vld [vmem:[%s296 + $0x10] sm:$0xff]
      %v686 = vld [vmem:[%s296 + $0x18] sm:$0xff]
      %v687 = vld [vmem:[%s296 + $0x20] sm:$0xff]
      %v688 = vld [vmem:[%s296 + $0x28] sm:$0xff]
      %v689 = vld [vmem:[%s296 + $0x30] sm:$0xff]
      %v690 = vld [vmem:[%s296 + $0x38] sm:$0xff]
      %v691 = vld [vmem:[%s296 + $0x40] sm:$0xff]
      %v692 = vld [vmem:[%s296 + $0x48] sm:$0xff]
      %v693 = vld [vmem:[%s296 + $0x50] sm:$0xff]
      %v694 = vld [vmem:[%s296 + $0x58] sm:$0xff]
      %v695 = vld [vmem:[%s296 + $0x60] sm:$0xff]
      %v696 = vld [vmem:[%s296 + $0x68] sm:$0xff]
      %v697 = vld [vmem:[%s296 + $0x70] sm:$0xff]
      %v698 = vld [vmem:[%s296 + $0x78] sm:$0xff]
      %v699 = vld [vmem:[%s296 + $0x80] sm:$0xff]
      %v700 = vld [vmem:[%s296 + $0x88] sm:$0xff]
      %v701 = vld [vmem:[%s296 + $0x90] sm:$0xff]
      %v702 = vld [vmem:[%s296 + $0x98] sm:$0xff]
      %v703 = vld [vmem:[%s296 + $0xa0] sm:$0xff]
      %v704 = vld [vmem:[%s296 + $0xa8] sm:$0xff]
      %v705 = vld [vmem:[%s296 + $0xb0] sm:$0xff]
      %v706 = vld [vmem:[%s296 + $0xb8] sm:$0xff]
      %v707 = vld [vmem:[%s296 + $0xc0] sm:$0xff]
      %v708 = vld [vmem:[%s296 + $0xc8] sm:$0xff]
      %v709 = vld [vmem:[%s296 + $0xd0] sm:$0xff]
      %v710 = vld [vmem:[%s296 + $0xd8] sm:$0xff]
      %v711 = vld [vmem:[%s296 + $0xe0] sm:$0xff]
      %v712 = vld [vmem:[%s296 + $0xe8] sm:$0xff]
      %v713 = vld [vmem:[%s296 + $0xf0] sm:$0xff]
      %v714 = vld [vmem:[%s296 + $0xf8] sm:$0xff]
      %v715 = vadd.f32 %v651, %v683
      %v716 = vadd.f32 %v652, %v684
      %v717 = vadd.f32 %v653, %v685
      %v718 = vadd.f32 %v654, %v686
      %v719 = vadd.f32 %v655, %v687
      %v720 = vadd.f32 %v656, %v688
      %v721 = vadd.f32 %v657, %v689
      %v722 = vadd.f32 %v658, %v690
      %v723 = vadd.f32 %v659, %v691
      %v724 = vadd.f32 %v660, %v692
      %v725 = vadd.f32 %v661, %v693
      %v726 = vadd.f32 %v662, %v694
      %v727 = vadd.f32 %v663, %v695
      %v728 = vadd.f32 %v664, %v696
      %v729 = vadd.f32 %v665, %v697
      %v730 = vadd.f32 %v666, %v698
      %v731 = vadd.f32 %v667, %v699
      %v732 = vadd.f32 %v668, %v700
      %v733 = vadd.f32 %v669, %v701
      %v734 = vadd.f32 %v670, %v702
      %v735 = vadd.f32 %v671, %v703
      %v736 = vadd.f32 %v672, %v704
      %v737 = vadd.f32 %v673, %v705
      %v738 = vadd.f32 %v674, %v706
      %v739 = vadd.f32 %v675, %v707
      %v740 = vadd.f32 %v676, %v708
      %v741 = vadd.f32 %v677, %v709
      %v742 = vadd.f32 %v678, %v710
      %v743 = vadd.f32 %v679, %v711
      %v744 = vadd.f32 %v680, %v712
      %v745 = vadd.f32 %v681, %v713
      %v746 = vadd.f32 %v682, %v714
      %v747 = vld [vmem:[%s5] sm:$0x1]
      %v749 = vperm.slane %v747, 0
      %v751 = vmul.f32 %v715, %v749
      %v752 = vmul.f32 %v716, %v749
      %v753 = vmul.f32 %v717, %v749
      %v754 = vmul.f32 %v718, %v749
      %v755 = vmul.f32 %v719, %v749
      %v756 = vmul.f32 %v720, %v749
      %v757 = vmul.f32 %v721, %v749
      %v758 = vmul.f32 %v722, %v749
      %v759 = vmul.f32 %v723, %v749
      %v760 = vmul.f32 %v724, %v749
      %v761 = vmul.f32 %v725, %v749
      %v762 = vmul.f32 %v726, %v749
      %v763 = vmul.f32 %v727, %v749
      %v764 = vmul.f32 %v728, %v749
      %v765 = vmul.f32 %v729, %v749
      %v766 = vmul.f32 %v730, %v749
      %v767 = vmul.f32 %v731, %v749
      %v768 = vmul.f32 %v732, %v749
      %v769 = vmul.f32 %v733, %v749
      %v770 = vmul.f32 %v734, %v749
      %v771 = vmul.f32 %v735, %v749
      %v772 = vmul.f32 %v736, %v749
      %v773 = vmul.f32 %v737, %v749
      %v774 = vmul.f32 %v738, %v749
      %v775 = vmul.f32 %v739, %v749
      %v776 = vmul.f32 %v740, %v749
      %v777 = vmul.f32 %v741, %v749
      %v778 = vmul.f32 %v742, %v749
      %v779 = vmul.f32 %v743, %v749
      %v780 = vmul.f32 %v744, %v749
      %v781 = vmul.f32 %v745, %v749
      %v782 = vmul.f32 %v746, %v749
      %v783 = vld [vmem:[%s6] sm:$0x1]
      %v785 = vperm.slane %v783, 0
      %v787 = vadd.f32 %v751, %v785
      %v788 = vadd.f32 %v752, %v785
      %v789 = vadd.f32 %v753, %v785
      %v790 = vadd.f32 %v754, %v785
      %v791 = vadd.f32 %v755, %v785
      %v792 = vadd.f32 %v756, %v785
      %v793 = vadd.f32 %v757, %v785
      %v794 = vadd.f32 %v758, %v785
      %v795 = vadd.f32 %v759, %v785
      %v796 = vadd.f32 %v760, %v785
      %v797 = vadd.f32 %v761, %v785
      %v798 = vadd.f32 %v762, %v785
      %v799 = vadd.f32 %v763, %v785
      %v800 = vadd.f32 %v764, %v785
      %v801 = vadd.f32 %v765, %v785
      %v802 = vadd.f32 %v766, %v785
      %v803 = vadd.f32 %v767, %v785
      %v804 = vadd.f32 %v768, %v785
      %v805 = vadd.f32 %v769, %v785
      %v806 = vadd.f32 %v770, %v785
      %v807 = vadd.f32 %v771, %v785
      %v808 = vadd.f32 %v772, %v785
      %v809 = vadd.f32 %v773, %v785
      %v810 = vadd.f32 %v774, %v785
      %v811 = vadd.f32 %v775, %v785
      %v812 = vadd.f32 %v776, %v785
      %v813 = vadd.f32 %v777, %v785
      %v814 = vadd.f32 %v778, %v785
      %v815 = vadd.f32 %v779, %v785
      %v816 = vadd.f32 %v780, %v785
      %v817 = vadd.f32 %v781, %v785
      %v818 = vadd.f32 %v782, %v785
      %v819 = vmax.f32 %v787, 0.0
      %v820 = vmax.f32 %v788, 0.0
      %v821 = vmax.f32 %v789, 0.0
      %v822 = vmax.f32 %v790, 0.0
      %v823 = vmax.f32 %v791, 0.0
      %v824 = vmax.f32 %v792, 0.0
      %v825 = vmax.f32 %v793, 0.0
      %v826 = vmax.f32 %v794, 0.0
      %v827 = vmax.f32 %v795, 0.0
      %v828 = vmax.f32 %v796, 0.0
      %v829 = vmax.f32 %v797, 0.0
      %v830 = vmax.f32 %v798, 0.0
      %v831 = vmax.f32 %v799, 0.0
      %v832 = vmax.f32 %v800, 0.0
      %v833 = vmax.f32 %v801, 0.0
      %v834 = vmax.f32 %v802, 0.0
      %v835 = vmax.f32 %v803, 0.0
      %v836 = vmax.f32 %v804, 0.0
      %v837 = vmax.f32 %v805, 0.0
      %v838 = vmax.f32 %v806, 0.0
      %v839 = vmax.f32 %v807, 0.0
      %v840 = vmax.f32 %v808, 0.0
      %v841 = vmax.f32 %v809, 0.0
      %v842 = vmax.f32 %v810, 0.0
      %v843 = vmax.f32 %v811, 0.0
      %v844 = vmax.f32 %v812, 0.0
      %v845 = vmax.f32 %v813, 0.0
      %v846 = vmax.f32 %v814, 0.0
      %v847 = vmax.f32 %v815, 0.0
      %v848 = vmax.f32 %v816, 0.0
      %v849 = vmax.f32 %v817, 0.0
      %v850 = vmax.f32 %v818, 0.0
      %vm851 = vcmask 31744
      %852 = vst.msk [vmem:[%s302] sm:$0xff] %vm851, %v819
      %853 = vst.msk [vmem:[%s302 + $0x8] sm:$0xff] %vm851, %v820
      %854 = vst.msk [vmem:[%s302 + $0x10] sm:$0xff] %vm851, %v821
      %855 = vst.msk [vmem:[%s302 + $0x18] sm:$0xff] %vm851, %v822
      %856 = vst.msk [vmem:[%s302 + $0x20] sm:$0xff] %vm851, %v823
      %857 = vst.msk [vmem:[%s302 + $0x28] sm:$0xff] %vm851, %v824
      %858 = vst.msk [vmem:[%s302 + $0x30] sm:$0xff] %vm851, %v825
      %859 = vst.msk [vmem:[%s302 + $0x38] sm:$0xff] %vm851, %v826
      %860 = vst.msk [vmem:[%s302 + $0x40] sm:$0xff] %vm851, %v827
      %861 = vst.msk [vmem:[%s302 + $0x48] sm:$0xff] %vm851, %v828
      %862 = vst.msk [vmem:[%s302 + $0x50] sm:$0xff] %vm851, %v829
      %863 = vst.msk [vmem:[%s302 + $0x58] sm:$0xff] %vm851, %v830
      %864 = vst.msk [vmem:[%s302 + $0x60] sm:$0xff] %vm851, %v831
      %865 = vst.msk [vmem:[%s302 + $0x68] sm:$0xff] %vm851, %v832
      %866 = vst.msk [vmem:[%s302 + $0x70] sm:$0xff] %vm851, %v833
      %867 = vst.msk [vmem:[%s302 + $0x78] sm:$0xff] %vm851, %v834
      %868 = vst.msk [vmem:[%s302 + $0x80] sm:$0xff] %vm851, %v835
      %869 = vst.msk [vmem:[%s302 + $0x88] sm:$0xff] %vm851, %v836
      %870 = vst.msk [vmem:[%s302 + $0x90] sm:$0xff] %vm851, %v837
      %871 = vst.msk [vmem:[%s302 + $0x98] sm:$0xff] %vm851, %v838
      %872 = vst.msk [vmem:[%s302 + $0xa0] sm:$0xff] %vm851, %v839
      %873 = vst.msk [vmem:[%s302 + $0xa8] sm:$0xff] %vm851, %v840
      %874 = vst.msk [vmem:[%s302 + $0xb0] sm:$0xff] %vm851, %v841
      %875 = vst.msk [vmem:[%s302 + $0xb8] sm:$0xff] %vm851, %v842
      %876 = vst.msk [vmem:[%s302 + $0xc0] sm:$0xff] %vm851, %v843
      %877 = vst.msk [vmem:[%s302 + $0xc8] sm:$0xff] %vm851, %v844
      %878 = vst.msk [vmem:[%s302 + $0xd0] sm:$0xff] %vm851, %v845
      %879 = vst.msk [vmem:[%s302 + $0xd8] sm:$0xff] %vm851, %v846
      %880 = vst.msk [vmem:[%s302 + $0xe0] sm:$0xff] %vm851, %v847
      %881 = vst.msk [vmem:[%s302 + $0xe8] sm:$0xff] %vm851, %v848
      %882 = vst.msk [vmem:[%s302 + $0xf0] sm:$0xff] %vm851, %v849
      %883 = vst.msk [vmem:[%s302 + $0xf8] sm:$0xff] %vm851, %v850
      %s884 = smul.u32 32, %s18
      %p885 = scmp.lt.s32.totalorder %s884, 63
      %s886 = scalar_select %p885, %s884, 63
      %s887 = smul.addr %s886, 8
      %s888 = scalar_lea.vmem %s7, %s887
      // Predicated region
      $region49: #{us_downsample_block_forward.47} parent=47 // pred_check
        %p889 = pneg %p193
      $region50: #{us_downsample_block_forward.47} parent=47 // pred_check_branch
        %891 = sbr.rel (%p889) target = $region52
      $region51: #{us_downsample_block_forward.47} parent=47 // pred_region
        %s892 = smul.u32 32, %s18
      $region52: #{us_downsample_block_forward.47} parent=47 // pred_fallthru
        _
    $region48: #{us_downsample_block_forward.47} parent=5 // pred_fallthru
      _
    %p893 = scmp.le.s32.totalorder 2, %s13
    // Predicated region
    $region53: #{us_downsample_block_forward.47} parent=5 // pred_check
      %p894 = pneg %p893
    $region54: #{us_downsample_block_forward.47} parent=5 // pred_check_branch
      %896 = sbr.rel (%p894) target = $region56
    $region55: #{us_downsample_block_forward.47} parent=5 // pred_region
      %s897 = ssub.s32 %s13, 2
      // Predicated region
      $region57: #{us_downsample_block_forward.47} parent=55 // pred_check
        %p898 = pneg %p199
      $region58: #{us_downsample_block_forward.47} parent=55 // pred_check_branch
        %900 = sbr.rel (%p898) target = $region60
      $region59: #{us_downsample_block_forward.47} parent=55 // pred_region
        %s901 = smul.u32 32, %s19
        %p902 = scmp.lt.s32.totalorder %s901, 63
        %s903 = scalar_select %p902, %s901, 63
        %s904 = smul.addr %s903, 8
        %s905 = scalar_lea.vmem %s7, %s904
      $region60: #{us_downsample_block_forward.47} parent=55 // pred_fallthru
        _
    $region56: #{us_downsample_block_forward.47} parent=5 // pred_fallthru
      _
  $region6: #{us_downsample_block_forward.47} parent=0 // loop_footer
    %s17 = sadd.s32 1, %s13
  $region7: #{us_downsample_block_forward.47} parent=0 // loop_footer_branch
    %12 = sbr.rel target = $region3
  $region8: #{us_downsample_block_forward.47} parent=0 // loop_exit
    _

// kernel: us_downsample_block_forward.54
$region0: #{us_downsample_block_forward.54}
  #allocation0 [shape = 'u32[]', space=smem, size = 0x4, offset = 0x4, fixed_abs, tag = 'smem constant byte address 0x4 - core index']
  #allocation1 [shape = 'u32[72,128]{1,0:T(1,128)}', space=vmem, size = 0x9000, scoped, tag = 'internal scratch']
  %s0 = inlined_call_operand.vmem [shape: bf16[512,28], index: 0, kind: input, shape index: {}]
  %s1 = inlined_call_operand.vmem [shape: bf16[28,4], index: 1, kind: input, shape index: {}]
  %s2 = inlined_call_operand.vmem [shape: f32[1,4], index: 2, kind: input, shape index: {}]
  %s3 = inlined_call_operand.vmem [shape: f32[1,4], index: 3, kind: input, shape index: {}]
  %s4 = inlined_call_operand.vmem [shape: f32[512,4], index: 4, kind: output, shape index: {}]
  %s5 = sld [smem:[#allocation0]]
  $region49: #{us_downsample_block_forward.54} parent=0
    _
  %s7 = ssub.s32 1, %s5
  %s8 = scalar_select 0, %s7, %s5
  loop: start=0, step=1, limit=4
  $region2: #{us_downsample_block_forward.54} parent=0 // loop_pre_header
    _
  $region3: #{us_downsample_block_forward.54} parent=0 // loop_header
    %s10 = sphi 0, %s14
    %p11 = scmp.ge.s32.totalorder %s10, 4
    %s20 = sphi 0, %s22
    %s23 = sphi 0, %s20
    %s24 = sphi 0, %s23
    %s40 = sphi 0, %s24
    %s44 = sphi 0, %s44
    %s46 = sphi 0, %s44
    %s47 = sphi 0, %s46
    %s61 = sphi 0, %s47
    %s65 = sphi 0, %s65
    %s67 = sphi 0, %s65
    %s68 = sphi 0, %s67
    %s82 = sphi 0, %s68
    %s86 = sphi 0, %s86
    %s88 = sphi 0, %s86
    %s89 = sphi 0, %s88
    %s103 = sphi 0, %s89
    %s109 = sphi 0, %s111
    %s112 = sphi 0, %s109
    %s113 = sphi 0, %s112
    %s129 = sphi 0, %s113
  $region4: #{us_downsample_block_forward.54} parent=0 // loop_header_branch
    %13 = sbr.rel (%p11) target = $region8
  $region5: #{us_downsample_block_forward.54} parent=0 // loop_body
    %s15 = ssub.s32 %s10, 1
    %s16 = ssub.s32 %s10, 2
    %s17 = sadd.s32 %s10, 1
    %s18 = ssub.s32 %s10, %s17
    %p19 = scmp.eq.s32.totalorder %s18, 0
    %s21 = sadd.s32 %s20, 1
    %s22 = scalar_select %p19, %s20, %s21
    %p25 = pneg %p19
    %p26 = scmp.eq.s32.totalorder %s10, 1
    %p27 = por %p25, %p26
    %p28 = scmp.ne.s32.totalorder %s20, %s23
    %p29 = scmp.eq.s32.totalorder %s10, 0
    %p30 = por %p28, %p29
    %p31 = scmp.ne.s32.totalorder %s20, %s23
    %p32 = scmp.eq.s32.totalorder %s15, 1
    %p33 = por %p31, %p32
    %p34 = scmp.ne.s32.totalorder %s23, %s24
    %p35 = scmp.eq.s32.totalorder %s15, 0
    %p36 = por %p34, %p35
    %p37 = scmp.ne.s32.totalorder %s23, %s24
    %p38 = scmp.eq.s32.totalorder %s16, 1
    %p39 = por %p37, %p38
    %p41 = scmp.ne.s32.totalorder %s24, %s40
    %p42 = scmp.eq.s32.totalorder %s16, 0
    %p43 = por %p41, %p42
    %s45 = sadd.s32 %s44, 1
    %p48 = scmp.eq.s32.totalorder %s10, 1
    %p49 = scmp.ne.s32.totalorder %s44, %s46
    %p50 = scmp.eq.s32.totalorder %s10, 0
    %p51 = por %p49, %p50
    %p52 = scmp.ne.s32.totalorder %s44, %s46
    %p53 = scmp.eq.s32.totalorder %s15, 1
    %p54 = por %p52, %p53
    %p55 = scmp.ne.s32.totalorder %s46, %s47
    %p56 = scmp.eq.s32.totalorder %s15, 0
    %p57 = por %p55, %p56
    %p58 = scmp.ne.s32.totalorder %s46, %s47
    %p59 = scmp.eq.s32.totalorder %s16, 1
    %p60 = por %p58, %p59
    %p62 = scmp.ne.s32.totalorder %s47, %s61
    %p63 = scmp.eq.s32.totalorder %s16, 0
    %p64 = por %p62, %p63
    %s66 = sadd.s32 %s65, 1
    %p69 = scmp.eq.s32.totalorder %s10, 1
    %p70 = scmp.ne.s32.totalorder %s65, %s67
    %p71 = scmp.eq.s32.totalorder %s10, 0
    %p72 = por %p70, %p71
    %p73 = scmp.ne.s32.totalorder %s65, %s67
    %p74 = scmp.eq.s32.totalorder %s15, 1
    %p75 = por %p73, %p74
    %p76 = scmp.ne.s32.totalorder %s67, %s68
    %p77 = scmp.eq.s32.totalorder %s15, 0
    %p78 = por %p76, %p77
    %p79 = scmp.ne.s32.totalorder %s67, %s68
    %p80 = scmp.eq.s32.totalorder %s16, 1
    %p81 = por %p79, %p80
    %p83 = scmp.ne.s32.totalorder %s68, %s82
    %p84 = scmp.eq.s32.totalorder %s16, 0
    %p85 = por %p83, %p84
    %s87 = sadd.s32 %s86, 1
    %p90 = scmp.eq.s32.totalorder %s10, 1
    %p91 = scmp.ne.s32.totalorder %s86, %s88
    %p92 = scmp.eq.s32.totalorder %s10, 0
    %p93 = por %p91, %p92
    %p94 = scmp.ne.s32.totalorder %s86, %s88
    %p95 = scmp.eq.s32.totalorder %s15, 1
    %p96 = por %p94, %p95
    %p97 = scmp.ne.s32.totalorder %s88, %s89
    %p98 = scmp.eq.s32.totalorder %s15, 0
    %p99 = por %p97, %p98
    %p100 = scmp.ne.s32.totalorder %s88, %s89
    %p101 = scmp.eq.s32.totalorder %s16, 1
    %p102 = por %p100, %p101
    %p104 = scmp.ne.s32.totalorder %s89, %s103
    %p105 = scmp.eq.s32.totalorder %s16, 0
    %p106 = por %p104, %p105
    %s107 = ssub.s32 %s10, %s17
    %p108 = scmp.eq.s32.totalorder %s107, 0
    %s110 = sadd.s32 %s109, 1
    %s111 = scalar_select %p108, %s109, %s110
    %p114 = pneg %p108
    %p115 = scmp.eq.s32.totalorder %s10, 1
    %p116 = por %p114, %p115
    %p117 = scmp.ne.s32.totalorder %s109, %s112
    %p118 = scmp.eq.s32.totalorder %s10, 0
    %p119 = por %p117, %p118
    %p120 = scmp.ne.s32.totalorder %s109, %s112
    %p121 = scmp.eq.s32.totalorder %s15, 1
    %p122 = por %p120, %p121
    %p123 = scmp.ne.s32.totalorder %s112, %s113
    %p124 = scmp.eq.s32.totalorder %s15, 0
    %p125 = por %p123, %p124
    %p126 = scmp.ne.s32.totalorder %s112, %s113
    %p127 = scmp.eq.s32.totalorder %s16, 1
    %p128 = por %p126, %p127
    %p130 = scmp.ne.s32.totalorder %s113, %s129
    %p131 = scmp.eq.s32.totalorder %s16, 0
    %p132 = por %p130, %p131
    %p133 = scmp.le.s32.totalorder 1, %s10
    %p134 = scmp.lt.s32.totalorder %s10, 3
    %p135 = pnand %p133, %p134
    %p136 = pneg %p135
    // Predicated region
    $region9: #{us_downsample_block_forward.54} parent=5 // pred_check
      _
    $region10: #{us_downsample_block_forward.54} parent=5 // pred_check_branch
      %138 = sbr.rel (%p135) target = $region12
    $region11: #{us_downsample_block_forward.54} parent=5 // pred_region
      %s139 = ssub.s32 %s10, 1
      // Predicated region
      $region13: #{us_downsample_block_forward.54} parent=11 // pred_check
        %p140 = pneg %p57
      $region14: #{us_downsample_block_forward.54} parent=11 // pred_check_branch
        %142 = sbr.rel (%p140) target = $region16
      $region15: #{us_downsample_block_forward.54} parent=11 // pred_region
        _
      $region16: #{us_downsample_block_forward.54} parent=11 // pred_fallthru
        _
      // Predicated region
      $region17: #{us_downsample_block_forward.54} parent=11 // pred_check
        %p143 = pneg %p78
      $region18: #{us_downsample_block_forward.54} parent=11 // pred_check_branch
        %145 = sbr.rel (%p143) target = $region20
      $region19: #{us_downsample_block_forward.54} parent=11 // pred_region
        _
      $region20: #{us_downsample_block_forward.54} parent=11 // pred_fallthru
        _
      // Predicated region
      $region21: #{us_downsample_block_forward.54} parent=11 // pred_check
        %p146 = pneg %p99
      $region22: #{us_downsample_block_forward.54} parent=11 // pred_check_branch
        %148 = sbr.rel (%p146) target = $region24
      $region23: #{us_downsample_block_forward.54} parent=11 // pred_region
        _
      $region24: #{us_downsample_block_forward.54} parent=11 // pred_fallthru
        _
    $region12: #{us_downsample_block_forward.54} parent=5 // pred_fallthru
      _
    %p149 = scmp.lt.s32.totalorder %s10, 2
    // Predicated region
    $region25: #{us_downsample_block_forward.54} parent=5 // pred_check
      %p150 = pneg %p149
    $region26: #{us_downsample_block_forward.54} parent=5 // pred_check_branch
      %152 = sbr.rel (%p150) target = $region28
    $region27: #{us_downsample_block_forward.54} parent=5 // pred_region
      // Predicated region
      $region29: #{us_downsample_block_forward.54} parent=27 // pred_check
        %p153 = pneg %p30
      $region30: #{us_downsample_block_forward.54} parent=27 // pred_check_branch
        %155 = sbr.rel (%p153) target = $region32
      $region31: #{us_downsample_block_forward.54} parent=27 // pred_region
        %s156 = smul.u32 32, %s10
        %p157 = scmp.lt.s32.totalorder %s156, 63
        %s158 = scalar_select %p157, %s156, 63
        %s159 = smul.addr %s158, 4
        %s160 = scalar_lea.vmem %s0, %s159
        %s161 = smul.u32 32, %s10
      $region32: #{us_downsample_block_forward.54} parent=27 // pred_fallthru
        _
    $region28: #{us_downsample_block_forward.54} parent=5 // pred_fallthru
      _
    %p162 = scmp.le.s32.totalorder 1, %s10
    %p163 = scmp.lt.s32.totalorder %s10, 3
    %p164 = pnand %p162, %p163
    %p165 = pneg %p164
    // Predicated region
    $region33: #{us_downsample_block_forward.54} parent=5 // pred_check
      _
    $region34: #{us_downsample_block_forward.54} parent=5 // pred_check_branch
      %167 = sbr.rel (%p164) target = $region36
    $region35: #{us_downsample_block_forward.54} parent=5 // pred_region
      %s168 = ssub.s32 %s10, 1
      %s169 = smul.u32 32, %s15
      %p170 = scmp.lt.s32.totalorder %s169, 63
      %s171 = scalar_select %p170, %s169, 63
      %s172 = smul.addr %s171, 4
      %s173 = scalar_lea.vmem %s0, %s172
      %p174 = pneg %p36
      %p175 = pneg %p33
      %p176 = pneg %p57
      %p177 = pneg %p54
      %p178 = pneg %p78
      %p179 = pneg %p75
      %p180 = pneg %p99
      %p181 = pneg %p96
      %p182 = pneg %p125
      %p183 = pneg %p122
      %s184 = smul.u32 32, %s15
      %p185 = scmp.lt.s32.totalorder %s184, 63
      %s186 = scalar_select %p185, %s184, 63
      %s187 = smul.addr %s186, 8
      %s188 = scalar_lea.vmem %s4, %s187
      %s189 = smul.u32 32, %s15
      %p190 = scmp.lt.s32.totalorder %s189, 63
      %s191 = scalar_select %p190, %s189, 63
      %s192 = smul.addr %s191, 4
      %s193 = scalar_lea.vmem %s0, %s192
      %s194 = smul.u32 32, %s15
      %s195 = smul.u32 32, %s15
      %p196 = scmp.lt.s32.totalorder %s195, 63
      %s197 = scalar_select %p196, %s195, 63
      %s198 = smul.addr %s197, 8
      %s199 = scalar_lea.vmem %s4, %s198
      %s200 = smul.u32 32, %s15
      %v202 = vld [vmem:[%s193] sm:$0xf]
      %v203 = vld [vmem:[%s193 + $0x4] sm:$0xf]
      %v204 = vld [vmem:[%s193 + $0x8] sm:$0xf]
      %v205 = vld [vmem:[%s193 + $0xc] sm:$0xf]
      %v206 = vld [vmem:[%s193 + $0x10] sm:$0xf]
      %v207 = vld [vmem:[%s193 + $0x14] sm:$0xf]
      %v208 = vld [vmem:[%s193 + $0x18] sm:$0xf]
      %v209 = vld [vmem:[%s193 + $0x1c] sm:$0xf]
      %v210 = vld [vmem:[%s193 + $0x20] sm:$0xf]
      %v211 = vld [vmem:[%s193 + $0x24] sm:$0xf]
      %v212 = vld [vmem:[%s193 + $0x28] sm:$0xf]
      %v213 = vld [vmem:[%s193 + $0x2c] sm:$0xf]
      %v214 = vld [vmem:[%s193 + $0x30] sm:$0xf]
      %v215 = vld [vmem:[%s193 + $0x34] sm:$0xf]
      %v216 = vld [vmem:[%s193 + $0x38] sm:$0xf]
      %v217 = vld [vmem:[%s193 + $0x3c] sm:$0xf]
      %v218 = vld [vmem:[%s193 + $0x40] sm:$0xf]
      %v219 = vld [vmem:[%s193 + $0x44] sm:$0xf]
      %v220 = vld [vmem:[%s193 + $0x48] sm:$0xf]
      %v221 = vld [vmem:[%s193 + $0x4c] sm:$0xf]
      %v222 = vld [vmem:[%s193 + $0x50] sm:$0xf]
      %v223 = vld [vmem:[%s193 + $0x54] sm:$0xf]
      %v224 = vld [vmem:[%s193 + $0x58] sm:$0xf]
      %v225 = vld [vmem:[%s193 + $0x5c] sm:$0xf]
      %v226 = vld [vmem:[%s193 + $0x60] sm:$0xf]
      %v227 = vld [vmem:[%s193 + $0x64] sm:$0xf]
      %v228 = vld [vmem:[%s193 + $0x68] sm:$0xf]
      %v229 = vld [vmem:[%s193 + $0x6c] sm:$0xf]
      %v230 = vld [vmem:[%s193 + $0x70] sm:$0xf]
      %v231 = vld [vmem:[%s193 + $0x74] sm:$0xf]
      %v232 = vld [vmem:[%s193 + $0x78] sm:$0xf]
      %v233 = vld [vmem:[%s193 + $0x7c] sm:$0xf]
      %v234 = vld [vmem:[%s1] sm:$0xf]
      %v235 = vld [vmem:[%s1 + $0x4] sm:$0xf]
      %v236 = vld [vmem:[%s1 + $0x8] sm:$0xf]
      %v237 = vld [vmem:[%s1 + $0xc] sm:$0x3]
      %v270 = vunpack.c.l.b16 %v202
      %v271 = vunpack.c.l.b16 %v203
      %v272 = vunpack.c.l.b16 %v204
      %v273 = vunpack.c.l.b16 %v205
      %v274 = vunpack.c.l.b16 %v206
      %v275 = vunpack.c.l.b16 %v207
      %v276 = vunpack.c.l.b16 %v208
      %v277 = vunpack.c.l.b16 %v209
      %v278 = vunpack.c.l.b16 %v210
      %v279 = vunpack.c.l.b16 %v211
      %v280 = vunpack.c.l.b16 %v212
      %v281 = vunpack.c.l.b16 %v213
      %v282 = vunpack.c.l.b16 %v214
      %v283 = vunpack.c.l.b16 %v215
      %v284 = vunpack.c.l.b16 %v216
      %v285 = vunpack.c.l.b16 %v217
      %v286 = vunpack.c.l.b16 %v218
      %v287 = vunpack.c.l.b16 %v219
      %v288 = vunpack.c.l.b16 %v220
      %v289 = vunpack.c.l.b16 %v221
      %v290 = vunpack.c.l.b16 %v222
      %v291 = vunpack.c.l.b16 %v223
      %v292 = vunpack.c.l.b16 %v224
      %v293 = vunpack.c.l.b16 %v225
      %v294 = vunpack.c.l.b16 %v226
      %v295 = vunpack.c.l.b16 %v227
      %v296 = vunpack.c.l.b16 %v228
      %v297 = vunpack.c.l.b16 %v229
      %v298 = vunpack.c.l.b16 %v230
      %v299 = vunpack.c.l.b16 %v231
      %v300 = vunpack.c.l.b16 %v232
      %v301 = vunpack.c.l.b16 %v233
      %v302 = vpack.c.b16 %v271, %v270
      %v303 = vpack.c.b16 %v273, %v272
      %v304 = vpack.c.b16 %v275, %v274
      %v305 = vpack.c.b16 %v277, %v276
      %v306 = vpack.c.b16 %v279, %v278
      %v307 = vpack.c.b16 %v281, %v280
      %v308 = vpack.c.b16 %v283, %v282
      %v309 = vpack.c.b16 %v285, %v284
      %v310 = vpack.c.b16 %v287, %v286
      %v311 = vpack.c.b16 %v289, %v288
      %v312 = vpack.c.b16 %v291, %v290
      %v313 = vpack.c.b16 %v293, %v292
      %v314 = vpack.c.b16 %v295, %v294
      %v315 = vpack.c.b16 %v297, %v296
      %v316 = vpack.c.b16 %v299, %v298
      %v317 = vpack.c.b16 %v301, %v300
      %v322 = vunpack.c.l.b16 %v234
      %v323 = vunpack.c.l.b16 %v235
      %v324 = vunpack.c.l.b16 %v236
      %v325 = vunpack.c.l.b16 %v237
      %v326 = vpack.c.b16 %v323, %v322
      %v327 = vpack.c.b16 %v325, %v324
      %vm329 = vcmask 228352
      %v331 = vsel %vm329, %v302, 0
      %v334 = vsel %vm329, %v303, 0
      %v337 = vsel %vm329, %v304, 0
      %v340 = vsel %vm329, %v305, 0
      %v343 = vsel %vm329, %v306, 0
      %v346 = vsel %vm329, %v307, 0
      %v349 = vsel %vm329, %v308, 0
      %v352 = vsel %vm329, %v309, 0
      %v355 = vsel %vm329, %v310, 0
      %v358 = vsel %vm329, %v311, 0
      %v361 = vsel %vm329, %v312, 0
      %v364 = vsel %vm329, %v313, 0
      %v367 = vsel %vm329, %v314, 0
      %v370 = vsel %vm329, %v315, 0
      %v373 = vsel %vm329, %v316, 0
      %v376 = vsel %vm329, %v317, 0
      %vm378 = vcmask 1045504
      %v380 = vsel %vm378, %v327, 0
      %382 = vmatpush.bf16.msra.mxu0 0
      %383 = vmatpush.bf16.msra.mxu0 0
      %384 = vmatpush.bf16.msra.mxu0 0
      %385 = vmatpush.bf16.msra.mxu0 0
      %386 = vmatpush.bf16.msra.mxu0 0
      %387 = vmatpush.bf16.msra.mxu0 0
      %388 = vmatpush.bf16.msra.mxu0 %v380
      %389 = vmatpush.bf16.msra.mxu0 %v326
      %390 = vmatmul.bf16.gmra.mxu0 %v331
      %v391 = vpop.f32.mrf.mxu0
      %v392 = vadd.f32 0.0, %v391
      %v393 = vpop.f32.mrf.mxu0
      %v394 = vadd.f32 0.0, %v393
      %395 = vmatmul.bf16.gmra.mxu0 %v334
      %v396 = vpop.f32.mrf.mxu0
      %v397 = vadd.f32 0.0, %v396
      %v398 = vpop.f32.mrf.mxu0
      %v399 = vadd.f32 0.0, %v398
      %400 = vmatmul.bf16.gmra.mxu0 %v337
      %v401 = vpop.f32.mrf.mxu0
      %v402 = vadd.f32 0.0, %v401
      %v403 = vpop.f32.mrf.mxu0
      %v404 = vadd.f32 0.0, %v403
      %405 = vmatmul.bf16.gmra.mxu0 %v340
      %v406 = vpop.f32.mrf.mxu0
      %v407 = vadd.f32 0.0, %v406
      %v408 = vpop.f32.mrf.mxu0
      %v409 = vadd.f32 0.0, %v408
      %410 = vmatmul.bf16.gmra.mxu0 %v343
      %v411 = vpop.f32.mrf.mxu0
      %v412 = vadd.f32 0.0, %v411
      %v413 = vpop.f32.mrf.mxu0
      %v414 = vadd.f32 0.0, %v413
      %415 = vmatmul.bf16.gmra.mxu0 %v346
      %v416 = vpop.f32.mrf.mxu0
      %v417 = vadd.f32 0.0, %v416
      %v418 = vpop.f32.mrf.mxu0
      %v419 = vadd.f32 0.0, %v418
      %420 = vmatmul.bf16.gmra.mxu0 %v349
      %v421 = vpop.f32.mrf.mxu0
      %v422 = vadd.f32 0.0, %v421
      %v423 = vpop.f32.mrf.mxu0
      %v424 = vadd.f32 0.0, %v423
      %425 = vmatmul.bf16.gmra.mxu0 %v352
      %v426 = vpop.f32.mrf.mxu0
      %v427 = vadd.f32 0.0, %v426
      %v428 = vpop.f32.mrf.mxu0
      %v429 = vadd.f32 0.0, %v428
      %430 = vmatmul.bf16.gmra.mxu0 %v355
      %v431 = vpop.f32.mrf.mxu0
      %v432 = vadd.f32 0.0, %v431
      %v433 = vpop.f32.mrf.mxu0
      %v434 = vadd.f32 0.0, %v433
      %435 = vmatmul.bf16.gmra.mxu0 %v358
      %v436 = vpop.f32.mrf.mxu0
      %v437 = vadd.f32 0.0, %v436
      %v438 = vpop.f32.mrf.mxu0
      %v439 = vadd.f32 0.0, %v438
      %440 = vmatmul.bf16.gmra.mxu0 %v361
      %v441 = vpop.f32.mrf.mxu0
      %v442 = vadd.f32 0.0, %v441
      %v443 = vpop.f32.mrf.mxu0
      %v444 = vadd.f32 0.0, %v443
      %445 = vmatmul.bf16.gmra.mxu0 %v364
      %v446 = vpop.f32.mrf.mxu0
      %v447 = vadd.f32 0.0, %v446
      %v448 = vpop.f32.mrf.mxu0
      %v449 = vadd.f32 0.0, %v448
      %450 = vmatmul.bf16.gmra.mxu0 %v367
      %v451 = vpop.f32.mrf.mxu0
      %v452 = vadd.f32 0.0, %v451
      %v453 = vpop.f32.mrf.mxu0
      %v454 = vadd.f32 0.0, %v453
      %455 = vmatmul.bf16.gmra.mxu0 %v370
      %v456 = vpop.f32.mrf.mxu0
      %v457 = vadd.f32 0.0, %v456
      %v458 = vpop.f32.mrf.mxu0
      %v459 = vadd.f32 0.0, %v458
      %460 = vmatmul.bf16.gmra.mxu0 %v373
      %v461 = vpop.f32.mrf.mxu0
      %v462 = vadd.f32 0.0, %v461
      %v463 = vpop.f32.mrf.mxu0
      %v464 = vadd.f32 0.0, %v463
      %465 = vmatmul.bf16.gmra.mxu0 %v376
      %v466 = vpop.f32.mrf.mxu0
      %v467 = vadd.f32 0.0, %v466
      %v468 = vpop.f32.mrf.mxu0
      %v469 = vadd.f32 0.0, %v468
      %470 = vdwg.mxu0
      %v471 = vld [vmem:[%s2] sm:$0x1]
      %v473 = vperm.slane %v471, 0
      %v475 = vmul.f32 %v392, %v473
      %v476 = vmul.f32 %v394, %v473
      %v477 = vmul.f32 %v397, %v473
      %v478 = vmul.f32 %v399, %v473
      %v479 = vmul.f32 %v402, %v473
      %v480 = vmul.f32 %v404, %v473
      %v481 = vmul.f32 %v407, %v473
      %v482 = vmul.f32 %v409, %v473
      %v483 = vmul.f32 %v412, %v473
      %v484 = vmul.f32 %v414, %v473
      %v485 = vmul.f32 %v417, %v473
      %v486 = vmul.f32 %v419, %v473
      %v487 = vmul.f32 %v422, %v473
      %v488 = vmul.f32 %v424, %v473
      %v489 = vmul.f32 %v427, %v473
      %v490 = vmul.f32 %v429, %v473
      %v491 = vmul.f32 %v432, %v473
      %v492 = vmul.f32 %v434, %v473
      %v493 = vmul.f32 %v437, %v473
      %v494 = vmul.f32 %v439, %v473
      %v495 = vmul.f32 %v442, %v473
      %v496 = vmul.f32 %v444, %v473
      %v497 = vmul.f32 %v447, %v473
      %v498 = vmul.f32 %v449, %v473
      %v499 = vmul.f32 %v452, %v473
      %v500 = vmul.f32 %v454, %v473
      %v501 = vmul.f32 %v457, %v473
      %v502 = vmul.f32 %v459, %v473
      %v503 = vmul.f32 %v462, %v473
      %v504 = vmul.f32 %v464, %v473
      %v505 = vmul.f32 %v467, %v473
      %v506 = vmul.f32 %v469, %v473
      %v507 = vld [vmem:[%s3] sm:$0x1]
      %v509 = vperm.slane %v507, 0
      %v511 = vadd.f32 %v475, %v509
      %v512 = vadd.f32 %v476, %v509
      %v513 = vadd.f32 %v477, %v509
      %v514 = vadd.f32 %v478, %v509
      %v515 = vadd.f32 %v479, %v509
      %v516 = vadd.f32 %v480, %v509
      %v517 = vadd.f32 %v481, %v509
      %v518 = vadd.f32 %v482, %v509
      %v519 = vadd.f32 %v483, %v509
      %v520 = vadd.f32 %v484, %v509
      %v521 = vadd.f32 %v485, %v509
      %v522 = vadd.f32 %v486, %v509
      %v523 = vadd.f32 %v487, %v509
      %v524 = vadd.f32 %v488, %v509
      %v525 = vadd.f32 %v489, %v509
      %v526 = vadd.f32 %v490, %v509
      %v527 = vadd.f32 %v491, %v509
      %v528 = vadd.f32 %v492, %v509
      %v529 = vadd.f32 %v493, %v509
      %v530 = vadd.f32 %v494, %v509
      %v531 = vadd.f32 %v495, %v509
      %v532 = vadd.f32 %v496, %v509
      %v533 = vadd.f32 %v497, %v509
      %v534 = vadd.f32 %v498, %v509
      %v535 = vadd.f32 %v499, %v509
      %v536 = vadd.f32 %v500, %v509
      %v537 = vadd.f32 %v501, %v509
      %v538 = vadd.f32 %v502, %v509
      %v539 = vadd.f32 %v503, %v509
      %v540 = vadd.f32 %v504, %v509
      %v541 = vadd.f32 %v505, %v509
      %v542 = vadd.f32 %v506, %v509
      %v543 = vmax.f32 %v511, 0.0
      %v544 = vmax.f32 %v512, 0.0
      %v545 = vmax.f32 %v513, 0.0
      %v546 = vmax.f32 %v514, 0.0
      %v547 = vmax.f32 %v515, 0.0
      %v548 = vmax.f32 %v516, 0.0
      %v549 = vmax.f32 %v517, 0.0
      %v550 = vmax.f32 %v518, 0.0
      %v551 = vmax.f32 %v519, 0.0
      %v552 = vmax.f32 %v520, 0.0
      %v553 = vmax.f32 %v521, 0.0
      %v554 = vmax.f32 %v522, 0.0
      %v555 = vmax.f32 %v523, 0.0
      %v556 = vmax.f32 %v524, 0.0
      %v557 = vmax.f32 %v525, 0.0
      %v558 = vmax.f32 %v526, 0.0
      %v559 = vmax.f32 %v527, 0.0
      %v560 = vmax.f32 %v528, 0.0
      %v561 = vmax.f32 %v529, 0.0
      %v562 = vmax.f32 %v530, 0.0
      %v563 = vmax.f32 %v531, 0.0
      %v564 = vmax.f32 %v532, 0.0
      %v565 = vmax.f32 %v533, 0.0
      %v566 = vmax.f32 %v534, 0.0
      %v567 = vmax.f32 %v535, 0.0
      %v568 = vmax.f32 %v536, 0.0
      %v569 = vmax.f32 %v537, 0.0
      %v570 = vmax.f32 %v538, 0.0
      %v571 = vmax.f32 %v539, 0.0
      %v572 = vmax.f32 %v540, 0.0
      %v573 = vmax.f32 %v541, 0.0
      %v574 = vmax.f32 %v542, 0.0
      %vm575 = vcmask 31744
      %576 = vst.msk [vmem:[%s199] sm:$0xff] %vm575, %v543
      %577 = vst.msk [vmem:[%s199 + $0x8] sm:$0xff] %vm575, %v544
      %578 = vst.msk [vmem:[%s199 + $0x10] sm:$0xff] %vm575, %v545
      %579 = vst.msk [vmem:[%s199 + $0x18] sm:$0xff] %vm575, %v546
      %580 = vst.msk [vmem:[%s199 + $0x20] sm:$0xff] %vm575, %v547
      %581 = vst.msk [vmem:[%s199 + $0x28] sm:$0xff] %vm575, %v548
      %582 = vst.msk [vmem:[%s199 + $0x30] sm:$0xff] %vm575, %v549
      %583 = vst.msk [vmem:[%s199 + $0x38] sm:$0xff] %vm575, %v550
      %584 = vst.msk [vmem:[%s199 + $0x40] sm:$0xff] %vm575, %v551
      %585 = vst.msk [vmem:[%s199 + $0x48] sm:$0xff] %vm575, %v552
      %586 = vst.msk [vmem:[%s199 + $0x50] sm:$0xff] %vm575, %v553
      %587 = vst.msk [vmem:[%s199 + $0x58] sm:$0xff] %vm575, %v554
      %588 = vst.msk [vmem:[%s199 + $0x60] sm:$0xff] %vm575, %v555
      %589 = vst.msk [vmem:[%s199 + $0x68] sm:$0xff] %vm575, %v556
      %590 = vst.msk [vmem:[%s199 + $0x70] sm:$0xff] %vm575, %v557
      %591 = vst.msk [vmem:[%s199 + $0x78] sm:$0xff] %vm575, %v558
      %592 = vst.msk [vmem:[%s199 + $0x80] sm:$0xff] %vm575, %v559
      %593 = vst.msk [vmem:[%s199 + $0x88] sm:$0xff] %vm575, %v560
      %594 = vst.msk [vmem:[%s199 + $0x90] sm:$0xff] %vm575, %v561
      %595 = vst.msk [vmem:[%s199 + $0x98] sm:$0xff] %vm575, %v562
      %596 = vst.msk [vmem:[%s199 + $0xa0] sm:$0xff] %vm575, %v563
      %597 = vst.msk [vmem:[%s199 + $0xa8] sm:$0xff] %vm575, %v564
      %598 = vst.msk [vmem:[%s199 + $0xb0] sm:$0xff] %vm575, %v565
      %599 = vst.msk [vmem:[%s199 + $0xb8] sm:$0xff] %vm575, %v566
      %600 = vst.msk [vmem:[%s199 + $0xc0] sm:$0xff] %vm575, %v567
      %601 = vst.msk [vmem:[%s199 + $0xc8] sm:$0xff] %vm575, %v568
      %602 = vst.msk [vmem:[%s199 + $0xd0] sm:$0xff] %vm575, %v569
      %603 = vst.msk [vmem:[%s199 + $0xd8] sm:$0xff] %vm575, %v570
      %604 = vst.msk [vmem:[%s199 + $0xe0] sm:$0xff] %vm575, %v571
      %605 = vst.msk [vmem:[%s199 + $0xe8] sm:$0xff] %vm575, %v572
      %606 = vst.msk [vmem:[%s199 + $0xf0] sm:$0xff] %vm575, %v573
      %607 = vst.msk [vmem:[%s199 + $0xf8] sm:$0xff] %vm575, %v574
      %s608 = smul.u32 32, %s15
      %p609 = scmp.lt.s32.totalorder %s608, 63
      %s610 = scalar_select %p609, %s608, 63
      %s611 = smul.addr %s610, 8
      %s612 = scalar_lea.vmem %s4, %s611
      // Predicated region
      $region37: #{us_downsample_block_forward.54} parent=35 // pred_check
        %p613 = pneg %p122
      $region38: #{us_downsample_block_forward.54} parent=35 // pred_check_branch
        %615 = sbr.rel (%p613) target = $region40
      $region39: #{us_downsample_block_forward.54} parent=35 // pred_region
        %s616 = smul.u32 32, %s15
      $region40: #{us_downsample_block_forward.54} parent=35 // pred_fallthru
        _
    $region36: #{us_downsample_block_forward.54} parent=5 // pred_fallthru
      _
    %p617 = scmp.le.s32.totalorder 2, %s10
    // Predicated region
    $region41: #{us_downsample_block_forward.54} parent=5 // pred_check
      %p618 = pneg %p617
    $region42: #{us_downsample_block_forward.54} parent=5 // pred_check_branch
      %620 = sbr.rel (%p618) target = $region44
    $region43: #{us_downsample_block_forward.54} parent=5 // pred_region
      %s621 = ssub.s32 %s10, 2
      // Predicated region
      $region45: #{us_downsample_block_forward.54} parent=43 // pred_check
        %p622 = pneg %p128
      $region46: #{us_downsample_block_forward.54} parent=43 // pred_check_branch
        %624 = sbr.rel (%p622) target = $region48
      $region47: #{us_downsample_block_forward.54} parent=43 // pred_region
        %s625 = smul.u32 32, %s16
        %p626 = scmp.lt.s32.totalorder %s625, 63
        %s627 = scalar_select %p626, %s625, 63
        %s628 = smul.addr %s627, 8
        %s629 = scalar_lea.vmem %s4, %s628
      $region48: #{us_downsample_block_forward.54} parent=43 // pred_fallthru
        _
    $region44: #{us_downsample_block_forward.54} parent=5 // pred_fallthru
      _
  $region6: #{us_downsample_block_forward.54} parent=0 // loop_footer
    %s14 = sadd.s32 1, %s10
  $region7: #{us_downsample_block_forward.54} parent=0 // loop_footer_branch
    %9 = sbr.rel target = $region3
  $region8: #{us_downsample_block_forward.54} parent=0 // loop_exit
    _

// kernel: us_downsample_block_forward.56
$region0: #{us_downsample_block_forward.56}
  #allocation0 [shape = 'u32[]', space=smem, size = 0x4, offset = 0x4, fixed_abs, tag = 'smem constant byte address 0x4 - core index']
  #allocation1 [shape = 'u32[72,128]{1,0:T(1,128)}', space=vmem, size = 0x9000, scoped, tag = 'internal scratch']
  %s0 = inlined_call_operand.vmem [shape: f32[32,64], index: 0, kind: input, shape index: {}]
  %s1 = inlined_call_operand.vmem [shape: f32[32,64], index: 1, kind: input, shape index: {}]
  %s2 = inlined_call_operand.vmem [shape: f32[32,64], index: 2, kind: input, shape index: {}]
  %s3 = inlined_call_operand.vmem [shape: f32[32,64], index: 3, kind: input, shape index: {}]
  %s4 = inlined_call_operand.vmem [shape: f32[32,64], index: 4, kind: input, shape index: {}]
  %s5 = inlined_call_operand.vmem [shape: f32[32,64], index: 5, kind: input, shape index: {}]
  %s6 = inlined_call_operand.vmem [shape: f32[1,64], index: 6, kind: input, shape index: {}]
  %s7 = inlined_call_operand.vmem [shape: f32[1,64], index: 7, kind: input, shape index: {}]
  %s8 = inlined_call_operand.vmem [shape: f32[32,64], index: 8, kind: output, shape index: {}]
  %s9 = sld [smem:[#allocation0]]
  $region42: #{us_downsample_block_forward.56} parent=0
    _
  %s11 = ssub.s32 1, %s9
  %s12 = scalar_select 0, %s11, %s9
  // Predicated region
  $region2: #{us_downsample_block_forward.56} parent=0 // pred_check
    _
  $region3: #{us_downsample_block_forward.56} parent=0 // pred_check_branch
    %14 = sbr.rel (0) target = $region5
  $region4: #{us_downsample_block_forward.56} parent=0 // pred_region
    _
  $region5: #{us_downsample_block_forward.56} parent=0 // pred_fallthru
    _
  // Predicated region
  $region6: #{us_downsample_block_forward.56} parent=0 // pred_check
    _
  $region7: #{us_downsample_block_forward.56} parent=0 // pred_check_branch
    %16 = sbr.rel (0) target = $region9
  $region8: #{us_downsample_block_forward.56} parent=0 // pred_region
    _
  $region9: #{us_downsample_block_forward.56} parent=0 // pred_fallthru
    _
  // Predicated region
  $region10: #{us_downsample_block_forward.56} parent=0 // pred_check
    _
  $region11: #{us_downsample_block_forward.56} parent=0 // pred_check_branch
    %18 = sbr.rel (0) target = $region13
  $region12: #{us_downsample_block_forward.56} parent=0 // pred_region
    _
  $region13: #{us_downsample_block_forward.56} parent=0 // pred_fallthru
    _
  // Predicated region
  $region14: #{us_downsample_block_forward.56} parent=0 // pred_check
    _
  $region15: #{us_downsample_block_forward.56} parent=0 // pred_check_branch
    %20 = sbr.rel (0) target = $region17
  $region16: #{us_downsample_block_forward.56} parent=0 // pred_region
    _
  $region17: #{us_downsample_block_forward.56} parent=0 // pred_fallthru
    _
  // Predicated region
  $region18: #{us_downsample_block_forward.56} parent=0 // pred_check
    _
  $region19: #{us_downsample_block_forward.56} parent=0 // pred_check_branch
    %22 = sbr.rel (0) target = $region21
  $region20: #{us_downsample_block_forward.56} parent=0 // pred_region
    _
  $region21: #{us_downsample_block_forward.56} parent=0 // pred_fallthru
    _
  // Predicated region
  $region22: #{us_downsample_block_forward.56} parent=0 // pred_check
    _
  $region23: #{us_downsample_block_forward.56} parent=0 // pred_check_branch
    %24 = sbr.rel (0) target = $region25
  $region24: #{us_downsample_block_forward.56} parent=0 // pred_region
    _
  $region25: #{us_downsample_block_forward.56} parent=0 // pred_fallthru
    _
  // Predicated region
  $region26: #{us_downsample_block_forward.56} parent=0 // pred_check
    _
  $region27: #{us_downsample_block_forward.56} parent=0 // pred_check_branch
    %26 = sbr.rel (0) target = $region29
  $region28: #{us_downsample_block_forward.56} parent=0 // pred_region
    _
  $region29: #{us_downsample_block_forward.56} parent=0 // pred_fallthru
    _
  // Predicated region
  $region30: #{us_downsample_block_forward.56} parent=0 // pred_check
    _
  $region31: #{us_downsample_block_forward.56} parent=0 // pred_check_branch
    %28 = sbr.rel (0) target = $region33
  $region32: #{us_downsample_block_forward.56} parent=0 // pred_region
    _
  $region33: #{us_downsample_block_forward.56} parent=0 // pred_fallthru
    _
  %v29 = vld [vmem:[%s0] sm:$0xff]
  %v30 = vld [vmem:[%s0 + $0x8] sm:$0xff]
  %v31 = vld [vmem:[%s0 + $0x10] sm:$0xff]
  %v32 = vld [vmem:[%s0 + $0x18] sm:$0xff]
  %v33 = vld [vmem:[%s1] sm:$0xff]
  %v34 = vld [vmem:[%s1 + $0x8] sm:$0xff]
  %v35 = vld [vmem:[%s1 + $0x10] sm:$0xff]
  %v36 = vld [vmem:[%s1 + $0x18] sm:$0xff]
  %v37 = vadd.f32 %v29, %v33
  %v38 = vadd.f32 %v30, %v34
  %v39 = vadd.f32 %v31, %v35
  %v40 = vadd.f32 %v32, %v36
  %v41 = vld [vmem:[%s2] sm:$0xff]
  %v42 = vld [vmem:[%s2 + $0x8] sm:$0xff]
  %v43 = vld [vmem:[%s2 + $0x10] sm:$0xff]
  %v44 = vld [vmem:[%s2 + $0x18] sm:$0xff]
  %v45 = vadd.f32 %v37, %v41
  %v46 = vadd.f32 %v38, %v42
  %v47 = vadd.f32 %v39, %v43
  %v48 = vadd.f32 %v40, %v44
  %v49 = vld [vmem:[%s3] sm:$0xff]
  %v50 = vld [vmem:[%s3 + $0x8] sm:$0xff]
  %v51 = vld [vmem:[%s3 + $0x10] sm:$0xff]
  %v52 = vld [vmem:[%s3 + $0x18] sm:$0xff]
  %v53 = vadd.f32 %v45, %v49
  %v54 = vadd.f32 %v46, %v50
  %v55 = vadd.f32 %v47, %v51
  %v56 = vadd.f32 %v48, %v52
  %v57 = vld [vmem:[%s4] sm:$0xff]
  %v58 = vld [vmem:[%s4 + $0x8] sm:$0xff]
  %v59 = vld [vmem:[%s4 + $0x10] sm:$0xff]
  %v60 = vld [vmem:[%s4 + $0x18] sm:$0xff]
  %v61 = vadd.f32 %v53, %v57
  %v62 = vadd.f32 %v54, %v58
  %v63 = vadd.f32 %v55, %v59
  %v64 = vadd.f32 %v56, %v60
  %v65 = vld [vmem:[%s5] sm:$0xff]
  %v66 = vld [vmem:[%s5 + $0x8] sm:$0xff]
  %v67 = vld [vmem:[%s5 + $0x10] sm:$0xff]
  %v68 = vld [vmem:[%s5 + $0x18] sm:$0xff]
  %v69 = vadd.f32 %v61, %v65
  %v70 = vadd.f32 %v62, %v66
  %v71 = vadd.f32 %v63, %v67
  %v72 = vadd.f32 %v64, %v68
  %v73 = vld [vmem:[%s6] sm:$0x1]
  %v75 = vperm.slane %v73, 0
  %v77 = vmul.f32 %v69, %v75
  %v78 = vmul.f32 %v70, %v75
  %v79 = vmul.f32 %v71, %v75
  %v80 = vmul.f32 %v72, %v75
  %v81 = vld [vmem:[%s7] sm:$0x1]
  %v83 = vperm.slane %v81, 0
  %v85 = vadd.f32 %v77, %v83
  %v86 = vadd.f32 %v78, %v83
  %v87 = vadd.f32 %v79, %v83
  %v88 = vadd.f32 %v80, %v83
  %v89 = vmax.f32 %v85, 0.0
  %v90 = vmax.f32 %v86, 0.0
  %v91 = vmax.f32 %v87, 0.0
  %v92 = vmax.f32 %v88, 0.0
  %vm93 = vcmask 523264
  %94 = vst.msk [vmem:[%s8] sm:$0xff] %vm93, %v89
  %95 = vst.msk [vmem:[%s8 + $0x8] sm:$0xff] %vm93, %v90
  %96 = vst.msk [vmem:[%s8 + $0x10] sm:$0xff] %vm93, %v91
  %97 = vst.msk [vmem:[%s8 + $0x18] sm:$0xff] %vm93, %v92
  // Predicated region
  $region34: #{us_downsample_block_forward.56} parent=0 // pred_check
    _
  $region35: #{us_downsample_block_forward.56} parent=0 // pred_check_branch
    %99 = sbr.rel (0) target = $region37
  $region36: #{us_downsample_block_forward.56} parent=0 // pred_region
    _
  $region37: #{us_downsample_block_forward.56} parent=0 // pred_fallthru
    _
  // Predicated region
  $region38: #{us_downsample_block_forward.56} parent=0 // pred_check
    _
  $region39: #{us_downsample_block_forward.56} parent=0 // pred_check_branch
    %101 = sbr.rel (0) target = $region41
  $region40: #{us_downsample_block_forward.56} parent=0 // pred_region
    _
  $region41: #{us_downsample_block_forward.56} parent=0 // pred_fallthru
    _

// kernel: us_downsample_block_forward.57
$region0: #{us_downsample_block_forward.57}
  #allocation0 [shape = 'u32[]', space=smem, size = 0x4, offset = 0x4, fixed_abs, tag = 'smem constant byte address 0x4 - core index']
  #allocation1 [shape = 'u32[72,128]{1,0:T(1,128)}', space=vmem, size = 0x9000, scoped, tag = 'internal scratch']
  %s0 = inlined_call_operand.vmem [shape: bf16[128,36], index: 0, kind: input, shape index: {}]
  %s1 = inlined_call_operand.vmem [shape: bf16[36,8], index: 1, kind: input, shape index: {}]
  %s2 = inlined_call_operand.vmem [shape: f32[1,8], index: 2, kind: input, shape index: {}]
  %s3 = inlined_call_operand.vmem [shape: f32[1,8], index: 3, kind: input, shape index: {}]
  %s4 = inlined_call_operand.vmem [shape: f32[128,8], index: 4, kind: output, shape index: {}]
  %s5 = sld [smem:[#allocation0]]
  $region26: #{us_downsample_block_forward.57} parent=0
    _
  %s7 = ssub.s32 1, %s5
  %s8 = scalar_select 0, %s7, %s5
  // Predicated region
  $region2: #{us_downsample_block_forward.57} parent=0 // pred_check
    _
  $region3: #{us_downsample_block_forward.57} parent=0 // pred_check_branch
    %10 = sbr.rel (0) target = $region5
  $region4: #{us_downsample_block_forward.57} parent=0 // pred_region
    _
  $region5: #{us_downsample_block_forward.57} parent=0 // pred_fallthru
    _
  // Predicated region
  $region6: #{us_downsample_block_forward.57} parent=0 // pred_check
    _
  $region7: #{us_downsample_block_forward.57} parent=0 // pred_check_branch
    %12 = sbr.rel (0) target = $region9
  $region8: #{us_downsample_block_forward.57} parent=0 // pred_region
    _
  $region9: #{us_downsample_block_forward.57} parent=0 // pred_fallthru
    _
  // Predicated region
  $region10: #{us_downsample_block_forward.57} parent=0 // pred_check
    _
  $region11: #{us_downsample_block_forward.57} parent=0 // pred_check_branch
    %14 = sbr.rel (0) target = $region13
  $region12: #{us_downsample_block_forward.57} parent=0 // pred_region
    _
  $region13: #{us_downsample_block_forward.57} parent=0 // pred_fallthru
    _
  // Predicated region
  $region14: #{us_downsample_block_forward.57} parent=0 // pred_check
    _
  $region15: #{us_downsample_block_forward.57} parent=0 // pred_check_branch
    %16 = sbr.rel (0) target = $region17
  $region16: #{us_downsample_block_forward.57} parent=0 // pred_region
    _
  $region17: #{us_downsample_block_forward.57} parent=0 // pred_fallthru
    _
  %v18 = vld [vmem:[%s0] sm:$0xf]
  %v19 = vld [vmem:[%s0 + $0x4] sm:$0xf]
  %v20 = vld [vmem:[%s0 + $0x8] sm:$0xf]
  %v21 = vld [vmem:[%s0 + $0xc] sm:$0xf]
  %v22 = vld [vmem:[%s0 + $0x10] sm:$0xf]
  %v23 = vld [vmem:[%s0 + $0x14] sm:$0xf]
  %v24 = vld [vmem:[%s0 + $0x18] sm:$0xf]
  %v25 = vld [vmem:[%s0 + $0x1c] sm:$0xf]
  %v26 = vld [vmem:[%s0 + $0x20] sm:$0xf]
  %v27 = vld [vmem:[%s0 + $0x24] sm:$0xf]
  %v28 = vld [vmem:[%s0 + $0x28] sm:$0xf]
  %v29 = vld [vmem:[%s0 + $0x2c] sm:$0xf]
  %v30 = vld [vmem:[%s0 + $0x30] sm:$0xf]
  %v31 = vld [vmem:[%s0 + $0x34] sm:$0xf]
  %v32 = vld [vmem:[%s0 + $0x38] sm:$0xf]
  %v33 = vld [vmem:[%s0 + $0x3c] sm:$0xf]
  %v34 = vld [vmem:[%s1] sm:$0xf]
  %v35 = vld [vmem:[%s1 + $0x4] sm:$0xf]
  %v36 = vld [vmem:[%s1 + $0x8] sm:$0xf]
  %v37 = vld [vmem:[%s1 + $0xc] sm:$0xf]
  %v38 = vld [vmem:[%s1 + $0x10] sm:$0x3]
  %v55 = vunpack.c.l.b16 %v18
  %v56 = vunpack.c.l.b16 %v19
  %v57 = vunpack.c.l.b16 %v20
  %v58 = vunpack.c.l.b16 %v21
  %v59 = vunpack.c.l.b16 %v22
  %v60 = vunpack.c.l.b16 %v23
  %v61 = vunpack.c.l.b16 %v24
  %v62 = vunpack.c.l.b16 %v25
  %v63 = vunpack.c.l.b16 %v26
  %v64 = vunpack.c.l.b16 %v27
  %v65 = vunpack.c.l.b16 %v28
  %v66 = vunpack.c.l.b16 %v29
  %v67 = vunpack.c.l.b16 %v30
  %v68 = vunpack.c.l.b16 %v31
  %v69 = vunpack.c.l.b16 %v32
  %v70 = vunpack.c.l.b16 %v33
  %v71 = vpack.c.b16 %v56, %v55
  %v72 = vpack.c.b16 %v58, %v57
  %v73 = vpack.c.b16 %v60, %v59
  %v74 = vpack.c.b16 %v62, %v61
  %v75 = vpack.c.b16 %v64, %v63
  %v76 = vpack.c.b16 %v66, %v65
  %v77 = vpack.c.b16 %v68, %v67
  %v78 = vpack.c.b16 %v70, %v69
  %v84 = vunpack.c.l.b16 %v34
  %v85 = vunpack.c.l.b16 %v35
  %v86 = vunpack.c.l.b16 %v36
  %v87 = vunpack.c.l.b16 %v37
  %v88 = vunpack.c.l.b16 %v38
  %v89 = vpack.c.b16 %v85, %v84
  %v90 = vpack.c.b16 %v87, %v86
  %v91 = vpack.c.b16 %v88, %v88
  %vm94 = vcmask 293888
  %v96 = vsel %vm94, %v71, 0
  %v99 = vsel %vm94, %v72, 0
  %v102 = vsel %vm94, %v73, 0
  %v105 = vsel %vm94, %v74, 0
  %v108 = vsel %vm94, %v75, 0
  %v111 = vsel %vm94, %v76, 0
  %v114 = vsel %vm94, %v77, 0
  %v117 = vsel %vm94, %v78, 0
  %vm119 = vcmask 1041408
  %v121 = vsel %vm119, %v91, 0
  %123 = vmatpush.bf16.msra.mxu0 0
  %124 = vmatpush.bf16.msra.mxu0 0
  %125 = vmatpush.bf16.msra.mxu0 0
  %126 = vmatpush.bf16.msra.mxu0 0
  %127 = vmatpush.bf16.msra.mxu0 0
  %128 = vmatpush.bf16.msra.mxu0 %v121
  %129 = vmatpush.bf16.msra.mxu0 %v90
  %130 = vmatpush.bf16.msra.mxu0 %v89
  %131 = vmatmul.bf16.gmra.mxu0 %v96
  %v132 = vpop.f32.mrf.mxu0
  %v133 = vadd.f32 0.0, %v132
  %v134 = vpop.f32.mrf.mxu0
  %v135 = vadd.f32 0.0, %v134
  %136 = vmatmul.bf16.gmra.mxu0 %v99
  %v137 = vpop.f32.mrf.mxu0
  %v138 = vadd.f32 0.0, %v137
  %v139 = vpop.f32.mrf.mxu0
  %v140 = vadd.f32 0.0, %v139
  %141 = vmatmul.bf16.gmra.mxu0 %v102
  %v142 = vpop.f32.mrf.mxu0
  %v143 = vadd.f32 0.0, %v142
  %v144 = vpop.f32.mrf.mxu0
  %v145 = vadd.f32 0.0, %v144
  %146 = vmatmul.bf16.gmra.mxu0 %v105
  %v147 = vpop.f32.mrf.mxu0
  %v148 = vadd.f32 0.0, %v147
  %v149 = vpop.f32.mrf.mxu0
  %v150 = vadd.f32 0.0, %v149
  %151 = vmatmul.bf16.gmra.mxu0 %v108
  %v152 = vpop.f32.mrf.mxu0
  %v153 = vadd.f32 0.0, %v152
  %v154 = vpop.f32.mrf.mxu0
  %v155 = vadd.f32 0.0, %v154
  %156 = vmatmul.bf16.gmra.mxu0 %v111
  %v157 = vpop.f32.mrf.mxu0
  %v158 = vadd.f32 0.0, %v157
  %v159 = vpop.f32.mrf.mxu0
  %v160 = vadd.f32 0.0, %v159
  %161 = vmatmul.bf16.gmra.mxu0 %v114
  %v162 = vpop.f32.mrf.mxu0
  %v163 = vadd.f32 0.0, %v162
  %v164 = vpop.f32.mrf.mxu0
  %v165 = vadd.f32 0.0, %v164
  %166 = vmatmul.bf16.gmra.mxu0 %v117
  %v167 = vpop.f32.mrf.mxu0
  %v168 = vadd.f32 0.0, %v167
  %v169 = vpop.f32.mrf.mxu0
  %v170 = vadd.f32 0.0, %v169
  %171 = vdwg.mxu0
  %v172 = vld [vmem:[%s2] sm:$0x1]
  %v174 = vperm.slane %v172, 0
  %v176 = vmul.f32 %v133, %v174
  %v177 = vmul.f32 %v135, %v174
  %v178 = vmul.f32 %v138, %v174
  %v179 = vmul.f32 %v140, %v174
  %v180 = vmul.f32 %v143, %v174
  %v181 = vmul.f32 %v145, %v174
  %v182 = vmul.f32 %v148, %v174
  %v183 = vmul.f32 %v150, %v174
  %v184 = vmul.f32 %v153, %v174
  %v185 = vmul.f32 %v155, %v174
  %v186 = vmul.f32 %v158, %v174
  %v187 = vmul.f32 %v160, %v174
  %v188 = vmul.f32 %v163, %v174
  %v189 = vmul.f32 %v165, %v174
  %v190 = vmul.f32 %v168, %v174
  %v191 = vmul.f32 %v170, %v174
  %v192 = vld [vmem:[%s3] sm:$0x1]
  %v194 = vperm.slane %v192, 0
  %v196 = vadd.f32 %v176, %v194
  %v197 = vadd.f32 %v177, %v194
  %v198 = vadd.f32 %v178, %v194
  %v199 = vadd.f32 %v179, %v194
  %v200 = vadd.f32 %v180, %v194
  %v201 = vadd.f32 %v181, %v194
  %v202 = vadd.f32 %v182, %v194
  %v203 = vadd.f32 %v183, %v194
  %v204 = vadd.f32 %v184, %v194
  %v205 = vadd.f32 %v185, %v194
  %v206 = vadd.f32 %v186, %v194
  %v207 = vadd.f32 %v187, %v194
  %v208 = vadd.f32 %v188, %v194
  %v209 = vadd.f32 %v189, %v194
  %v210 = vadd.f32 %v190, %v194
  %v211 = vadd.f32 %v191, %v194
  %v212 = vmax.f32 %v196, 0.0
  %v213 = vmax.f32 %v197, 0.0
  %v214 = vmax.f32 %v198, 0.0
  %v215 = vmax.f32 %v199, 0.0
  %v216 = vmax.f32 %v200, 0.0
  %v217 = vmax.f32 %v201, 0.0
  %v218 = vmax.f32 %v202, 0.0
  %v219 = vmax.f32 %v203, 0.0
  %v220 = vmax.f32 %v204, 0.0
  %v221 = vmax.f32 %v205, 0.0
  %v222 = vmax.f32 %v206, 0.0
  %v223 = vmax.f32 %v207, 0.0
  %v224 = vmax.f32 %v208, 0.0
  %v225 = vmax.f32 %v209, 0.0
  %v226 = vmax.f32 %v210, 0.0
  %v227 = vmax.f32 %v211, 0.0
  %vm228 = vcmask 64512
  %229 = vst.msk [vmem:[%s4] sm:$0xff] %vm228, %v212
  %230 = vst.msk [vmem:[%s4 + $0x8] sm:$0xff] %vm228, %v213
  %231 = vst.msk [vmem:[%s4 + $0x10] sm:$0xff] %vm228, %v214
  %232 = vst.msk [vmem:[%s4 + $0x18] sm:$0xff] %vm228, %v215
  %233 = vst.msk [vmem:[%s4 + $0x20] sm:$0xff] %vm228, %v216
  %234 = vst.msk [vmem:[%s4 + $0x28] sm:$0xff] %vm228, %v217
  %235 = vst.msk [vmem:[%s4 + $0x30] sm:$0xff] %vm228, %v218
  %236 = vst.msk [vmem:[%s4 + $0x38] sm:$0xff] %vm228, %v219
  %237 = vst.msk [vmem:[%s4 + $0x40] sm:$0xff] %vm228, %v220
  %238 = vst.msk [vmem:[%s4 + $0x48] sm:$0xff] %vm228, %v221
  %239 = vst.msk [vmem:[%s4 + $0x50] sm:$0xff] %vm228, %v222
  %240 = vst.msk [vmem:[%s4 + $0x58] sm:$0xff] %vm228, %v223
  %241 = vst.msk [vmem:[%s4 + $0x60] sm:$0xff] %vm228, %v224
  %242 = vst.msk [vmem:[%s4 + $0x68] sm:$0xff] %vm228, %v225
  %243 = vst.msk [vmem:[%s4 + $0x70] sm:$0xff] %vm228, %v226
  %244 = vst.msk [vmem:[%s4 + $0x78] sm:$0xff] %vm228, %v227
  // Predicated region
  $region18: #{us_downsample_block_forward.57} parent=0 // pred_check
    _
  $region19: #{us_downsample_block_forward.57} parent=0 // pred_check_branch
    %246 = sbr.rel (0) target = $region21
  $region20: #{us_downsample_block_forward.57} parent=0 // pred_region
    _
  $region21: #{us_downsample_block_forward.57} parent=0 // pred_fallthru
    _
  // Predicated region
  $region22: #{us_downsample_block_forward.57} parent=0 // pred_check
    _
  $region23: #{us_downsample_block_forward.57} parent=0 // pred_check_branch
    %248 = sbr.rel (0) target = $region25
  $region24: #{us_downsample_block_forward.57} parent=0 // pred_region
    _
  $region25: #{us_downsample_block_forward.57} parent=0 // pred_fallthru
    _

// kernel: us_downsample_block_forward.29
$region0: #{us_downsample_block_forward.29}
  #allocation0 [shape = 'u32[]', space=smem, size = 0x4, offset = 0x4, fixed_abs, tag = 'smem constant byte address 0x4 - core index']
  #allocation1 [shape = 'u32[72,128]{1,0:T(1,128)}', space=vmem, size = 0x9000, scoped, tag = 'internal scratch']
  %s0 = inlined_call_operand.vmem [shape: bf16[128,16], index: 0, kind: input, shape index: {}]
  %s1 = inlined_call_operand.vmem [shape: bf16[16,8], index: 1, kind: input, shape index: {}]
  %s2 = inlined_call_operand.vmem [shape: f32[1,8], index: 2, kind: input, shape index: {}]
  %s3 = inlined_call_operand.vmem [shape: f32[1,8], index: 3, kind: input, shape index: {}]
  %s4 = inlined_call_operand.vmem [shape: f32[128,8], index: 4, kind: output, shape index: {}]
  %s5 = sld [smem:[#allocation0]]
  $region26: #{us_downsample_block_forward.29} parent=0
    _
  %s7 = ssub.s32 1, %s5
  %s8 = scalar_select 0, %s7, %s5
  // Predicated region
  $region2: #{us_downsample_block_forward.29} parent=0 // pred_check
    _
  $region3: #{us_downsample_block_forward.29} parent=0 // pred_check_branch
    %10 = sbr.rel (0) target = $region5
  $region4: #{us_downsample_block_forward.29} parent=0 // pred_region
    _
  $region5: #{us_downsample_block_forward.29} parent=0 // pred_fallthru
    _
  // Predicated region
  $region6: #{us_downsample_block_forward.29} parent=0 // pred_check
    _
  $region7: #{us_downsample_block_forward.29} parent=0 // pred_check_branch
    %12 = sbr.rel (0) target = $region9
  $region8: #{us_downsample_block_forward.29} parent=0 // pred_region
    _
  $region9: #{us_downsample_block_forward.29} parent=0 // pred_fallthru
    _
  // Predicated region
  $region10: #{us_downsample_block_forward.29} parent=0 // pred_check
    _
  $region11: #{us_downsample_block_forward.29} parent=0 // pred_check_branch
    %14 = sbr.rel (0) target = $region13
  $region12: #{us_downsample_block_forward.29} parent=0 // pred_region
    _
  $region13: #{us_downsample_block_forward.29} parent=0 // pred_fallthru
    _
  // Predicated region
  $region14: #{us_downsample_block_forward.29} parent=0 // pred_check
    _
  $region15: #{us_downsample_block_forward.29} parent=0 // pred_check_branch
    %16 = sbr.rel (0) target = $region17
  $region16: #{us_downsample_block_forward.29} parent=0 // pred_region
    _
  $region17: #{us_downsample_block_forward.29} parent=0 // pred_fallthru
    _
  %v18 = vld [vmem:[%s0] sm:$0xf]
  %v19 = vld [vmem:[%s0 + $0x4] sm:$0xf]
  %v20 = vld [vmem:[%s0 + $0x8] sm:$0xf]
  %v21 = vld [vmem:[%s0 + $0xc] sm:$0xf]
  %v22 = vld [vmem:[%s0 + $0x10] sm:$0xf]
  %v23 = vld [vmem:[%s0 + $0x14] sm:$0xf]
  %v24 = vld [vmem:[%s0 + $0x18] sm:$0xf]
  %v25 = vld [vmem:[%s0 + $0x1c] sm:$0xf]
  %v26 = vld [vmem:[%s0 + $0x20] sm:$0xf]
  %v27 = vld [vmem:[%s0 + $0x24] sm:$0xf]
  %v28 = vld [vmem:[%s0 + $0x28] sm:$0xf]
  %v29 = vld [vmem:[%s0 + $0x2c] sm:$0xf]
  %v30 = vld [vmem:[%s0 + $0x30] sm:$0xf]
  %v31 = vld [vmem:[%s0 + $0x34] sm:$0xf]
  %v32 = vld [vmem:[%s0 + $0x38] sm:$0xf]
  %v33 = vld [vmem:[%s0 + $0x3c] sm:$0xf]
  %v34 = vld [vmem:[%s1] sm:$0xf]
  %v35 = vld [vmem:[%s1 + $0x4] sm:$0xf]
  %v52 = vunpack.c.l.b16 %v18
  %v53 = vunpack.c.l.b16 %v19
  %v54 = vunpack.c.l.b16 %v20
  %v55 = vunpack.c.l.b16 %v21
  %v56 = vunpack.c.l.b16 %v22
  %v57 = vunpack.c.l.b16 %v23
  %v58 = vunpack.c.l.b16 %v24
  %v59 = vunpack.c.l.b16 %v25
  %v60 = vunpack.c.l.b16 %v26
  %v61 = vunpack.c.l.b16 %v27
  %v62 = vunpack.c.l.b16 %v28
  %v63 = vunpack.c.l.b16 %v29
  %v64 = vunpack.c.l.b16 %v30
  %v65 = vunpack.c.l.b16 %v31
  %v66 = vunpack.c.l.b16 %v32
  %v67 = vunpack.c.l.b16 %v33
  %v68 = vpack.c.b16 %v53, %v52
  %v69 = vpack.c.b16 %v55, %v54
  %v70 = vpack.c.b16 %v57, %v56
  %v71 = vpack.c.b16 %v59, %v58
  %v72 = vpack.c.b16 %v61, %v60
  %v73 = vpack.c.b16 %v63, %v62
  %v74 = vpack.c.b16 %v65, %v64
  %v75 = vpack.c.b16 %v67, %v66
  %v78 = vunpack.c.l.b16 %v34
  %v79 = vunpack.c.l.b16 %v35
  %v80 = vpack.c.b16 %v79, %v78
  %vm82 = vcmask 130048
  %v84 = vsel %vm82, %v68, 0
  %v87 = vsel %vm82, %v69, 0
  %v90 = vsel %vm82, %v70, 0
  %v93 = vsel %vm82, %v71, 0
  %v96 = vsel %vm82, %v72, 0
  %v99 = vsel %vm82, %v73, 0
  %v102 = vsel %vm82, %v74, 0
  %v105 = vsel %vm82, %v75, 0
  %107 = vmatpush.bf16.msra.mxu0 0
  %108 = vmatpush.bf16.msra.mxu0 0
  %109 = vmatpush.bf16.msra.mxu0 0
  %110 = vmatpush.bf16.msra.mxu0 0
  %111 = vmatpush.bf16.msra.mxu0 0
  %112 = vmatpush.bf16.msra.mxu0 0
  %113 = vmatpush.bf16.msra.mxu0 0
  %114 = vmatpush.bf16.msra.mxu0 %v80
  %115 = vmatmul.bf16.gmra.mxu0 %v84
  %v116 = vpop.f32.mrf.mxu0
  %v117 = vadd.f32 0.0, %v116
  %v118 = vpop.f32.mrf.mxu0
  %v119 = vadd.f32 0.0, %v118
  %120 = vmatmul.bf16.gmra.mxu0 %v87
  %v121 = vpop.f32.mrf.mxu0
  %v122 = vadd.f32 0.0, %v121
  %v123 = vpop.f32.mrf.mxu0
  %v124 = vadd.f32 0.0, %v123
  %125 = vmatmul.bf16.gmra.mxu0 %v90
  %v126 = vpop.f32.mrf.mxu0
  %v127 = vadd.f32 0.0, %v126
  %v128 = vpop.f32.mrf.mxu0
  %v129 = vadd.f32 0.0, %v128
  %130 = vmatmul.bf16.gmra.mxu0 %v93
  %v131 = vpop.f32.mrf.mxu0
  %v132 = vadd.f32 0.0, %v131
  %v133 = vpop.f32.mrf.mxu0
  %v134 = vadd.f32 0.0, %v133
  %135 = vmatmul.bf16.gmra.mxu0 %v96
  %v136 = vpop.f32.mrf.mxu0
  %v137 = vadd.f32 0.0, %v136
  %v138 = vpop.f32.mrf.mxu0
  %v139 = vadd.f32 0.0, %v138
  %140 = vmatmul.bf16.gmra.mxu0 %v99
  %v141 = vpop.f32.mrf.mxu0
  %v142 = vadd.f32 0.0, %v141
  %v143 = vpop.f32.mrf.mxu0
  %v144 = vadd.f32 0.0, %v143
  %145 = vmatmul.bf16.gmra.mxu0 %v102
  %v146 = vpop.f32.mrf.mxu0
  %v147 = vadd.f32 0.0, %v146
  %v148 = vpop.f32.mrf.mxu0
  %v149 = vadd.f32 0.0, %v148
  %150 = vmatmul.bf16.gmra.mxu0 %v105
  %v151 = vpop.f32.mrf.mxu0
  %v152 = vadd.f32 0.0, %v151
  %v153 = vpop.f32.mrf.mxu0
  %v154 = vadd.f32 0.0, %v153
  %155 = vdwg.mxu0
  %v156 = vld [vmem:[%s2] sm:$0x1]
  %v158 = vperm.slane %v156, 0
  %v160 = vmul.f32 %v117, %v158
  %v161 = vmul.f32 %v119, %v158
  %v162 = vmul.f32 %v122, %v158
  %v163 = vmul.f32 %v124, %v158
  %v164 = vmul.f32 %v127, %v158
  %v165 = vmul.f32 %v129, %v158
  %v166 = vmul.f32 %v132, %v158
  %v167 = vmul.f32 %v134, %v158
  %v168 = vmul.f32 %v137, %v158
  %v169 = vmul.f32 %v139, %v158
  %v170 = vmul.f32 %v142, %v158
  %v171 = vmul.f32 %v144, %v158
  %v172 = vmul.f32 %v147, %v158
  %v173 = vmul.f32 %v149, %v158
  %v174 = vmul.f32 %v152, %v158
  %v175 = vmul.f32 %v154, %v158
  %v176 = vld [vmem:[%s3] sm:$0x1]
  %v178 = vperm.slane %v176, 0
  %v180 = vadd.f32 %v160, %v178
  %v181 = vadd.f32 %v161, %v178
  %v182 = vadd.f32 %v162, %v178
  %v183 = vadd.f32 %v163, %v178
  %v184 = vadd.f32 %v164, %v178
  %v185 = vadd.f32 %v165, %v178
  %v186 = vadd.f32 %v166, %v178
  %v187 = vadd.f32 %v167, %v178
  %v188 = vadd.f32 %v168, %v178
  %v189 = vadd.f32 %v169, %v178
  %v190 = vadd.f32 %v170, %v178
  %v191 = vadd.f32 %v171, %v178
  %v192 = vadd.f32 %v172, %v178
  %v193 = vadd.f32 %v173, %v178
  %v194 = vadd.f32 %v174, %v178
  %v195 = vadd.f32 %v175, %v178
  %v196 = vmax.f32 %v180, 0.0
  %v197 = vmax.f32 %v181, 0.0
  %v198 = vmax.f32 %v182, 0.0
  %v199 = vmax.f32 %v183, 0.0
  %v200 = vmax.f32 %v184, 0.0
  %v201 = vmax.f32 %v185, 0.0
  %v202 = vmax.f32 %v186, 0.0
  %v203 = vmax.f32 %v187, 0.0
  %v204 = vmax.f32 %v188, 0.0
  %v205 = vmax.f32 %v189, 0.0
  %v206 = vmax.f32 %v190, 0.0
  %v207 = vmax.f32 %v191, 0.0
  %v208 = vmax.f32 %v192, 0.0
  %v209 = vmax.f32 %v193, 0.0
  %v210 = vmax.f32 %v194, 0.0
  %v211 = vmax.f32 %v195, 0.0
  %vm212 = vcmask 64512
  %213 = vst.msk [vmem:[%s4] sm:$0xff] %vm212, %v196
  %214 = vst.msk [vmem:[%s4 + $0x8] sm:$0xff] %vm212, %v197
  %215 = vst.msk [vmem:[%s4 + $0x10] sm:$0xff] %vm212, %v198
  %216 = vst.msk [vmem:[%s4 + $0x18] sm:$0xff] %vm212, %v199
  %217 = vst.msk [vmem:[%s4 + $0x20] sm:$0xff] %vm212, %v200
  %218 = vst.msk [vmem:[%s4 + $0x28] sm:$0xff] %vm212, %v201
  %219 = vst.msk [vmem:[%s4 + $0x30] sm:$0xff] %vm212, %v202
  %220 = vst.msk [vmem:[%s4 + $0x38] sm:$0xff] %vm212, %v203
  %221 = vst.msk [vmem:[%s4 + $0x40] sm:$0xff] %vm212, %v204
  %222 = vst.msk [vmem:[%s4 + $0x48] sm:$0xff] %vm212, %v205
  %223 = vst.msk [vmem:[%s4 + $0x50] sm:$0xff] %vm212, %v206
  %224 = vst.msk [vmem:[%s4 + $0x58] sm:$0xff] %vm212, %v207
  %225 = vst.msk [vmem:[%s4 + $0x60] sm:$0xff] %vm212, %v208
  %226 = vst.msk [vmem:[%s4 + $0x68] sm:$0xff] %vm212, %v209
  %227 = vst.msk [vmem:[%s4 + $0x70] sm:$0xff] %vm212, %v210
  %228 = vst.msk [vmem:[%s4 + $0x78] sm:$0xff] %vm212, %v211
  // Predicated region
  $region18: #{us_downsample_block_forward.29} parent=0 // pred_check
    _
  $region19: #{us_downsample_block_forward.29} parent=0 // pred_check_branch
    %230 = sbr.rel (0) target = $region21
  $region20: #{us_downsample_block_forward.29} parent=0 // pred_region
    _
  $region21: #{us_downsample_block_forward.29} parent=0 // pred_fallthru
    _
  // Predicated region
  $region22: #{us_downsample_block_forward.29} parent=0 // pred_check
    _
  $region23: #{us_downsample_block_forward.29} parent=0 // pred_check_branch
    %232 = sbr.rel (0) target = $region25
  $region24: #{us_downsample_block_forward.29} parent=0 // pred_region
    _
  $region25: #{us_downsample_block_forward.29} parent=0 // pred_fallthru
    _

</llo_original>
